<compile_context>
chip_gen: v6e
topology: v6e:2x2x1
jax: 0.10.0
libtpu: 0.0.40
codegen_flags: <defaults>
</compile_context>

<pallas_src>
import math

import jax
import jax.numpy as jnp
from jax import lax
from jax.experimental import pallas as pl
from jax.experimental.pallas import tpu as pltpu

# ------------------------------------------------------------------ config ---
EMBED_DIM = 64

# vision (ViT branch: vision_layers is an int; forward hard-codes resblocks[:11]/[11])
VISION_WIDTH = 64
VISION_LAYERS = 12
VISION_HEADS = max(VISION_WIDTH // 64, 1)   # 1
PATCH = 8
STRIDE = 8                                   # TODO(synk): stride_size assumed == patch_size (pure patchify)
H_RES = 4
W_RES = 4
IMG_H = H_RES * PATCH
IMG_W = W_RES * PATCH
VISION_SEQ = H_RES * W_RES + 1

# text transformer
CONTEXT_LENGTH = 8
VOCAB_SIZE = 64
TEXT_WIDTH = 32
TEXT_HEADS = 2
TEXT_LAYERS = 2

MATMUL_DTYPE = jnp.bfloat16   # MXU operand dtype; accumulation stays f32
LN_EPS = 1e-5

VMEM = pl.BlockSpec(memory_space=pltpu.MemorySpace.VMEM)


# ------------------------------------------------------------- kernel utils --
def _mdot(a, w):
    """Matmul with bf16 MXU operands, f32 accumulation."""
    return jnp.dot(a.astype(w.dtype), w, preferred_element_type=jnp.float32)


def _ln(x, g, b, eps=LN_EPS):
    """Row-wise layernorm in f32 (matches torch LayerNorm eps=1e-5)."""
    mu = jnp.mean(x, axis=-1, keepdims=True)
    xc = x - mu
    var = jnp.mean(xc * xc, axis=-1, keepdims=True)
    return xc * lax.rsqrt(var + eps) * g + b


# ----------------------------------------------- fused transformer (grid=L) --
def _make_transformer_kernel(*, n_head, seq, width, causal, capture_layer):
    dh = width // n_head
    scale = dh ** -0.5

    def kernel(x_ref, ln1g_ref, ln1b_ref, qkvw_ref, qkvb_ref, ow_ref, ob_ref,
               ln2g_ref, ln2b_ref, fcw_ref, fcb_ref, pw_ref, pb_ref, *out_refs):
        o_ref = out_refs[0]
        l = pl.program_id(1)

        # activation slab stays resident in the output VMEM block across layers
        @pl.when(l == 0)
        def _():
            o_ref[...] = x_ref[...]

        x = o_ref[...].astype(jnp.float32)                     # (seq, width)

        # ---------------- attention branch ----------------
        h = _ln(x, ln1g_ref[...], ln1b_ref[...])
        acc = None
        for hh in range(n_head):
            qh = _mdot(h, qkvw_ref[0, hh]) + qkvb_ref[0, hh]   # (seq, dh)
            kh = _mdot(h, qkvw_ref[1, hh]) + qkvb_ref[1, hh]
            vh = _mdot(h, qkvw_ref[2, hh]) + qkvb_ref[2, hh]
            s = lax.dot_general(qh, kh, (((1,), (1,)), ((), ())),
                                preferred_element_type=jnp.float32) * scale
            if causal:                                         # static specialization
                row = lax.broadcasted_iota(jnp.int32, (seq, seq), 0)
                col = lax.broadcasted_iota(jnp.int32, (seq, seq), 1)
                s = jnp.where(col > row, -1e30, s)
            s = s - jnp.max(s, axis=-1, keepdims=True)
            p = jnp.exp(s)
            p = p * pl.reciprocal(jnp.sum(p, axis=-1, keepdims=True), approx=True)
            oh = jnp.dot(p, vh, preferred_element_type=jnp.float32)   # (seq, dh)
            contrib = _mdot(oh, ow_ref[hh])                           # (seq, width)
            acc = contrib if acc is None else acc + contrib
        x = x + acc + ob_ref[...]

        # ---------------- MLP branch (c_fc -> QuickGELU -> c_proj) -------------
        h2 = _ln(x, ln2g_ref[...], ln2b_ref[...])
        hf = _mdot(h2, fcw_ref[...]) + fcb_ref[...]
        hf = hf * jax.nn.sigmoid(1.702 * hf)                   # QuickGELU (f32 VPU/EUP)
        x = x + _mdot(hf, pw_ref[...]) + pb_ref[...]

        o_ref[...] = x.astype(o_ref.dtype)

        if capture_layer is not None:                          # x11 capture (vision)
            cap_ref = out_refs[1]

            @pl.when(l == capture_layer)
            def _():
                cap_ref[...] = x.astype(cap_ref.dtype)

    return kernel


def run_transformer(x, p, *, n_head, causal, capture_layer=None):
    """x: (N, S, D) batch-major activations. Stacked per-layer params in p."""
    n, seq, width = x.shape
    nl = p["qkv_w"].shape[0]
    dh = width // n_head
    kernel = _make_transformer_kernel(n_head=n_head, seq=seq, width=width,
                                      causal=causal, capture_layer=capture_layer)

    def wmap(rank):
        zeros = (0,) * (rank - 1)
        return lambda b, l: (l,) + zeros

    act_spec = pl.BlockSpec((None, seq, width), lambda b, l: (b, 0, 0))
    in_specs = [
        act_spec,                                                     # x (read @ l==0)
        pl.BlockSpec((None, 1, width), wmap(3)),                      # ln1_g
        pl.BlockSpec((None, 1, width), wmap(3)),                      # ln1_b
        pl.BlockSpec((None, 3, n_head, width, dh), wmap(5)),          # qkv_w
        pl.BlockSpec((None, 3, n_head, 1, dh), wmap(5)),              # qkv_b
        pl.BlockSpec((None, n_head, dh, width), wmap(4)),             # out_w
        pl.BlockSpec((None, 1, width), wmap(3)),                      # out_b
        pl.BlockSpec((None, 1, width), wmap(3)),                      # ln2_g
        pl.BlockSpec((None, 1, width), wmap(3)),                      # ln2_b
        pl.BlockSpec((None, width, 4 * width), wmap(3)),              # fc_w
        pl.BlockSpec((None, 1, 4 * width), wmap(3)),                  # fc_b
        pl.BlockSpec((None, 4 * width, width), wmap(3)),              # proj_w
        pl.BlockSpec((None, 1, width), wmap(3)),                      # proj_b
    ]
    if capture_layer is not None:
        out_shape = (jax.ShapeDtypeStruct((n, seq, width), jnp.float32),
                     jax.ShapeDtypeStruct((n, seq, width), jnp.float32))
        out_specs = (act_spec,
                     pl.BlockSpec((None, seq, width), lambda b, l: (b, 0, 0)))
    else:
        out_shape = jax.ShapeDtypeStruct((n, seq, width), jnp.float32)
        out_specs = act_spec

    return pl.pallas_call(
        kernel,
        out_shape=out_shape,
        grid=(n, nl),
        in_specs=in_specs,
        out_specs=out_specs,
        compiler_params=pltpu.CompilerParams(
            dimension_semantics=("parallel", "arbitrary")),
    )(x, p["ln1_g"], p["ln1_b"], p["qkv_w"], p["qkv_b"], p["out_w"], p["out_b"],
      p["ln2_g"], p["ln2_b"], p["fc_w"], p["fc_b"], p["proj_w"], p["proj_b"])


# ------------------------------------------- vision pre / post, CLIP head ----
def _vision_pre_kernel(patch_ref, convw_ref, add_ref, g_ref, b_ref, o_ref):
    # patch-embed conv (as matmul) + cls/pos add + ln_pre, fused
    x = _mdot(patch_ref[...], convw_ref[...]) + add_ref[...]
    o_ref[...] = _ln(x, g_ref[...], b_ref[...]).astype(o_ref.dtype)


def vision_pre(patches, conv_w, add, g, b):
    B, S, CPP = patches.shape
    D = conv_w.shape[1]
    return pl.pallas_call(
        _vision_pre_kernel,
        out_shape=jax.ShapeDtypeStruct((B, S, D), jnp.float32),
        grid=(B,),
        in_specs=[
            pl.BlockSpec((None, S, CPP), lambda b: (b, 0, 0)),
            pl.BlockSpec((CPP, D), lambda b: (0, 0)),
            pl.BlockSpec((S, D), lambda b: (0, 0)),
            pl.BlockSpec((1, D), lambda b: (0, 0)),
            pl.BlockSpec((1, D), lambda b: (0, 0)),
        ],
        out_specs=pl.BlockSpec((None, S, D), lambda b: (b, 0, 0)),
        compiler_params=pltpu.CompilerParams(dimension_semantics=("parallel",)),
    )(patches, conv_w, add, g, b)


def _vision_post_kernel(x_ref, g_ref, b_ref, proj_ref, ln_ref, proj_out_ref):
    x = _ln(x_ref[...].astype(jnp.float32), g_ref[...], b_ref[...])
    ln_ref[...] = x.astype(ln_ref.dtype)
    proj_out_ref[...] = _mdot(x, proj_ref[...]).astype(proj_out_ref.dtype)


def vision_post(x, g, b, proj):
    B, S, D = x.shape
    E = proj.shape[1]
    return pl.pallas_call(
        _vision_post_kernel,
        out_shape=(jax.ShapeDtypeStruct((B, S, D), jnp.float32),
                   jax.ShapeDtypeStruct((B, S, E), jnp.float32)),
        grid=(B,),
        in_specs=[
            pl.BlockSpec((None, S, D), lambda b: (b, 0, 0)),
            pl.BlockSpec((1, D), lambda b: (0, 0)),
            pl.BlockSpec((1, D), lambda b: (0, 0)),
            pl.BlockSpec((D, E), lambda b: (0, 0)),
        ],
        out_specs=(pl.BlockSpec((None, S, D), lambda b: (b, 0, 0)),
                   pl.BlockSpec((None, S, E), lambda b: (b, 0, 0))),
        compiler_params=pltpu.CompilerParams(dimension_semantics=("parallel",)),
    )(x, g, b, proj)


def _clip_head_kernel(img_ref, xeot_ref, g_ref, b_ref, tproj_ref, ls_ref,
                      li_ref, lt_ref):
    # ln_final (on the gathered EOT rows) + text projection + L2-norm + logits
    img = img_ref[...].astype(jnp.float32)
    txt = _mdot(_ln(xeot_ref[...].astype(jnp.float32), g_ref[...], b_ref[...]),
                tproj_ref[...])
    img = img * lax.rsqrt(jnp.sum(img * img, axis=-1, keepdims=True))
    txt = txt * lax.rsqrt(jnp.sum(txt * txt, axis=-1, keepdims=True))
    scale = jnp.exp(ls_ref[...])                                   # (1,1) broadcast
    li_ref[...] = scale * lax.dot_general(img, txt, (((1,), (1,)), ((), ())),
                                          preferred_element_type=jnp.float32)
    lt_ref[...] = scale * lax.dot_general(txt, img, (((1,), (1,)), ((), ())),
                                          preferred_element_type=jnp.float32)


def clip_head(image_features, x_eot, g, b, text_projection, logit_scale):
    B = image_features.shape[0]
    return pl.pallas_call(
        _clip_head_kernel,
        out_shape=(jax.ShapeDtypeStruct((B, B), jnp.float32),
                   jax.ShapeDtypeStruct((B, B), jnp.float32)),
        in_specs=[VMEM] * 6,
        out_specs=(VMEM, VMEM),
    )(image_features, x_eot, g.reshape(1, -1), b.reshape(1, -1),
      text_projection, logit_scale.reshape(1, 1))


# --------------------------------------------------------------- branches ----
def encode_image(image, vp):
    """VisionTransformer.forward — returns (x11, x12, xproj)."""
    B = image.shape[0]
    # patchify (stride == patch): NCHW -> (B, HW, C*p*p)  [plain-JAX layout glue]
    x = image.reshape(B, 3, H_RES, PATCH, W_RES, PATCH)
    x = x.transpose(0, 2, 4, 1, 3, 5).reshape(B, H_RES * W_RES, 3 * PATCH * PATCH)
    # zero "patch" row at position 0 for the CLS token (conv of zeros == 0)
    patches = jnp.pad(x, ((0, 0), (1, 0), (0, 0)))
    # fold class_embedding into positional-embedding row 0 (parameter-only glue)
    add = vp["pos_emb"].at[0].add(vp["class_embedding"])

    x = vision_pre(patches, vp["conv1_w"], add, vp["ln_pre_g"], vp["ln_pre_b"])
    x12, x11 = run_transformer(x, vp["blocks"], n_head=VISION_HEADS, causal=False,
                               capture_layer=VISION_LAYERS - 2)
    x12_ln, xproj = vision_post(x12, vp["ln_post_g"], vp["ln_post_b"], vp["proj"])
    return x11, x12_ln, xproj


def encode_text(text, tp):
    B, S = text.shape
    x = jnp.take(tp["token_embedding"], text, axis=0) + tp["pos_emb"][None]   # glue
    x = run_transformer(x, tp["blocks"], n_head=TEXT_HEADS, causal=True)
    eot = jnp.argmax(text, axis=-1)
    # ln_final is row-wise, so selecting the EOT rows first is equivalent;
    # the layernorm + text_projection happen inside the fused clip_head kernel.
    return x[jnp.arange(B), eot]                                              # (B, Dt)


def clip_forward(params, image, text):
    x11, x12, xproj = encode_image(image, params["visual"])
    # TODO(synk): the reference CLIP.forward would crash in PyTorch because the visual
    # encoder returns a tuple; we take the CLS-token projection (standard CLIP image
    # feature) and proceed with the documented normalize + logit computation.
    image_features = xproj[:, 0, :]
    x_eot = encode_text(text, params["text"])
    tp = params["text"]
    return clip_head(image_features, x_eot, tp["ln_final_g"], tp["ln_final_b"],
                     tp["text_projection"], params["logit_scale"])


# ------------------------------------------------------------- parameters ----
def init_transformer_params(key, width, layers, n_head):
    f32 = jnp.float32
    dh = width // n_head
    attn_std = width ** -0.5
    proj_std = (width ** -0.5) * ((2 * layers) ** -0.5)
    fc_std = (2 * width) ** -0.5
    ks = jax.random.split(key, 4)
    return dict(
        ln1_g=jnp.ones((layers, 1, width), f32),
        ln1_b=jnp.zeros((layers, 1, width), f32),
        qkv_w=(jax.random.normal(ks[0], (layers, 3, n_head, width, dh)) * attn_std
               ).astype(MATMUL_DTYPE),
        qkv_b=jnp.zeros((layers, 3, n_head, 1, dh), f32),
        out_w=(jax.random.normal(ks[1], (layers, n_head, dh, width)) * proj_std
               ).astype(MATMUL_DTYPE),
        out_b=jnp.zeros((layers, 1, width), f32),
        ln2_g=jnp.ones((layers, 1, width), f32),
        ln2_b=jnp.zeros((layers, 1, width), f32),
        fc_w=(jax.random.normal(ks[2], (layers, width, 4 * width)) * fc_std
              ).astype(MATMUL_DTYPE),
        fc_b=jnp.zeros((layers, 1, 4 * width), f32),
        proj_w=(jax.random.normal(ks[3], (layers, 4 * width, width)) * proj_std
                ).astype(MATMUL_DTYPE),
        proj_b=jnp.zeros((layers, 1, width), f32),
    )


def init_params(key):
    # TODO(synk): ModifiedResNet / AttentionPool2d branch not implemented — this
    # configuration (vision_layers is an int) selects the VisionTransformer branch.
    f32 = jnp.float32
    kv, kt = jax.random.split(key, 2)

    kvs = jax.random.split(kv, 5)
    scale = VISION_WIDTH ** -0.5
    visual = dict(
        conv1_w=(jax.random.normal(kvs[0], (3 * PATCH * PATCH, VISION_WIDTH)) * 0.02
                 ).astype(MATMUL_DTYPE),
        class_embedding=(jax.random.normal(kvs[1], (VISION_WIDTH,)) * scale).astype(f32),
        pos_emb=(jax.random.normal(kvs[2], (VISION_SEQ, VISION_WIDTH)) * scale).astype(f32),
        ln_pre_g=jnp.ones((1, VISION_WIDTH), f32),
        ln_pre_b=jnp.zeros((1, VISION_WIDTH), f32),
        ln_post_g=jnp.ones((1, VISION_WIDTH), f32),
        ln_post_b=jnp.zeros((1, VISION_WIDTH), f32),
        proj=(jax.random.normal(kvs[3], (VISION_WIDTH, EMBED_DIM)) * scale
              ).astype(MATMUL_DTYPE),
        blocks=init_transformer_params(kvs[4], VISION_WIDTH, VISION_LAYERS, VISION_HEADS),
    )

    kts = jax.random.split(kt, 4)
    text = dict(
        token_embedding=(jax.random.normal(kts[0], (VOCAB_SIZE, TEXT_WIDTH)) * 0.02
                         ).astype(f32),
        pos_emb=(jax.random.normal(kts[1], (CONTEXT_LENGTH, TEXT_WIDTH)) * 0.01).astype(f32),
        ln_final_g=jnp.ones((TEXT_WIDTH,), f32),
        ln_final_b=jnp.zeros((TEXT_WIDTH,), f32),
        text_projection=(jax.random.normal(kts[2], (TEXT_WIDTH, EMBED_DIM))
                         * TEXT_WIDTH ** -0.5).astype(MATMUL_DTYPE),
        blocks=init_transformer_params(kts[3], TEXT_WIDTH, TEXT_LAYERS, TEXT_HEADS),
    )

    return dict(visual=visual, text=text,
                logit_scale=jnp.asarray(math.log(1.0 / 0.07), f32))


# ------------------------------------------------------------------- main ----
if __name__ == "__main__":
    key = jax.random.PRNGKey(0)
    k_img, k_txt, k_par = jax.random.split(key, 3)

    image = jax.random.normal(k_img, (2, 3, IMG_H, IMG_W), jnp.float32)   # NCHW
    text = jax.random.randint(k_txt, (2, CONTEXT_LENGTH), 0, VOCAB_SIZE, dtype=jnp.int32)
    params = init_params(k_par)

    logits_per_image, logits_per_text = jax.jit(clip_forward)(params, image, text)
    jax.block_until_ready((logits_per_image, logits_per_text))

    assert logits_per_image.shape == (2, 2) and logits_per_text.shape == (2, 2)
    print("KERNEL_OK")
</pallas_src>

<mosaic_0001>
module attributes {stable_mosaic.version = 11 : i64} {
  func.func @_vision_pre_kernel(%arg0: i32, %arg1: memref<1x17x192xf32, #tpu.memory_space<vmem>>, %arg2: memref<192x64xbf16, #tpu.memory_space<vmem>>, %arg3: memref<17x64xf32, #tpu.memory_space<vmem>>, %arg4: memref<1x64xf32, #tpu.memory_space<vmem>>, %arg5: memref<1x64xf32, #tpu.memory_space<vmem>>, %arg6: memref<1x17x64xf32, #tpu.memory_space<vmem>>) attributes {dimension_semantics = [#tpu.dimension_semantics<parallel>], iteration_bounds = array<i64: 2>, scalar_prefetch = 0 : i64, scratch_operands = 0 : i64, tpu.core_type = #tpu.core_type<tc>, window_params = [{transform_indices = @transform_0, window_bounds = array<i64: 1, 17, 192>}, {pipeline_mode = #tpu.pipeline_mode<synchronous>, transform_indices = @transform_1, window_bounds = array<i64: 192, 64>}, {pipeline_mode = #tpu.pipeline_mode<synchronous>, transform_indices = @transform_2, window_bounds = array<i64: 17, 64>}, {pipeline_mode = #tpu.pipeline_mode<synchronous>, transform_indices = @transform_3, window_bounds = array<i64: 1, 64>}, {pipeline_mode = #tpu.pipeline_mode<synchronous>, transform_indices = @transform_4, window_bounds = array<i64: 1, 64>}, {transform_indices = @transform_5, window_bounds = array<i64: 1, 17, 64>}]} {
    %c0 = arith.constant 0 : index
    %c0_0 = arith.constant 0 : index
    %c0_1 = arith.constant 0 : index
    %0 = vector.load %arg1[%c0, %c0_0, %c0_1] : memref<1x17x192xf32, #tpu.memory_space<vmem>>, vector<1x17x192xf32>
    %1 = vector.shape_cast %0 : vector<1x17x192xf32> to vector<17x192xf32>
    %c0_2 = arith.constant 0 : index
    %c0_3 = arith.constant 0 : index
    %2 = vector.load %arg2[%c0_2, %c0_3] : memref<192x64xbf16, #tpu.memory_space<vmem>>, vector<192x64xbf16>
    %3 = arith.truncf %1 : vector<17x192xf32> to vector<17x192xbf16>
    %cst = arith.constant dense<0.000000e+00> : vector<17x64xf32>
    %4 = tpu.matmul %3, %2, %cst {dimension_numbers = #tpu.dot_dimension_numbers<[1], [0], [0], [1], [0, 0, 1, 1], [], []>} : vector<17x192xbf16>, vector<192x64xbf16>, vector<17x64xf32> -> vector<17x64xf32>
    %c0_4 = arith.constant 0 : index
    %c0_5 = arith.constant 0 : index
    %5 = vector.load %arg3[%c0_4, %c0_5] : memref<17x64xf32, #tpu.memory_space<vmem>>, vector<17x64xf32>
    %6 = arith.addf %4, %5 : vector<17x64xf32>
    %c0_6 = arith.constant 0 : index
    %c0_7 = arith.constant 0 : index
    %7 = vector.load %arg4[%c0_6, %c0_7] : memref<1x64xf32, #tpu.memory_space<vmem>>, vector<1x64xf32>
    %c0_8 = arith.constant 0 : index
    %c0_9 = arith.constant 0 : index
    %8 = vector.load %arg5[%c0_8, %c0_9] : memref<1x64xf32, #tpu.memory_space<vmem>>, vector<1x64xf32>
    %cst_10 = arith.constant dense<0.000000e+00> : vector<17xf32>
    %9 = vector.multi_reduction <add>, %6, %cst_10 [1] : vector<17x64xf32> to vector<17xf32>
    %10 = vector.shape_cast %9 : vector<17xf32> to vector<17x1xf32>
    %cst_11 = arith.constant 6.400000e+01 : f32
    %11 = vector.broadcast %cst_11 : f32 to vector<17x1xf32>
    %12 = arith.divf %10, %11 : vector<17x1xf32>
    %13 = vector.broadcast %12 : vector<17x1xf32> to vector<17x64xf32>
    %14 = arith.subf %6, %13 : vector<17x64xf32>
    %15 = arith.mulf %14, %14 : vector<17x64xf32>
    %cst_12 = arith.constant dense<0.000000e+00> : vector<17xf32>
    %16 = vector.multi_reduction <add>, %15, %cst_12 [1] : vector<17x64xf32> to vector<17xf32>
    %17 = vector.shape_cast %16 : vector<17xf32> to vector<17x1xf32>
    %cst_13 = arith.constant 6.400000e+01 : f32
    %18 = vector.broadcast %cst_13 : f32 to vector<17x1xf32>
    %19 = arith.divf %17, %18 : vector<17x1xf32>
    %cst_14 = arith.constant 9.99999974E-6 : f32
    %20 = vector.broadcast %cst_14 : f32 to vector<17x1xf32>
    %21 = arith.addf %19, %20 : vector<17x1xf32>
    %22 = math.rsqrt %21 : vector<17x1xf32>
    %23 = vector.broadcast %22 : vector<17x1xf32> to vector<17x64xf32>
    %24 = arith.mulf %14, %23 : vector<17x64xf32>
    %25 = vector.broadcast %7 : vector<1x64xf32> to vector<17x64xf32>
    %26 = arith.mulf %24, %25 : vector<17x64xf32>
    %27 = vector.broadcast %8 : vector<1x64xf32> to vector<17x64xf32>
    %28 = arith.addf %26, %27 : vector<17x64xf32>
    %c0_15 = arith.constant 0 : index
    %c0_16 = arith.constant 0 : index
    %c0_17 = arith.constant 0 : index
    %29 = vector.load %arg6[%c0_15, %c0_16, %c0_17] : memref<1x17x64xf32, #tpu.memory_space<vmem>>, vector<1x17x64xf32>
    %30 = vector.shape_cast %29 : vector<1x17x64xf32> to vector<17x64xf32>
    %31 = vector.shape_cast %28 : vector<17x64xf32> to vector<1x17x64xf32>
    tpu.vector_store %arg6[%c0_15, %c0_16, %c0_17], %31 {strides = array<i32>} : memref<1x17x64xf32, #tpu.memory_space<vmem>>, vector<1x17x64xf32>,
    return
  }
  func.func @transform_0(%arg0: i32) -> (i32, i32, i32) {
    %c0_i32 = arith.constant 0 : i32
    %c0_i32_0 = arith.constant 0 : i32
    %c0_i32_1 = arith.constant 0 : i32
    return %arg0, %c0_i32, %c0_i32_0 : i32, i32, i32
  }
  func.func @transform_1(%arg0: i32) -> (i32, i32) {
    %c0_i32 = arith.constant 0 : i32
    %c0_i32_0 = arith.constant 0 : i32
    %c0_i32_1 = arith.constant 0 : i32
    return %c0_i32, %c0_i32_0 : i32, i32
  }
  func.func @transform_2(%arg0: i32) -> (i32, i32) {
    %c0_i32 = arith.constant 0 : i32
    %c0_i32_0 = arith.constant 0 : i32
    %c0_i32_1 = arith.constant 0 : i32
    return %c0_i32, %c0_i32_0 : i32, i32
  }
  func.func @transform_3(%arg0: i32) -> (i32, i32) {
    %c0_i32 = arith.constant 0 : i32
    %c0_i32_0 = arith.constant 0 : i32
    %c0_i32_1 = arith.constant 0 : i32
    return %c0_i32, %c0_i32_0 : i32, i32
  }
  func.func @transform_4(%arg0: i32) -> (i32, i32) {
    %c0_i32 = arith.constant 0 : i32
    %c0_i32_0 = arith.constant 0 : i32
    %c0_i32_1 = arith.constant 0 : i32
    return %c0_i32, %c0_i32_0 : i32, i32
  }
  func.func @transform_5(%arg0: i32) -> (i32, i32, i32) {
    %c0_i32 = arith.constant 0 : i32
    %c0_i32_0 = arith.constant 0 : i32
    %c0_i32_1 = arith.constant 0 : i32
    return %arg0, %c0_i32, %c0_i32_0 : i32, i32, i32
  }
}

module attributes {stable_mosaic.version = 11 : i64} {
  func.func @kernel(%arg0: i32, %arg1: i32, %arg2: memref<1x17x64xf32, #tpu.memory_space<vmem>>, %arg3: memref<1x1x64xf32, #tpu.memory_space<vmem>>, %arg4: memref<1x1x64xf32, #tpu.memory_space<vmem>>, %arg5: memref<1x3x1x64x64xbf16, #tpu.memory_space<vmem>>, %arg6: memref<1x3x1x1x64xf32, #tpu.memory_space<vmem>>, %arg7: memref<1x1x64x64xbf16, #tpu.memory_space<vmem>>, %arg8: memref<1x1x64xf32, #tpu.memory_space<vmem>>, %arg9: memref<1x1x64xf32, #tpu.memory_space<vmem>>, %arg10: memref<1x1x64xf32, #tpu.memory_space<vmem>>, %arg11: memref<1x64x256xbf16, #tpu.memory_space<vmem>>, %arg12: memref<1x1x256xf32, #tpu.memory_space<vmem>>, %arg13: memref<1x256x64xbf16, #tpu.memory_space<vmem>>, %arg14: memref<1x1x64xf32, #tpu.memory_space<vmem>>, %arg15: memref<1x17x64xf32, #tpu.memory_space<vmem>>, %arg16: memref<1x17x64xf32, #tpu.memory_space<vmem>>) attributes {dimension_semantics = [#tpu.dimension_semantics<parallel>, #tpu.dimension_semantics<arbitrary>], iteration_bounds = array<i64: 2, 12>, scalar_prefetch = 0 : i64, scratch_operands = 0 : i64, tpu.core_type = #tpu.core_type<tc>, window_params = [{transform_indices = @transform_0, window_bounds = array<i64: 1, 17, 64>}, {transform_indices = @transform_1, window_bounds = array<i64: 1, 1, 64>}, {transform_indices = @transform_2, window_bounds = array<i64: 1, 1, 64>}, {transform_indices = @transform_3, window_bounds = array<i64: 1, 3, 1, 64, 64>}, {transform_indices = @transform_4, window_bounds = array<i64: 1, 3, 1, 1, 64>}, {transform_indices = @transform_5, window_bounds = array<i64: 1, 1, 64, 64>}, {transform_indices = @transform_6, window_bounds = array<i64: 1, 1, 64>}, {transform_indices = @transform_7, window_bounds = array<i64: 1, 1, 64>}, {transform_indices = @transform_8, window_bounds = array<i64: 1, 1, 64>}, {transform_indices = @transform_9, window_bounds = array<i64: 1, 64, 256>}, {transform_indices = @transform_10, window_bounds = array<i64: 1, 1, 256>}, {transform_indices = @transform_11, window_bounds = array<i64: 1, 256, 64>}, {transform_indices = @transform_12, window_bounds = array<i64: 1, 1, 64>}, {transform_indices = @transform_13, window_bounds = array<i64: 1, 17, 64>}, {transform_indices = @transform_14, window_bounds = array<i64: 1, 17, 64>}]} {
    %c0_i32 = arith.constant 0 : i32
    %0 = arith.cmpi eq, %arg1, %c0_i32 : i32
    %1 = arith.extui %0 : i1 to i32
    %c0_i32_0 = arith.constant 0 : i32
    %2 = arith.cmpi ne, %1, %c0_i32_0 : i32
    scf.if %2 {
      %c0_88 = arith.constant 0 : index
      %c0_89 = arith.constant 0 : index
      %c0_90 = arith.constant 0 : index
      %131 = vector.load %arg2[%c0_88, %c0_89, %c0_90] : memref<1x17x64xf32, #tpu.memory_space<vmem>>, vector<1x17x64xf32>
      %132 = vector.shape_cast %131 : vector<1x17x64xf32> to vector<17x64xf32>
      %c0_91 = arith.constant 0 : index
      %c0_92 = arith.constant 0 : index
      %c0_93 = arith.constant 0 : index
      %133 = vector.load %arg15[%c0_91, %c0_92, %c0_93] : memref<1x17x64xf32, #tpu.memory_space<vmem>>, vector<1x17x64xf32>
      %134 = vector.shape_cast %133 : vector<1x17x64xf32> to vector<17x64xf32>
      %135 = vector.shape_cast %132 : vector<17x64xf32> to vector<1x17x64xf32>
      tpu.vector_store %arg15[%c0_91, %c0_92, %c0_93], %135 {strides = array<i32>} : memref<1x17x64xf32, #tpu.memory_space<vmem>>, vector<1x17x64xf32>,
    } else {
    }
    %c0 = arith.constant 0 : index
    %c0_1 = arith.constant 0 : index
    %c0_2 = arith.constant 0 : index
    %3 = vector.load %arg15[%c0, %c0_1, %c0_2] : memref<1x17x64xf32, #tpu.memory_space<vmem>>, vector<1x17x64xf32>
    %4 = vector.shape_cast %3 : vector<1x17x64xf32> to vector<17x64xf32>
    %c0_3 = arith.constant 0 : index
    %c0_4 = arith.constant 0 : index
    %c0_5 = arith.constant 0 : index
    %5 = vector.load %arg3[%c0_3, %c0_4, %c0_5] : memref<1x1x64xf32, #tpu.memory_space<vmem>>, vector<1x1x64xf32>
    %6 = vector.shape_cast %5 : vector<1x1x64xf32> to vector<1x64xf32>
    %c0_6 = arith.constant 0 : index
    %c0_7 = arith.constant 0 : index
    %c0_8 = arith.constant 0 : index
    %7 = vector.load %arg4[%c0_6, %c0_7, %c0_8] : memref<1x1x64xf32, #tpu.memory_space<vmem>>, vector<1x1x64xf32>
    %8 = vector.shape_cast %7 : vector<1x1x64xf32> to vector<1x64xf32>
    %cst = arith.constant dense<0.000000e+00> : vector<17xf32>
    %9 = vector.multi_reduction <add>, %4, %cst [1] : vector<17x64xf32> to vector<17xf32>
    %10 = vector.shape_cast %9 : vector<17xf32> to vector<17x1xf32>
    %cst_9 = arith.constant 6.400000e+01 : f32
    %11 = vector.broadcast %cst_9 : f32 to vector<17x1xf32>
    %12 = arith.divf %10, %11 : vector<17x1xf32>
    %13 = vector.broadcast %12 : vector<17x1xf32> to vector<17x64xf32>
    %14 = arith.subf %4, %13 : vector<17x64xf32>
    %15 = arith.mulf %14, %14 : vector<17x64xf32>
    %cst_10 = arith.constant dense<0.000000e+00> : vector<17xf32>
    %16 = vector.multi_reduction <add>, %15, %cst_10 [1] : vector<17x64xf32> to vector<17xf32>
    %17 = vector.shape_cast %16 : vector<17xf32> to vector<17x1xf32>
    %cst_11 = arith.constant 6.400000e+01 : f32
    %18 = vector.broadcast %cst_11 : f32 to vector<17x1xf32>
    %19 = arith.divf %17, %18 : vector<17x1xf32>
    %cst_12 = arith.constant 9.99999974E-6 : f32
    %20 = vector.broadcast %cst_12 : f32 to vector<17x1xf32>
    %21 = arith.addf %19, %20 : vector<17x1xf32>
    %22 = math.rsqrt %21 : vector<17x1xf32>
    %23 = vector.broadcast %22 : vector<17x1xf32> to vector<17x64xf32>
    %24 = arith.mulf %14, %23 : vector<17x64xf32>
    %25 = vector.broadcast %6 : vector<1x64xf32> to vector<17x64xf32>
    %26 = arith.mulf %24, %25 : vector<17x64xf32>
    %27 = vector.broadcast %8 : vector<1x64xf32> to vector<17x64xf32>
    %28 = arith.addf %26, %27 : vector<17x64xf32>
    %c0_13 = arith.constant 0 : index
    %c0_14 = arith.constant 0 : index
    %c0_15 = arith.constant 0 : index
    %c0_16 = arith.constant 0 : index
    %c0_17 = arith.constant 0 : index
    %29 = vector.load %arg5[%c0_13, %c0_14, %c0_15, %c0_16, %c0_17] : memref<1x3x1x64x64xbf16, #tpu.memory_space<vmem>>, vector<1x1x1x64x64xbf16>
    %30 = vector.shape_cast %29 : vector<1x1x1x64x64xbf16> to vector<64x64xbf16>
    %31 = arith.truncf %28 : vector<17x64xf32> to vector<17x64xbf16>
    %cst_18 = arith.constant dense<0.000000e+00> : vector<17x64xf32>
    %32 = tpu.matmul %31, %30, %cst_18 {dimension_numbers = #tpu.dot_dimension_numbers<[1], [0], [0], [1], [0, 0, 1, 1], [], []>} : vector<17x64xbf16>, vector<64x64xbf16>, vector<17x64xf32> -> vector<17x64xf32>
    %c0_19 = arith.constant 0 : index
    %c0_20 = arith.constant 0 : index
    %c0_21 = arith.constant 0 : index
    %c0_22 = arith.constant 0 : index
    %c0_23 = arith.constant 0 : index
    %33 = vector.load %arg6[%c0_19, %c0_20, %c0_21, %c0_22, %c0_23] : memref<1x3x1x1x64xf32, #tpu.memory_space<vmem>>, vector<1x1x1x1x64xf32>
    %34 = vector.shape_cast %33 : vector<1x1x1x1x64xf32> to vector<1x64xf32>
    %35 = vector.broadcast %34 : vector<1x64xf32> to vector<17x64xf32>
    %36 = arith.addf %32, %35 : vector<17x64xf32>
    %c0_24 = arith.constant 0 : index
    %c1 = arith.constant 1 : index
    %c0_25 = arith.constant 0 : index
    %c0_26 = arith.constant 0 : index
    %c0_27 = arith.constant 0 : index
    %37 = vector.load %arg5[%c0_24, %c1, %c0_25, %c0_26, %c0_27] : memref<1x3x1x64x64xbf16, #tpu.memory_space<vmem>>, vector<1x1x1x64x64xbf16>
    %38 = vector.shape_cast %37 : vector<1x1x1x64x64xbf16> to vector<64x64xbf16>
    %39 = arith.truncf %28 : vector<17x64xf32> to vector<17x64xbf16>
    %cst_28 = arith.constant dense<0.000000e+00> : vector<17x64xf32>
    %40 = tpu.matmul %39, %38, %cst_28 {dimension_numbers = #tpu.dot_dimension_numbers<[1], [0], [0], [1], [0, 0, 1, 1], [], []>} : vector<17x64xbf16>, vector<64x64xbf16>, vector<17x64xf32> -> vector<17x64xf32>
    %c0_29 = arith.constant 0 : index
    %c1_30 = arith.constant 1 : index
    %c0_31 = arith.constant 0 : index
    %c0_32 = arith.constant 0 : index
    %c0_33 = arith.constant 0 : index
    %41 = vector.load %arg6[%c0_29, %c1_30, %c0_31, %c0_32, %c0_33] : memref<1x3x1x1x64xf32, #tpu.memory_space<vmem>>, vector<1x1x1x1x64xf32>
    %42 = vector.shape_cast %41 : vector<1x1x1x1x64xf32> to vector<1x64xf32>
    %43 = vector.broadcast %42 : vector<1x64xf32> to vector<17x64xf32>
    %44 = arith.addf %40, %43 : vector<17x64xf32>
    %c0_34 = arith.constant 0 : index
    %c2 = arith.constant 2 : index
    %c0_35 = arith.constant 0 : index
    %c0_36 = arith.constant 0 : index
    %c0_37 = arith.constant 0 : index
    %45 = vector.load %arg5[%c0_34, %c2, %c0_35, %c0_36, %c0_37] : memref<1x3x1x64x64xbf16, #tpu.memory_space<vmem>>, vector<1x1x1x64x64xbf16>
    %46 = vector.shape_cast %45 : vector<1x1x1x64x64xbf16> to vector<64x64xbf16>
    %47 = arith.truncf %28 : vector<17x64xf32> to vector<17x64xbf16>
    %cst_38 = arith.constant dense<0.000000e+00> : vector<17x64xf32>
    %48 = tpu.matmul %47, %46, %cst_38 {dimension_numbers = #tpu.dot_dimension_numbers<[1], [0], [0], [1], [0, 0, 1, 1], [], []>} : vector<17x64xbf16>, vector<64x64xbf16>, vector<17x64xf32> -> vector<17x64xf32>
    %c0_39 = arith.constant 0 : index
    %c2_40 = arith.constant 2 : index
    %c0_41 = arith.constant 0 : index
    %c0_42 = arith.constant 0 : index
    %c0_43 = arith.constant 0 : index
    %49 = vector.load %arg6[%c0_39, %c2_40, %c0_41, %c0_42, %c0_43] : memref<1x3x1x1x64xf32, #tpu.memory_space<vmem>>, vector<1x1x1x1x64xf32>
    %50 = vector.shape_cast %49 : vector<1x1x1x1x64xf32> to vector<1x64xf32>
    %51 = vector.broadcast %50 : vector<1x64xf32> to vector<17x64xf32>
    %52 = arith.addf %48, %51 : vector<17x64xf32>
    %cst_44 = arith.constant dense<0.000000e+00> : vector<17x17xf32>
    %53 = tpu.matmul %36, %44, %cst_44 {dimension_numbers = #tpu.dot_dimension_numbers<[1], [1], [0], [0], [0, 0, 1, 0], [], []>} : vector<17x64xf32>, vector<17x64xf32>, vector<17x17xf32> -> vector<17x17xf32>
    %cst_45 = arith.constant 1.250000e-01 : f32
    %54 = vector.broadcast %cst_45 : f32 to vector<17x17xf32>
    %55 = arith.mulf %53, %54 : vector<17x17xf32>
    %cst_46 = arith.constant dense<0xFF800000> : vector<17xf32>
    %56 = vector.multi_reduction <maximumf>, %55, %cst_46 [1] : vector<17x17xf32> to vector<17xf32>
    %57 = vector.shape_cast %56 : vector<17xf32> to vector<17x1xf32>
    %58 = vector.broadcast %57 : vector<17x1xf32> to vector<17x17xf32>
    %59 = arith.subf %55, %58 : vector<17x17xf32>
    %60 = math.exp %59 : vector<17x17xf32>
    %cst_47 = arith.constant dense<0.000000e+00> : vector<17xf32>
    %61 = vector.multi_reduction <add>, %60, %cst_47 [1] : vector<17x17xf32> to vector<17xf32>
    %62 = vector.shape_cast %61 : vector<17xf32> to vector<17x1xf32>
    %63 = tpu.reciprocal %62 {approx = true} : vector<17x1xf32> -> vector<17x1xf32>
    %64 = vector.broadcast %63 : vector<17x1xf32> to vector<17x17xf32>
    %65 = arith.mulf %60, %64 : vector<17x17xf32>
    %cst_48 = arith.constant dense<0.000000e+00> : vector<17x64xf32>
    %66 = tpu.matmul %65, %52, %cst_48 {dimension_numbers = #tpu.dot_dimension_numbers<[1], [0], [0], [1], [0, 0, 1, 1], [], []>} : vector<17x17xf32>, vector<17x64xf32>, vector<17x64xf32> -> vector<17x64xf32>
    %c0_49 = arith.constant 0 : index
    %c0_50 = arith.constant 0 : index
    %c0_51 = arith.constant 0 : index
    %c0_52 = arith.constant 0 : index
    %67 = vector.load %arg7[%c0_49, %c0_50, %c0_51, %c0_52] : memref<1x1x64x64xbf16, #tpu.memory_space<vmem>>, vector<1x1x64x64xbf16>
    %68 = vector.shape_cast %67 : vector<1x1x64x64xbf16> to vector<64x64xbf16>
    %69 = arith.truncf %66 : vector<17x64xf32> to vector<17x64xbf16>
    %cst_53 = arith.constant dense<0.000000e+00> : vector<17x64xf32>
    %70 = tpu.matmul %69, %68, %cst_53 {dimension_numbers = #tpu.dot_dimension_numbers<[1], [0], [0], [1], [0, 0, 1, 1], [], []>} : vector<17x64xbf16>, vector<64x64xbf16>, vector<17x64xf32> -> vector<17x64xf32>
    %71 = arith.addf %4, %70 : vector<17x64xf32>
    %c0_54 = arith.constant 0 : index
    %c0_55 = arith.constant 0 : index
    %c0_56 = arith.constant 0 : index
    %72 = vector.load %arg8[%c0_54, %c0_55, %c0_56] : memref<1x1x64xf32, #tpu.memory_space<vmem>>, vector<1x1x64xf32>
    %73 = vector.shape_cast %72 : vector<1x1x64xf32> to vector<1x64xf32>
    %74 = vector.broadcast %73 : vector<1x64xf32> to vector<17x64xf32>
    %75 = arith.addf %71, %74 : vector<17x64xf32>
    %c0_57 = arith.constant 0 : index
    %c0_58 = arith.constant 0 : index
    %c0_59 = arith.constant 0 : index
    %76 = vector.load %arg9[%c0_57, %c0_58, %c0_59] : memref<1x1x64xf32, #tpu.memory_space<vmem>>, vector<1x1x64xf32>
    %77 = vector.shape_cast %76 : vector<1x1x64xf32> to vector<1x64xf32>
    %c0_60 = arith.constant 0 : index
    %c0_61 = arith.constant 0 : index
    %c0_62 = arith.constant 0 : index
    %78 = vector.load %arg10[%c0_60, %c0_61, %c0_62] : memref<1x1x64xf32, #tpu.memory_space<vmem>>, vector<1x1x64xf32>
    %79 = vector.shape_cast %78 : vector<1x1x64xf32> to vector<1x64xf32>
    %cst_63 = arith.constant dense<0.000000e+00> : vector<17xf32>
    %80 = vector.multi_reduction <add>, %75, %cst_63 [1] : vector<17x64xf32> to vector<17xf32>
    %81 = vector.shape_cast %80 : vector<17xf32> to vector<17x1xf32>
    %cst_64 = arith.constant 6.400000e+01 : f32
    %82 = vector.broadcast %cst_64 : f32 to vector<17x1xf32>
    %83 = arith.divf %81, %82 : vector<17x1xf32>
    %84 = vector.broadcast %83 : vector<17x1xf32> to vector<17x64xf32>
    %85 = arith.subf %75, %84 : vector<17x64xf32>
    %86 = arith.mulf %85, %85 : vector<17x64xf32>
    %cst_65 = arith.constant dense<0.000000e+00> : vector<17xf32>
    %87 = vector.multi_reduction <add>, %86, %cst_65 [1] : vector<17x64xf32> to vector<17xf32>
    %88 = vector.shape_cast %87 : vector<17xf32> to vector<17x1xf32>
    %cst_66 = arith.constant 6.400000e+01 : f32
    %89 = vector.broadcast %cst_66 : f32 to vector<17x1xf32>
    %90 = arith.divf %88, %89 : vector<17x1xf32>
    %cst_67 = arith.constant 9.99999974E-6 : f32
    %91 = vector.broadcast %cst_67 : f32 to vector<17x1xf32>
    %92 = arith.addf %90, %91 : vector<17x1xf32>
    %93 = math.rsqrt %92 : vector<17x1xf32>
    %94 = vector.broadcast %93 : vector<17x1xf32> to vector<17x64xf32>
    %95 = arith.mulf %85, %94 : vector<17x64xf32>
    %96 = vector.broadcast %77 : vector<1x64xf32> to vector<17x64xf32>
    %97 = arith.mulf %95, %96 : vector<17x64xf32>
    %98 = vector.broadcast %79 : vector<1x64xf32> to vector<17x64xf32>
    %99 = arith.addf %97, %98 : vector<17x64xf32>
    %c0_68 = arith.constant 0 : index
    %c0_69 = arith.constant 0 : index
    %c0_70 = arith.constant 0 : index
    %100 = vector.load %arg11[%c0_68, %c0_69, %c0_70] : memref<1x64x256xbf16, #tpu.memory_space<vmem>>, vector<1x64x256xbf16>
    %101 = vector.shape_cast %100 : vector<1x64x256xbf16> to vector<64x256xbf16>
    %102 = arith.truncf %99 : vector<17x64xf32> to vector<17x64xbf16>
    %cst_71 = arith.constant dense<0.000000e+00> : vector<17x256xf32>
    %103 = tpu.matmul %102, %101, %cst_71 {dimension_numbers = #tpu.dot_dimension_numbers<[1], [0], [0], [1], [0, 0, 1, 1], [], []>} : vector<17x64xbf16>, vector<64x256xbf16>, vector<17x256xf32> -> vector<17x256xf32>
    %c0_72 = arith.constant 0 : index
    %c0_73 = arith.constant 0 : index
    %c0_74 = arith.constant 0 : index
    %104 = vector.load %arg12[%c0_72, %c0_73, %c0_74] : memref<1x1x256xf32, #tpu.memory_space<vmem>>, vector<1x1x256xf32>
    %105 = vector.shape_cast %104 : vector<1x1x256xf32> to vector<1x256xf32>
    %106 = vector.broadcast %105 : vector<1x256xf32> to vector<17x256xf32>
    %107 = arith.addf %103, %106 : vector<17x256xf32>
    %cst_75 = arith.constant 1.702000e+00 : f32
    %108 = vector.broadcast %cst_75 : f32 to vector<17x256xf32>
    %109 = arith.mulf %108, %107 : vector<17x256xf32>
    %110 = arith.negf %109 : vector<17x256xf32>
    %111 = math.exp %110 : vector<17x256xf32>
    %cst_76 = arith.constant 1.000000e+00 : f32
    %112 = vector.broadcast %cst_76 : f32 to vector<17x256xf32>
    %113 = arith.addf %112, %111 : vector<17x256xf32>
    %114 = arith.divf %112, %113 : vector<17x256xf32>
    %115 = arith.mulf %107, %114 : vector<17x256xf32>
    %c0_77 = arith.constant 0 : index
    %c0_78 = arith.constant 0 : index
    %c0_79 = arith.constant 0 : index
    %116 = vector.load %arg13[%c0_77, %c0_78, %c0_79] : memref<1x256x64xbf16, #tpu.memory_space<vmem>>, vector<1x256x64xbf16>
    %117 = vector.shape_cast %116 : vector<1x256x64xbf16> to vector<256x64xbf16>
    %118 = arith.truncf %115 : vector<17x256xf32> to vector<17x256xbf16>
    %cst_80 = arith.constant dense<0.000000e+00> : vector<17x64xf32>
    %119 = tpu.matmul %118, %117, %cst_80 {dimension_numbers = #tpu.dot_dimension_numbers<[1], [0], [0], [1], [0, 0, 1, 1], [], []>} : vector<17x256xbf16>, vector<256x64xbf16>, vector<17x64xf32> -> vector<17x64xf32>
    %120 = arith.addf %75, %119 : vector<17x64xf32>
    %c0_81 = arith.constant 0 : index
    %c0_82 = arith.constant 0 : index
    %c0_83 = arith.constant 0 : index
    %121 = vector.load %arg14[%c0_81, %c0_82, %c0_83] : memref<1x1x64xf32, #tpu.memory_space<vmem>>, vector<1x1x64xf32>
    %122 = vector.shape_cast %121 : vector<1x1x64xf32> to vector<1x64xf32>
    %123 = vector.broadcast %122 : vector<1x64xf32> to vector<17x64xf32>
    %124 = arith.addf %120, %123 : vector<17x64xf32>
    %c0_84 = arith.constant 0 : index
    %c0_85 = arith.constant 0 : index
    %c0_86 = arith.constant 0 : index
    %125 = vector.load %arg15[%c0_84, %c0_85, %c0_86] : memref<1x17x64xf32, #tpu.memory_space<vmem>>, vector<1x17x64xf32>
    %126 = vector.shape_cast %125 : vector<1x17x64xf32> to vector<17x64xf32>
    %127 = vector.shape_cast %124 : vector<17x64xf32> to vector<1x17x64xf32>
    tpu.vector_store %arg15[%c0_84, %c0_85, %c0_86], %127 {strides = array<i32>} : memref<1x17x64xf32, #tpu.memory_space<vmem>>, vector<1x17x64xf32>,
    %c10_i32 = arith.constant 10 : i32
    %128 = arith.cmpi eq, %arg1, %c10_i32 : i32
    %129 = arith.extui %128 : i1 to i32
    %c0_i32_87 = arith.constant 0 : i32
    %130 = arith.cmpi ne, %129, %c0_i32_87 : i32
    scf.if %130 {
      %c0_88 = arith.constant 0 : index
      %c0_89 = arith.constant 0 : index
      %c0_90 = arith.constant 0 : index
      %131 = vector.load %arg16[%c0_88, %c0_89, %c0_90] : memref<1x17x64xf32, #tpu.memory_space<vmem>>, vector<1x17x64xf32>
      %132 = vector.shape_cast %131 : vector<1x17x64xf32> to vector<17x64xf32>
      %133 = vector.shape_cast %124 : vector<17x64xf32> to vector<1x17x64xf32>
      tpu.vector_store %arg16[%c0_88, %c0_89, %c0_90], %133 {strides = array<i32>} : memref<1x17x64xf32, #tpu.memory_space<vmem>>, vector<1x17x64xf32>,
    } else {
    }
    return
  }
  func.func @transform_0(%arg0: i32, %arg1: i32) -> (i32, i32, i32) {
    %c0_i32 = arith.constant 0 : i32
    %c0_i32_0 = arith.constant 0 : i32
    %c0_i32_1 = arith.constant 0 : i32
    return %arg0, %c0_i32, %c0_i32_0 : i32, i32, i32
  }
  func.func @transform_1(%arg0: i32, %arg1: i32) -> (i32, i32, i32) {
    %c0_i32 = arith.constant 0 : i32
    %c0_i32_0 = arith.constant 0 : i32
    %c0_i32_1 = arith.constant 0 : i32
    return %arg1, %c0_i32, %c0_i32_0 : i32, i32, i32
  }
  func.func @transform_2(%arg0: i32, %arg1: i32) -> (i32, i32, i32) {
    %c0_i32 = arith.constant 0 : i32
    %c0_i32_0 = arith.constant 0 : i32
    %c0_i32_1 = arith.constant 0 : i32
    return %arg1, %c0_i32, %c0_i32_0 : i32, i32, i32
  }
  func.func @transform_3(%arg0: i32, %arg1: i32) -> (i32, i32, i32, i32, i32) {
    %c0_i32 = arith.constant 0 : i32
    %c0_i32_0 = arith.constant 0 : i32
    %c0_i32_1 = arith.constant 0 : i32
    %c0_i32_2 = arith.constant 0 : i32
    %c0_i32_3 = arith.constant 0 : i32
    return %arg1, %c0_i32, %c0_i32_0, %c0_i32_1, %c0_i32_2 : i32, i32, i32, i32, i32
  }
  func.func @transform_4(%arg0: i32, %arg1: i32) -> (i32, i32, i32, i32, i32) {
    %c0_i32 = arith.constant 0 : i32
    %c0_i32_0 = arith.constant 0 : i32
    %c0_i32_1 = arith.constant 0 : i32
    %c0_i32_2 = arith.constant 0 : i32
    %c0_i32_3 = arith.constant 0 : i32
    return %arg1, %c0_i32, %c0_i32_0, %c0_i32_1, %c0_i32_2 : i32, i32, i32, i32, i32
  }
  func.func @transform_5(%arg0: i32, %arg1: i32) -> (i32, i32, i32, i32) {
    %c0_i32 = arith.constant 0 : i32
    %c0_i32_0 = arith.constant 0 : i32
    %c0_i32_1 = arith.constant 0 : i32
    %c0_i32_2 = arith.constant 0 : i32
    return %arg1, %c0_i32, %c0_i32_0, %c0_i32_1 : i32, i32, i32, i32
  }
  func.func @transform_6(%arg0: i32, %arg1: i32) -> (i32, i32, i32) {
    %c0_i32 = arith.constant 0 : i32
    %c0_i32_0 = arith.constant 0 : i32
    %c0_i32_1 = arith.constant 0 : i32
    return %arg1, %c0_i32, %c0_i32_0 : i32, i32, i32
  }
  func.func @transform_7(%arg0: i32, %arg1: i32) -> (i32, i32, i32) {
    %c0_i32 = arith.constant 0 : i32
    %c0_i32_0 = arith.constant 0 : i32
    %c0_i32_1 = arith.constant 0 : i32
    return %arg1, %c0_i32, %c0_i32_0 : i32, i32, i32
  }
  func.func @transform_8(%arg0: i32, %arg1: i32) -> (i32, i32, i32) {
    %c0_i32 = arith.constant 0 : i32
    %c0_i32_0 = arith.constant 0 : i32
    %c0_i32_1 = arith.constant 0 : i32
    return %arg1, %c0_i32, %c0_i32_0 : i32, i32, i32
  }
  func.func @transform_9(%arg0: i32, %arg1: i32) -> (i32, i32, i32) {
    %c0_i32 = arith.constant 0 : i32
    %c0_i32_0 = arith.constant 0 : i32
    %c0_i32_1 = arith.constant 0 : i32
    return %arg1, %c0_i32, %c0_i32_0 : i32, i32, i32
  }
  func.func @transform_10(%arg0: i32, %arg1: i32) -> (i32, i32, i32) {
    %c0_i32 = arith.constant 0 : i32
    %c0_i32_0 = arith.constant 0 : i32
    %c0_i32_1 = arith.constant 0 : i32
    return %arg1, %c0_i32, %c0_i32_0 : i32, i32, i32
  }
  func.func @transform_11(%arg0: i32, %arg1: i32) -> (i32, i32, i32) {
    %c0_i32 = arith.constant 0 : i32
    %c0_i32_0 = arith.constant 0 : i32
    %c0_i32_1 = arith.constant 0 : i32
    return %arg1, %c0_i32, %c0_i32_0 : i32, i32, i32
  }
  func.func @transform_12(%arg0: i32, %arg1: i32) -> (i32, i32, i32) {
    %c0_i32 = arith.constant 0 : i32
    %c0_i32_0 = arith.constant 0 : i32
    %c0_i32_1 = arith.constant 0 : i32
    return %arg1, %c0_i32, %c0_i32_0 : i32, i32, i32
  }
  func.func @transform_13(%arg0: i32, %arg1: i32) -> (i32, i32, i32) {
    %c0_i32 = arith.constant 0 : i32
    %c0_i32_0 = arith.constant 0 : i32
    %c0_i32_1 = arith.constant 0 : i32
    return %arg0, %c0_i32, %c0_i32_0 : i32, i32, i32
  }
  func.func @transform_14(%arg0: i32, %arg1: i32) -> (i32, i32, i32) {
    %c0_i32 = arith.constant 0 : i32
    %c0_i32_0 = arith.constant 0 : i32
    %c0_i32_1 = arith.constant 0 : i32
    return %arg0, %c0_i32, %c0_i32_0 : i32, i32, i32
  }
}

module attributes {stable_mosaic.version = 11 : i64} {
  func.func @_vision_post_kernel(%arg0: i32, %arg1: memref<1x17x64xf32, #tpu.memory_space<vmem>>, %arg2: memref<1x64xf32, #tpu.memory_space<vmem>>, %arg3: memref<1x64xf32, #tpu.memory_space<vmem>>, %arg4: memref<64x64xbf16, #tpu.memory_space<vmem>>, %arg5: memref<1x17x64xf32, #tpu.memory_space<vmem>>, %arg6: memref<1x17x64xf32, #tpu.memory_space<vmem>>) attributes {dimension_semantics = [#tpu.dimension_semantics<parallel>], iteration_bounds = array<i64: 2>, scalar_prefetch = 0 : i64, scratch_operands = 0 : i64, tpu.core_type = #tpu.core_type<tc>, window_params = [{transform_indices = @transform_0, window_bounds = array<i64: 1, 17, 64>}, {pipeline_mode = #tpu.pipeline_mode<synchronous>, transform_indices = @transform_1, window_bounds = array<i64: 1, 64>}, {pipeline_mode = #tpu.pipeline_mode<synchronous>, transform_indices = @transform_2, window_bounds = array<i64: 1, 64>}, {pipeline_mode = #tpu.pipeline_mode<synchronous>, transform_indices = @transform_3, window_bounds = array<i64: 64, 64>}, {transform_indices = @transform_4, window_bounds = array<i64: 1, 17, 64>}, {transform_indices = @transform_5, window_bounds = array<i64: 1, 17, 64>}]} {
    %c0 = arith.constant 0 : index
    %c0_0 = arith.constant 0 : index
    %c0_1 = arith.constant 0 : index
    %0 = vector.load %arg1[%c0, %c0_0, %c0_1] : memref<1x17x64xf32, #tpu.memory_space<vmem>>, vector<1x17x64xf32>
    %1 = vector.shape_cast %0 : vector<1x17x64xf32> to vector<17x64xf32>
    %c0_2 = arith.constant 0 : index
    %c0_3 = arith.constant 0 : index
    %2 = vector.load %arg2[%c0_2, %c0_3] : memref<1x64xf32, #tpu.memory_space<vmem>>, vector<1x64xf32>
    %c0_4 = arith.constant 0 : index
    %c0_5 = arith.constant 0 : index
    %3 = vector.load %arg3[%c0_4, %c0_5] : memref<1x64xf32, #tpu.memory_space<vmem>>, vector<1x64xf32>
    %cst = arith.constant dense<0.000000e+00> : vector<17xf32>
    %4 = vector.multi_reduction <add>, %1, %cst [1] : vector<17x64xf32> to vector<17xf32>
    %5 = vector.shape_cast %4 : vector<17xf32> to vector<17x1xf32>
    %cst_6 = arith.constant 6.400000e+01 : f32
    %6 = vector.broadcast %cst_6 : f32 to vector<17x1xf32>
    %7 = arith.divf %5, %6 : vector<17x1xf32>
    %8 = vector.broadcast %7 : vector<17x1xf32> to vector<17x64xf32>
    %9 = arith.subf %1, %8 : vector<17x64xf32>
    %10 = arith.mulf %9, %9 : vector<17x64xf32>
    %cst_7 = arith.constant dense<0.000000e+00> : vector<17xf32>
    %11 = vector.multi_reduction <add>, %10, %cst_7 [1] : vector<17x64xf32> to vector<17xf32>
    %12 = vector.shape_cast %11 : vector<17xf32> to vector<17x1xf32>
    %cst_8 = arith.constant 6.400000e+01 : f32
    %13 = vector.broadcast %cst_8 : f32 to vector<17x1xf32>
    %14 = arith.divf %12, %13 : vector<17x1xf32>
    %cst_9 = arith.constant 9.99999974E-6 : f32
    %15 = vector.broadcast %cst_9 : f32 to vector<17x1xf32>
    %16 = arith.addf %14, %15 : vector<17x1xf32>
    %17 = math.rsqrt %16 : vector<17x1xf32>
    %18 = vector.broadcast %17 : vector<17x1xf32> to vector<17x64xf32>
    %19 = arith.mulf %9, %18 : vector<17x64xf32>
    %20 = vector.broadcast %2 : vector<1x64xf32> to vector<17x64xf32>
    %21 = arith.mulf %19, %20 : vector<17x64xf32>
    %22 = vector.broadcast %3 : vector<1x64xf32> to vector<17x64xf32>
    %23 = arith.addf %21, %22 : vector<17x64xf32>
    %c0_10 = arith.constant 0 : index
    %c0_11 = arith.constant 0 : index
    %c0_12 = arith.constant 0 : index
    %24 = vector.load %arg5[%c0_10, %c0_11, %c0_12] : memref<1x17x64xf32, #tpu.memory_space<vmem>>, vector<1x17x64xf32>
    %25 = vector.shape_cast %24 : vector<1x17x64xf32> to vector<17x64xf32>
    %26 = vector.shape_cast %23 : vector<17x64xf32> to vector<1x17x64xf32>
    tpu.vector_store %arg5[%c0_10, %c0_11, %c0_12], %26 {strides = array<i32>} : memref<1x17x64xf32, #tpu.memory_space<vmem>>, vector<1x17x64xf32>,
    %c0_13 = arith.constant 0 : index
    %c0_14 = arith.constant 0 : index
    %27 = vector.load %arg4[%c0_13, %c0_14] : memref<64x64xbf16, #tpu.memory_space<vmem>>, vector<64x64xbf16>
    %28 = arith.truncf %23 : vector<17x64xf32> to vector<17x64xbf16>
    %cst_15 = arith.constant dense<0.000000e+00> : vector<17x64xf32>
    %29 = tpu.matmul %28, %27, %cst_15 {dimension_numbers = #tpu.dot_dimension_numbers<[1], [0], [0], [1], [0, 0, 1, 1], [], []>} : vector<17x64xbf16>, vector<64x64xbf16>, vector<17x64xf32> -> vector<17x64xf32>
    %c0_16 = arith.constant 0 : index
    %c0_17 = arith.constant 0 : index
    %c0_18 = arith.constant 0 : index
    %30 = vector.load %arg6[%c0_16, %c0_17, %c0_18] : memref<1x17x64xf32, #tpu.memory_space<vmem>>, vector<1x17x64xf32>
    %31 = vector.shape_cast %30 : vector<1x17x64xf32> to vector<17x64xf32>
    %32 = vector.shape_cast %29 : vector<17x64xf32> to vector<1x17x64xf32>
    tpu.vector_store %arg6[%c0_16, %c0_17, %c0_18], %32 {strides = array<i32>} : memref<1x17x64xf32, #tpu.memory_space<vmem>>, vector<1x17x64xf32>,
    return
  }
  func.func @transform_0(%arg0: i32) -> (i32, i32, i32) {
    %c0_i32 = arith.constant 0 : i32
    %c0_i32_0 = arith.constant 0 : i32
    %c0_i32_1 = arith.constant 0 : i32
    return %arg0, %c0_i32, %c0_i32_0 : i32, i32, i32
  }
  func.func @transform_1(%arg0: i32) -> (i32, i32) {
    %c0_i32 = arith.constant 0 : i32
    %c0_i32_0 = arith.constant 0 : i32
    %c0_i32_1 = arith.constant 0 : i32
    return %c0_i32, %c0_i32_0 : i32, i32
  }
  func.func @transform_2(%arg0: i32) -> (i32, i32) {
    %c0_i32 = arith.constant 0 : i32
    %c0_i32_0 = arith.constant 0 : i32
    %c0_i32_1 = arith.constant 0 : i32
    return %c0_i32, %c0_i32_0 : i32, i32
  }
  func.func @transform_3(%arg0: i32) -> (i32, i32) {
    %c0_i32 = arith.constant 0 : i32
    %c0_i32_0 = arith.constant 0 : i32
    %c0_i32_1 = arith.constant 0 : i32
    return %c0_i32, %c0_i32_0 : i32, i32
  }
  func.func @transform_4(%arg0: i32) -> (i32, i32, i32) {
    %c0_i32 = arith.constant 0 : i32
    %c0_i32_0 = arith.constant 0 : i32
    %c0_i32_1 = arith.constant 0 : i32
    return %arg0, %c0_i32, %c0_i32_0 : i32, i32, i32
  }
  func.func @transform_5(%arg0: i32) -> (i32, i32, i32) {
    %c0_i32 = arith.constant 0 : i32
    %c0_i32_0 = arith.constant 0 : i32
    %c0_i32_1 = arith.constant 0 : i32
    return %arg0, %c0_i32, %c0_i32_0 : i32, i32, i32
  }
}

module attributes {stable_mosaic.version = 11 : i64} {
  func.func @kernel(%arg0: i32, %arg1: i32, %arg2: memref<1x8x32xf32, #tpu.memory_space<vmem>>, %arg3: memref<1x1x32xf32, #tpu.memory_space<vmem>>, %arg4: memref<1x1x32xf32, #tpu.memory_space<vmem>>, %arg5: memref<1x3x2x32x16xbf16, #tpu.memory_space<vmem>>, %arg6: memref<1x3x2x1x16xf32, #tpu.memory_space<vmem>>, %arg7: memref<1x2x16x32xbf16, #tpu.memory_space<vmem>>, %arg8: memref<1x1x32xf32, #tpu.memory_space<vmem>>, %arg9: memref<1x1x32xf32, #tpu.memory_space<vmem>>, %arg10: memref<1x1x32xf32, #tpu.memory_space<vmem>>, %arg11: memref<1x32x128xbf16, #tpu.memory_space<vmem>>, %arg12: memref<1x1x128xf32, #tpu.memory_space<vmem>>, %arg13: memref<1x128x32xbf16, #tpu.memory_space<vmem>>, %arg14: memref<1x1x32xf32, #tpu.memory_space<vmem>>, %arg15: memref<1x8x32xf32, #tpu.memory_space<vmem>>) attributes {dimension_semantics = [#tpu.dimension_semantics<parallel>, #tpu.dimension_semantics<arbitrary>], iteration_bounds = array<i64: 2, 2>, scalar_prefetch = 0 : i64, scratch_operands = 0 : i64, tpu.core_type = #tpu.core_type<tc>, window_params = [{transform_indices = @transform_0, window_bounds = array<i64: 1, 8, 32>}, {transform_indices = @transform_1, window_bounds = array<i64: 1, 1, 32>}, {transform_indices = @transform_2, window_bounds = array<i64: 1, 1, 32>}, {transform_indices = @transform_3, window_bounds = array<i64: 1, 3, 2, 32, 16>}, {transform_indices = @transform_4, window_bounds = array<i64: 1, 3, 2, 1, 16>}, {transform_indices = @transform_5, window_bounds = array<i64: 1, 2, 16, 32>}, {transform_indices = @transform_6, window_bounds = array<i64: 1, 1, 32>}, {transform_indices = @transform_7, window_bounds = array<i64: 1, 1, 32>}, {transform_indices = @transform_8, window_bounds = array<i64: 1, 1, 32>}, {transform_indices = @transform_9, window_bounds = array<i64: 1, 32, 128>}, {transform_indices = @transform_10, window_bounds = array<i64: 1, 1, 128>}, {transform_indices = @transform_11, window_bounds = array<i64: 1, 128, 32>}, {transform_indices = @transform_12, window_bounds = array<i64: 1, 1, 32>}, {transform_indices = @transform_13, window_bounds = array<i64: 1, 8, 32>}]} {
    %c0_i32 = arith.constant 0 : i32
    %0 = arith.cmpi eq, %arg1, %c0_i32 : i32
    %1 = arith.extui %0 : i1 to i32
    %c0_i32_0 = arith.constant 0 : i32
    %2 = arith.cmpi ne, %1, %c0_i32_0 : i32
    scf.if %2 {
      %c0_132 = arith.constant 0 : index
      %c0_133 = arith.constant 0 : index
      %c0_134 = arith.constant 0 : index
      %181 = vector.load %arg2[%c0_132, %c0_133, %c0_134] : memref<1x8x32xf32, #tpu.memory_space<vmem>>, vector<1x8x32xf32>
      %182 = vector.shape_cast %181 : vector<1x8x32xf32> to vector<8x32xf32>
      %c0_135 = arith.constant 0 : index
      %c0_136 = arith.constant 0 : index
      %c0_137 = arith.constant 0 : index
      %183 = vector.load %arg15[%c0_135, %c0_136, %c0_137] : memref<1x8x32xf32, #tpu.memory_space<vmem>>, vector<1x8x32xf32>
      %184 = vector.shape_cast %183 : vector<1x8x32xf32> to vector<8x32xf32>
      %185 = vector.shape_cast %182 : vector<8x32xf32> to vector<1x8x32xf32>
      tpu.vector_store %arg15[%c0_135, %c0_136, %c0_137], %185 {strides = array<i32>} : memref<1x8x32xf32, #tpu.memory_space<vmem>>, vector<1x8x32xf32>,
    } else {
    }
    %c0 = arith.constant 0 : index
    %c0_1 = arith.constant 0 : index
    %c0_2 = arith.constant 0 : index
    %3 = vector.load %arg15[%c0, %c0_1, %c0_2] : memref<1x8x32xf32, #tpu.memory_space<vmem>>, vector<1x8x32xf32>
    %4 = vector.shape_cast %3 : vector<1x8x32xf32> to vector<8x32xf32>
    %c0_3 = arith.constant 0 : index
    %c0_4 = arith.constant 0 : index
    %c0_5 = arith.constant 0 : index
    %5 = vector.load %arg3[%c0_3, %c0_4, %c0_5] : memref<1x1x32xf32, #tpu.memory_space<vmem>>, vector<1x1x32xf32>
    %6 = vector.shape_cast %5 : vector<1x1x32xf32> to vector<1x32xf32>
    %c0_6 = arith.constant 0 : index
    %c0_7 = arith.constant 0 : index
    %c0_8 = arith.constant 0 : index
    %7 = vector.load %arg4[%c0_6, %c0_7, %c0_8] : memref<1x1x32xf32, #tpu.memory_space<vmem>>, vector<1x1x32xf32>
    %8 = vector.shape_cast %7 : vector<1x1x32xf32> to vector<1x32xf32>
    %cst = arith.constant dense<0.000000e+00> : vector<8xf32>
    %9 = vector.multi_reduction <add>, %4, %cst [1] : vector<8x32xf32> to vector<8xf32>
    %10 = vector.shape_cast %9 : vector<8xf32> to vector<8x1xf32>
    %cst_9 = arith.constant 3.200000e+01 : f32
    %11 = vector.broadcast %cst_9 : f32 to vector<8x1xf32>
    %12 = arith.divf %10, %11 : vector<8x1xf32>
    %13 = vector.broadcast %12 : vector<8x1xf32> to vector<8x32xf32>
    %14 = arith.subf %4, %13 : vector<8x32xf32>
    %15 = arith.mulf %14, %14 : vector<8x32xf32>
    %cst_10 = arith.constant dense<0.000000e+00> : vector<8xf32>
    %16 = vector.multi_reduction <add>, %15, %cst_10 [1] : vector<8x32xf32> to vector<8xf32>
    %17 = vector.shape_cast %16 : vector<8xf32> to vector<8x1xf32>
    %cst_11 = arith.constant 3.200000e+01 : f32
    %18 = vector.broadcast %cst_11 : f32 to vector<8x1xf32>
    %19 = arith.divf %17, %18 : vector<8x1xf32>
    %cst_12 = arith.constant 9.99999974E-6 : f32
    %20 = vector.broadcast %cst_12 : f32 to vector<8x1xf32>
    %21 = arith.addf %19, %20 : vector<8x1xf32>
    %22 = math.rsqrt %21 : vector<8x1xf32>
    %23 = vector.broadcast %22 : vector<8x1xf32> to vector<8x32xf32>
    %24 = arith.mulf %14, %23 : vector<8x32xf32>
    %25 = vector.broadcast %6 : vector<1x32xf32> to vector<8x32xf32>
    %26 = arith.mulf %24, %25 : vector<8x32xf32>
    %27 = vector.broadcast %8 : vector<1x32xf32> to vector<8x32xf32>
    %28 = arith.addf %26, %27 : vector<8x32xf32>
    %c0_13 = arith.constant 0 : index
    %c0_14 = arith.constant 0 : index
    %c0_15 = arith.constant 0 : index
    %c0_16 = arith.constant 0 : index
    %c0_17 = arith.constant 0 : index
    %29 = vector.load %arg5[%c0_13, %c0_14, %c0_15, %c0_16, %c0_17] : memref<1x3x2x32x16xbf16, #tpu.memory_space<vmem>>, vector<1x1x1x32x16xbf16>
    %30 = vector.shape_cast %29 : vector<1x1x1x32x16xbf16> to vector<32x16xbf16>
    %31 = arith.truncf %28 : vector<8x32xf32> to vector<8x32xbf16>
    %cst_18 = arith.constant dense<0.000000e+00> : vector<8x16xf32>
    %32 = tpu.matmul %31, %30, %cst_18 {dimension_numbers = #tpu.dot_dimension_numbers<[1], [0], [0], [1], [0, 0, 1, 1], [], []>} : vector<8x32xbf16>, vector<32x16xbf16>, vector<8x16xf32> -> vector<8x16xf32>
    %c0_19 = arith.constant 0 : index
    %c0_20 = arith.constant 0 : index
    %c0_21 = arith.constant 0 : index
    %c0_22 = arith.constant 0 : index
    %c0_23 = arith.constant 0 : index
    %33 = vector.load %arg6[%c0_19, %c0_20, %c0_21, %c0_22, %c0_23] : memref<1x3x2x1x16xf32, #tpu.memory_space<vmem>>, vector<1x1x1x1x16xf32>
    %34 = vector.shape_cast %33 : vector<1x1x1x1x16xf32> to vector<1x16xf32>
    %35 = vector.broadcast %34 : vector<1x16xf32> to vector<8x16xf32>
    %36 = arith.addf %32, %35 : vector<8x16xf32>
    %c0_24 = arith.constant 0 : index
    %c1 = arith.constant 1 : index
    %c0_25 = arith.constant 0 : index
    %c0_26 = arith.constant 0 : index
    %c0_27 = arith.constant 0 : index
    %37 = vector.load %arg5[%c0_24, %c1, %c0_25, %c0_26, %c0_27] : memref<1x3x2x32x16xbf16, #tpu.memory_space<vmem>>, vector<1x1x1x32x16xbf16>
    %38 = vector.shape_cast %37 : vector<1x1x1x32x16xbf16> to vector<32x16xbf16>
    %39 = arith.truncf %28 : vector<8x32xf32> to vector<8x32xbf16>
    %cst_28 = arith.constant dense<0.000000e+00> : vector<8x16xf32>
    %40 = tpu.matmul %39, %38, %cst_28 {dimension_numbers = #tpu.dot_dimension_numbers<[1], [0], [0], [1], [0, 0, 1, 1], [], []>} : vector<8x32xbf16>, vector<32x16xbf16>, vector<8x16xf32> -> vector<8x16xf32>
    %c0_29 = arith.constant 0 : index
    %c1_30 = arith.constant 1 : index
    %c0_31 = arith.constant 0 : index
    %c0_32 = arith.constant 0 : index
    %c0_33 = arith.constant 0 : index
    %41 = vector.load %arg6[%c0_29, %c1_30, %c0_31, %c0_32, %c0_33] : memref<1x3x2x1x16xf32, #tpu.memory_space<vmem>>, vector<1x1x1x1x16xf32>
    %42 = vector.shape_cast %41 : vector<1x1x1x1x16xf32> to vector<1x16xf32>
    %43 = vector.broadcast %42 : vector<1x16xf32> to vector<8x16xf32>
    %44 = arith.addf %40, %43 : vector<8x16xf32>
    %c0_34 = arith.constant 0 : index
    %c2 = arith.constant 2 : index
    %c0_35 = arith.constant 0 : index
    %c0_36 = arith.constant 0 : index
    %c0_37 = arith.constant 0 : index
    %45 = vector.load %arg5[%c0_34, %c2, %c0_35, %c0_36, %c0_37] : memref<1x3x2x32x16xbf16, #tpu.memory_space<vmem>>, vector<1x1x1x32x16xbf16>
    %46 = vector.shape_cast %45 : vector<1x1x1x32x16xbf16> to vector<32x16xbf16>
    %47 = arith.truncf %28 : vector<8x32xf32> to vector<8x32xbf16>
    %cst_38 = arith.constant dense<0.000000e+00> : vector<8x16xf32>
    %48 = tpu.matmul %47, %46, %cst_38 {dimension_numbers = #tpu.dot_dimension_numbers<[1], [0], [0], [1], [0, 0, 1, 1], [], []>} : vector<8x32xbf16>, vector<32x16xbf16>, vector<8x16xf32> -> vector<8x16xf32>
    %c0_39 = arith.constant 0 : index
    %c2_40 = arith.constant 2 : index
    %c0_41 = arith.constant 0 : index
    %c0_42 = arith.constant 0 : index
    %c0_43 = arith.constant 0 : index
    %49 = vector.load %arg6[%c0_39, %c2_40, %c0_41, %c0_42, %c0_43] : memref<1x3x2x1x16xf32, #tpu.memory_space<vmem>>, vector<1x1x1x1x16xf32>
    %50 = vector.shape_cast %49 : vector<1x1x1x1x16xf32> to vector<1x16xf32>
    %51 = vector.broadcast %50 : vector<1x16xf32> to vector<8x16xf32>
    %52 = arith.addf %48, %51 : vector<8x16xf32>
    %cst_44 = arith.constant dense<0.000000e+00> : vector<8x8xf32>
    %53 = tpu.matmul %36, %44, %cst_44 {dimension_numbers = #tpu.dot_dimension_numbers<[1], [1], [0], [0], [0, 0, 1, 0], [], []>} : vector<8x16xf32>, vector<8x16xf32>, vector<8x8xf32> -> vector<8x8xf32>
    %cst_45 = arith.constant 2.500000e-01 : f32
    %54 = vector.broadcast %cst_45 : f32 to vector<8x8xf32>
    %55 = arith.mulf %53, %54 : vector<8x8xf32>
    %56 = tpu.iota {dimensions = array<i32: 0>} : vector<8x8xi32>
    %57 = tpu.iota {dimensions = array<i32: 1>} : vector<8x8xi32>
    %58 = arith.cmpi sgt, %57, %56 : vector<8x8xi32>
    %cst_46 = arith.constant -1.000000e+30 : f32
    %59 = vector.broadcast %cst_46 : f32 to vector<8x8xf32>
    %60 = arith.select %58, %59, %55 : vector<8x8xi1>, vector<8x8xf32>
    %cst_47 = arith.constant dense<0xFF800000> : vector<8xf32>
    %61 = vector.multi_reduction <maximumf>, %60, %cst_47 [1] : vector<8x8xf32> to vector<8xf32>
    %62 = vector.shape_cast %61 : vector<8xf32> to vector<8x1xf32>
    %63 = vector.broadcast %62 : vector<8x1xf32> to vector<8x8xf32>
    %64 = arith.subf %60, %63 : vector<8x8xf32>
    %65 = math.exp %64 : vector<8x8xf32>
    %cst_48 = arith.constant dense<0.000000e+00> : vector<8xf32>
    %66 = vector.multi_reduction <add>, %65, %cst_48 [1] : vector<8x8xf32> to vector<8xf32>
    %67 = vector.shape_cast %66 : vector<8xf32> to vector<8x1xf32>
    %68 = tpu.reciprocal %67 {approx = true} : vector<8x1xf32> -> vector<8x1xf32>
    %69 = vector.broadcast %68 : vector<8x1xf32> to vector<8x8xf32>
    %70 = arith.mulf %65, %69 : vector<8x8xf32>
    %cst_49 = arith.constant dense<0.000000e+00> : vector<8x16xf32>
    %71 = tpu.matmul %70, %52, %cst_49 {dimension_numbers = #tpu.dot_dimension_numbers<[1], [0], [0], [1], [0, 0, 1, 1], [], []>} : vector<8x8xf32>, vector<8x16xf32>, vector<8x16xf32> -> vector<8x16xf32>
    %c0_50 = arith.constant 0 : index
    %c0_51 = arith.constant 0 : index
    %c0_52 = arith.constant 0 : index
    %c0_53 = arith.constant 0 : index
    %72 = vector.load %arg7[%c0_50, %c0_51, %c0_52, %c0_53] : memref<1x2x16x32xbf16, #tpu.memory_space<vmem>>, vector<1x1x16x32xbf16>
    %73 = vector.shape_cast %72 : vector<1x1x16x32xbf16> to vector<16x32xbf16>
    %74 = arith.truncf %71 : vector<8x16xf32> to vector<8x16xbf16>
    %cst_54 = arith.constant dense<0.000000e+00> : vector<8x32xf32>
    %75 = tpu.matmul %74, %73, %cst_54 {dimension_numbers = #tpu.dot_dimension_numbers<[1], [0], [0], [1], [0, 0, 1, 1], [], []>} : vector<8x16xbf16>, vector<16x32xbf16>, vector<8x32xf32> -> vector<8x32xf32>
    %c0_55 = arith.constant 0 : index
    %c0_56 = arith.constant 0 : index
    %c1_57 = arith.constant 1 : index
    %c0_58 = arith.constant 0 : index
    %c0_59 = arith.constant 0 : index
    %76 = vector.load %arg5[%c0_55, %c0_56, %c1_57, %c0_58, %c0_59] : memref<1x3x2x32x16xbf16, #tpu.memory_space<vmem>>, vector<1x1x1x32x16xbf16>
    %77 = vector.shape_cast %76 : vector<1x1x1x32x16xbf16> to vector<32x16xbf16>
    %78 = arith.truncf %28 : vector<8x32xf32> to vector<8x32xbf16>
    %cst_60 = arith.constant dense<0.000000e+00> : vector<8x16xf32>
    %79 = tpu.matmul %78, %77, %cst_60 {dimension_numbers = #tpu.dot_dimension_numbers<[1], [0], [0], [1], [0, 0, 1, 1], [], []>} : vector<8x32xbf16>, vector<32x16xbf16>, vector<8x16xf32> -> vector<8x16xf32>
    %c0_61 = arith.constant 0 : index
    %c0_62 = arith.constant 0 : index
    %c1_63 = arith.constant 1 : index
    %c0_64 = arith.constant 0 : index
    %c0_65 = arith.constant 0 : index
    %80 = vector.load %arg6[%c0_61, %c0_62, %c1_63, %c0_64, %c0_65] : memref<1x3x2x1x16xf32, #tpu.memory_space<vmem>>, vector<1x1x1x1x16xf32>
    %81 = vector.shape_cast %80 : vector<1x1x1x1x16xf32> to vector<1x16xf32>
    %82 = vector.broadcast %81 : vector<1x16xf32> to vector<8x16xf32>
    %83 = arith.addf %79, %82 : vector<8x16xf32>
    %c0_66 = arith.constant 0 : index
    %c1_67 = arith.constant 1 : index
    %c1_68 = arith.constant 1 : index
    %c0_69 = arith.constant 0 : index
    %c0_70 = arith.constant 0 : index
    %84 = vector.load %arg5[%c0_66, %c1_67, %c1_68, %c0_69, %c0_70] : memref<1x3x2x32x16xbf16, #tpu.memory_space<vmem>>, vector<1x1x1x32x16xbf16>
    %85 = vector.shape_cast %84 : vector<1x1x1x32x16xbf16> to vector<32x16xbf16>
    %86 = arith.truncf %28 : vector<8x32xf32> to vector<8x32xbf16>
    %cst_71 = arith.constant dense<0.000000e+00> : vector<8x16xf32>
    %87 = tpu.matmul %86, %85, %cst_71 {dimension_numbers = #tpu.dot_dimension_numbers<[1], [0], [0], [1], [0, 0, 1, 1], [], []>} : vector<8x32xbf16>, vector<32x16xbf16>, vector<8x16xf32> -> vector<8x16xf32>
    %c0_72 = arith.constant 0 : index
    %c1_73 = arith.constant 1 : index
    %c1_74 = arith.constant 1 : index
    %c0_75 = arith.constant 0 : index
    %c0_76 = arith.constant 0 : index
    %88 = vector.load %arg6[%c0_72, %c1_73, %c1_74, %c0_75, %c0_76] : memref<1x3x2x1x16xf32, #tpu.memory_space<vmem>>, vector<1x1x1x1x16xf32>
    %89 = vector.shape_cast %88 : vector<1x1x1x1x16xf32> to vector<1x16xf32>
    %90 = vector.broadcast %89 : vector<1x16xf32> to vector<8x16xf32>
    %91 = arith.addf %87, %90 : vector<8x16xf32>
    %c0_77 = arith.constant 0 : index
    %c2_78 = arith.constant 2 : index
    %c1_79 = arith.constant 1 : index
    %c0_80 = arith.constant 0 : index
    %c0_81 = arith.constant 0 : index
    %92 = vector.load %arg5[%c0_77, %c2_78, %c1_79, %c0_80, %c0_81] : memref<1x3x2x32x16xbf16, #tpu.memory_space<vmem>>, vector<1x1x1x32x16xbf16>
    %93 = vector.shape_cast %92 : vector<1x1x1x32x16xbf16> to vector<32x16xbf16>
    %94 = arith.truncf %28 : vector<8x32xf32> to vector<8x32xbf16>
    %cst_82 = arith.constant dense<0.000000e+00> : vector<8x16xf32>
    %95 = tpu.matmul %94, %93, %cst_82 {dimension_numbers = #tpu.dot_dimension_numbers<[1], [0], [0], [1], [0, 0, 1, 1], [], []>} : vector<8x32xbf16>, vector<32x16xbf16>, vector<8x16xf32> -> vector<8x16xf32>
    %c0_83 = arith.constant 0 : index
    %c2_84 = arith.constant 2 : index
    %c1_85 = arith.constant 1 : index
    %c0_86 = arith.constant 0 : index
    %c0_87 = arith.constant 0 : index
    %96 = vector.load %arg6[%c0_83, %c2_84, %c1_85, %c0_86, %c0_87] : memref<1x3x2x1x16xf32, #tpu.memory_space<vmem>>, vector<1x1x1x1x16xf32>
    %97 = vector.shape_cast %96 : vector<1x1x1x1x16xf32> to vector<1x16xf32>
    %98 = vector.broadcast %97 : vector<1x16xf32> to vector<8x16xf32>
    %99 = arith.addf %95, %98 : vector<8x16xf32>
    %cst_88 = arith.constant dense<0.000000e+00> : vector<8x8xf32>
    %100 = tpu.matmul %83, %91, %cst_88 {dimension_numbers = #tpu.dot_dimension_numbers<[1], [1], [0], [0], [0, 0, 1, 0], [], []>} : vector<8x16xf32>, vector<8x16xf32>, vector<8x8xf32> -> vector<8x8xf32>
    %cst_89 = arith.constant 2.500000e-01 : f32
    %101 = vector.broadcast %cst_89 : f32 to vector<8x8xf32>
    %102 = arith.mulf %100, %101 : vector<8x8xf32>
    %103 = tpu.iota {dimensions = array<i32: 0>} : vector<8x8xi32>
    %104 = tpu.iota {dimensions = array<i32: 1>} : vector<8x8xi32>
    %105 = arith.cmpi sgt, %104, %103 : vector<8x8xi32>
    %cst_90 = arith.constant -1.000000e+30 : f32
    %106 = vector.broadcast %cst_90 : f32 to vector<8x8xf32>
    %107 = arith.select %105, %106, %102 : vector<8x8xi1>, vector<8x8xf32>
    %cst_91 = arith.constant dense<0xFF800000> : vector<8xf32>
    %108 = vector.multi_reduction <maximumf>, %107, %cst_91 [1] : vector<8x8xf32> to vector<8xf32>
    %109 = vector.shape_cast %108 : vector<8xf32> to vector<8x1xf32>
    %110 = vector.broadcast %109 : vector<8x1xf32> to vector<8x8xf32>
    %111 = arith.subf %107, %110 : vector<8x8xf32>
    %112 = math.exp %111 : vector<8x8xf32>
    %cst_92 = arith.constant dense<0.000000e+00> : vector<8xf32>
    %113 = vector.multi_reduction <add>, %112, %cst_92 [1] : vector<8x8xf32> to vector<8xf32>
    %114 = vector.shape_cast %113 : vector<8xf32> to vector<8x1xf32>
    %115 = tpu.reciprocal %114 {approx = true} : vector<8x1xf32> -> vector<8x1xf32>
    %116 = vector.broadcast %115 : vector<8x1xf32> to vector<8x8xf32>
    %117 = arith.mulf %112, %116 : vector<8x8xf32>
    %cst_93 = arith.constant dense<0.000000e+00> : vector<8x16xf32>
    %118 = tpu.matmul %117, %99, %cst_93 {dimension_numbers = #tpu.dot_dimension_numbers<[1], [0], [0], [1], [0, 0, 1, 1], [], []>} : vector<8x8xf32>, vector<8x16xf32>, vector<8x16xf32> -> vector<8x16xf32>
    %c0_94 = arith.constant 0 : index
    %c1_95 = arith.constant 1 : index
    %c0_96 = arith.constant 0 : index
    %c0_97 = arith.constant 0 : index
    %119 = vector.load %arg7[%c0_94, %c1_95, %c0_96, %c0_97] : memref<1x2x16x32xbf16, #tpu.memory_space<vmem>>, vector<1x1x16x32xbf16>
    %120 = vector.shape_cast %119 : vector<1x1x16x32xbf16> to vector<16x32xbf16>
    %121 = arith.truncf %118 : vector<8x16xf32> to vector<8x16xbf16>
    %cst_98 = arith.constant dense<0.000000e+00> : vector<8x32xf32>
    %122 = tpu.matmul %121, %120, %cst_98 {dimension_numbers = #tpu.dot_dimension_numbers<[1], [0], [0], [1], [0, 0, 1, 1], [], []>} : vector<8x16xbf16>, vector<16x32xbf16>, vector<8x32xf32> -> vector<8x32xf32>
    %123 = arith.addf %75, %122 : vector<8x32xf32>
    %124 = arith.addf %4, %123 : vector<8x32xf32>
    %c0_99 = arith.constant 0 : index
    %c0_100 = arith.constant 0 : index
    %c0_101 = arith.constant 0 : index
    %125 = vector.load %arg8[%c0_99, %c0_100, %c0_101] : memref<1x1x32xf32, #tpu.memory_space<vmem>>, vector<1x1x32xf32>
    %126 = vector.shape_cast %125 : vector<1x1x32xf32> to vector<1x32xf32>
    %127 = vector.broadcast %126 : vector<1x32xf32> to vector<8x32xf32>
    %128 = arith.addf %124, %127 : vector<8x32xf32>
    %c0_102 = arith.constant 0 : index
    %c0_103 = arith.constant 0 : index
    %c0_104 = arith.constant 0 : index
    %129 = vector.load %arg9[%c0_102, %c0_103, %c0_104] : memref<1x1x32xf32, #tpu.memory_space<vmem>>, vector<1x1x32xf32>
    %130 = vector.shape_cast %129 : vector<1x1x32xf32> to vector<1x32xf32>
    %c0_105 = arith.constant 0 : index
    %c0_106 = arith.constant 0 : index
    %c0_107 = arith.constant 0 : index
    %131 = vector.load %arg10[%c0_105, %c0_106, %c0_107] : memref<1x1x32xf32, #tpu.memory_space<vmem>>, vector<1x1x32xf32>
    %132 = vector.shape_cast %131 : vector<1x1x32xf32> to vector<1x32xf32>
    %cst_108 = arith.constant dense<0.000000e+00> : vector<8xf32>
    %133 = vector.multi_reduction <add>, %128, %cst_108 [1] : vector<8x32xf32> to vector<8xf32>
    %134 = vector.shape_cast %133 : vector<8xf32> to vector<8x1xf32>
    %cst_109 = arith.constant 3.200000e+01 : f32
    %135 = vector.broadcast %cst_109 : f32 to vector<8x1xf32>
    %136 = arith.divf %134, %135 : vector<8x1xf32>
    %137 = vector.broadcast %136 : vector<8x1xf32> to vector<8x32xf32>
    %138 = arith.subf %128, %137 : vector<8x32xf32>
    %139 = arith.mulf %138, %138 : vector<8x32xf32>
    %cst_110 = arith.constant dense<0.000000e+00> : vector<8xf32>
    %140 = vector.multi_reduction <add>, %139, %cst_110 [1] : vector<8x32xf32> to vector<8xf32>
    %141 = vector.shape_cast %140 : vector<8xf32> to vector<8x1xf32>
    %cst_111 = arith.constant 3.200000e+01 : f32
    %142 = vector.broadcast %cst_111 : f32 to vector<8x1xf32>
    %143 = arith.divf %141, %142 : vector<8x1xf32>
    %cst_112 = arith.constant 9.99999974E-6 : f32
    %144 = vector.broadcast %cst_112 : f32 to vector<8x1xf32>
    %145 = arith.addf %143, %144 : vector<8x1xf32>
    %146 = math.rsqrt %145 : vector<8x1xf32>
    %147 = vector.broadcast %146 : vector<8x1xf32> to vector<8x32xf32>
    %148 = arith.mulf %138, %147 : vector<8x32xf32>
    %149 = vector.broadcast %130 : vector<1x32xf32> to vector<8x32xf32>
    %150 = arith.mulf %148, %149 : vector<8x32xf32>
    %151 = vector.broadcast %132 : vector<1x32xf32> to vector<8x32xf32>
    %152 = arith.addf %150, %151 : vector<8x32xf32>
    %c0_113 = arith.constant 0 : index
    %c0_114 = arith.constant 0 : index
    %c0_115 = arith.constant 0 : index
    %153 = vector.load %arg11[%c0_113, %c0_114, %c0_115] : memref<1x32x128xbf16, #tpu.memory_space<vmem>>, vector<1x32x128xbf16>
    %154 = vector.shape_cast %153 : vector<1x32x128xbf16> to vector<32x128xbf16>
    %155 = arith.truncf %152 : vector<8x32xf32> to vector<8x32xbf16>
    %cst_116 = arith.constant dense<0.000000e+00> : vector<8x128xf32>
    %156 = tpu.matmul %155, %154, %cst_116 {dimension_numbers = #tpu.dot_dimension_numbers<[1], [0], [0], [1], [0, 0, 1, 1], [], []>} : vector<8x32xbf16>, vector<32x128xbf16>, vector<8x128xf32> -> vector<8x128xf32>
    %c0_117 = arith.constant 0 : index
    %c0_118 = arith.constant 0 : index
    %c0_119 = arith.constant 0 : index
    %157 = vector.load %arg12[%c0_117, %c0_118, %c0_119] : memref<1x1x128xf32, #tpu.memory_space<vmem>>, vector<1x1x128xf32>
    %158 = vector.shape_cast %157 : vector<1x1x128xf32> to vector<1x128xf32>
    %159 = vector.broadcast %158 : vector<1x128xf32> to vector<8x128xf32>
    %160 = arith.addf %156, %159 : vector<8x128xf32>
    %cst_120 = arith.constant 1.702000e+00 : f32
    %161 = vector.broadcast %cst_120 : f32 to vector<8x128xf32>
    %162 = arith.mulf %161, %160 : vector<8x128xf32>
    %163 = arith.negf %162 : vector<8x128xf32>
    %164 = math.exp %163 : vector<8x128xf32>
    %cst_121 = arith.constant 1.000000e+00 : f32
    %165 = vector.broadcast %cst_121 : f32 to vector<8x128xf32>
    %166 = arith.addf %165, %164 : vector<8x128xf32>
    %167 = arith.divf %165, %166 : vector<8x128xf32>
    %168 = arith.mulf %160, %167 : vector<8x128xf32>
    %c0_122 = arith.constant 0 : index
    %c0_123 = arith.constant 0 : index
    %c0_124 = arith.constant 0 : index
    %169 = vector.load %arg13[%c0_122, %c0_123, %c0_124] : memref<1x128x32xbf16, #tpu.memory_space<vmem>>, vector<1x128x32xbf16>
    %170 = vector.shape_cast %169 : vector<1x128x32xbf16> to vector<128x32xbf16>
    %171 = arith.truncf %168 : vector<8x128xf32> to vector<8x128xbf16>
    %cst_125 = arith.constant dense<0.000000e+00> : vector<8x32xf32>
    %172 = tpu.matmul %171, %170, %cst_125 {dimension_numbers = #tpu.dot_dimension_numbers<[1], [0], [0], [1], [0, 0, 1, 1], [], []>} : vector<8x128xbf16>, vector<128x32xbf16>, vector<8x32xf32> -> vector<8x32xf32>
    %173 = arith.addf %128, %172 : vector<8x32xf32>
    %c0_126 = arith.constant 0 : index
    %c0_127 = arith.constant 0 : index
    %c0_128 = arith.constant 0 : index
    %174 = vector.load %arg14[%c0_126, %c0_127, %c0_128] : memref<1x1x32xf32, #tpu.memory_space<vmem>>, vector<1x1x32xf32>
    %175 = vector.shape_cast %174 : vector<1x1x32xf32> to vector<1x32xf32>
    %176 = vector.broadcast %175 : vector<1x32xf32> to vector<8x32xf32>
    %177 = arith.addf %173, %176 : vector<8x32xf32>
    %c0_129 = arith.constant 0 : index
    %c0_130 = arith.constant 0 : index
    %c0_131 = arith.constant 0 : index
    %178 = vector.load %arg15[%c0_129, %c0_130, %c0_131] : memref<1x8x32xf32, #tpu.memory_space<vmem>>, vector<1x8x32xf32>
    %179 = vector.shape_cast %178 : vector<1x8x32xf32> to vector<8x32xf32>
    %180 = vector.shape_cast %177 : vector<8x32xf32> to vector<1x8x32xf32>
    tpu.vector_store %arg15[%c0_129, %c0_130, %c0_131], %180 {strides = array<i32>} : memref<1x8x32xf32, #tpu.memory_space<vmem>>, vector<1x8x32xf32>,
    return
  }
  func.func @transform_0(%arg0: i32, %arg1: i32) -> (i32, i32, i32) {
    %c0_i32 = arith.constant 0 : i32
    %c0_i32_0 = arith.constant 0 : i32
    %c0_i32_1 = arith.constant 0 : i32
    return %arg0, %c0_i32, %c0_i32_0 : i32, i32, i32
  }
  func.func @transform_1(%arg0: i32, %arg1: i32) -> (i32, i32, i32) {
    %c0_i32 = arith.constant 0 : i32
    %c0_i32_0 = arith.constant 0 : i32
    %c0_i32_1 = arith.constant 0 : i32
    return %arg1, %c0_i32, %c0_i32_0 : i32, i32, i32
  }
  func.func @transform_2(%arg0: i32, %arg1: i32) -> (i32, i32, i32) {
    %c0_i32 = arith.constant 0 : i32
    %c0_i32_0 = arith.constant 0 : i32
    %c0_i32_1 = arith.constant 0 : i32
    return %arg1, %c0_i32, %c0_i32_0 : i32, i32, i32
  }
  func.func @transform_3(%arg0: i32, %arg1: i32) -> (i32, i32, i32, i32, i32) {
    %c0_i32 = arith.constant 0 : i32
    %c0_i32_0 = arith.constant 0 : i32
    %c0_i32_1 = arith.constant 0 : i32
    %c0_i32_2 = arith.constant 0 : i32
    %c0_i32_3 = arith.constant 0 : i32
    return %arg1, %c0_i32, %c0_i32_0, %c0_i32_1, %c0_i32_2 : i32, i32, i32, i32, i32
  }
  func.func @transform_4(%arg0: i32, %arg1: i32) -> (i32, i32, i32, i32, i32) {
    %c0_i32 = arith.constant 0 : i32
    %c0_i32_0 = arith.constant 0 : i32
    %c0_i32_1 = arith.constant 0 : i32
    %c0_i32_2 = arith.constant 0 : i32
    %c0_i32_3 = arith.constant 0 : i32
    return %arg1, %c0_i32, %c0_i32_0, %c0_i32_1, %c0_i32_2 : i32, i32, i32, i32, i32
  }
  func.func @transform_5(%arg0: i32, %arg1: i32) -> (i32, i32, i32, i32) {
    %c0_i32 = arith.constant 0 : i32
    %c0_i32_0 = arith.constant 0 : i32
    %c0_i32_1 = arith.constant 0 : i32
    %c0_i32_2 = arith.constant 0 : i32
    return %arg1, %c0_i32, %c0_i32_0, %c0_i32_1 : i32, i32, i32, i32
  }
  func.func @transform_6(%arg0: i32, %arg1: i32) -> (i32, i32, i32) {
    %c0_i32 = arith.constant 0 : i32
    %c0_i32_0 = arith.constant 0 : i32
    %c0_i32_1 = arith.constant 0 : i32
    return %arg1, %c0_i32, %c0_i32_0 : i32, i32, i32
  }
  func.func @transform_7(%arg0: i32, %arg1: i32) -> (i32, i32, i32) {
    %c0_i32 = arith.constant 0 : i32
    %c0_i32_0 = arith.constant 0 : i32
    %c0_i32_1 = arith.constant 0 : i32
    return %arg1, %c0_i32, %c0_i32_0 : i32, i32, i32
  }
  func.func @transform_8(%arg0: i32, %arg1: i32) -> (i32, i32, i32) {
    %c0_i32 = arith.constant 0 : i32
    %c0_i32_0 = arith.constant 0 : i32
    %c0_i32_1 = arith.constant 0 : i32
    return %arg1, %c0_i32, %c0_i32_0 : i32, i32, i32
  }
  func.func @transform_9(%arg0: i32, %arg1: i32) -> (i32, i32, i32) {
    %c0_i32 = arith.constant 0 : i32
    %c0_i32_0 = arith.constant 0 : i32
    %c0_i32_1 = arith.constant 0 : i32
    return %arg1, %c0_i32, %c0_i32_0 : i32, i32, i32
  }
  func.func @transform_10(%arg0: i32, %arg1: i32) -> (i32, i32, i32) {
    %c0_i32 = arith.constant 0 : i32
    %c0_i32_0 = arith.constant 0 : i32
    %c0_i32_1 = arith.constant 0 : i32
    return %arg1, %c0_i32, %c0_i32_0 : i32, i32, i32
  }
  func.func @transform_11(%arg0: i32, %arg1: i32) -> (i32, i32, i32) {
    %c0_i32 = arith.constant 0 : i32
    %c0_i32_0 = arith.constant 0 : i32
    %c0_i32_1 = arith.constant 0 : i32
    return %arg1, %c0_i32, %c0_i32_0 : i32, i32, i32
  }
  func.func @transform_12(%arg0: i32, %arg1: i32) -> (i32, i32, i32) {
    %c0_i32 = arith.constant 0 : i32
    %c0_i32_0 = arith.constant 0 : i32
    %c0_i32_1 = arith.constant 0 : i32
    return %arg1, %c0_i32, %c0_i32_0 : i32, i32, i32
  }
  func.func @transform_13(%arg0: i32, %arg1: i32) -> (i32, i32, i32) {
    %c0_i32 = arith.constant 0 : i32
    %c0_i32_0 = arith.constant 0 : i32
    %c0_i32_1 = arith.constant 0 : i32
    return %arg0, %c0_i32, %c0_i32_0 : i32, i32, i32
  }
}

module attributes {stable_mosaic.version = 11 : i64} {
  func.func @_clip_head_kernel(%arg0: memref<2x64xf32, #tpu.memory_space<vmem>>, %arg1: memref<2x32xf32, #tpu.memory_space<vmem>>, %arg2: memref<1x32xf32, #tpu.memory_space<vmem>>, %arg3: memref<1x32xf32, #tpu.memory_space<vmem>>, %arg4: memref<32x64xbf16, #tpu.memory_space<vmem>>, %arg5: memref<1x1xf32, #tpu.memory_space<vmem>>, %arg6: memref<2x2xf32, #tpu.memory_space<vmem>>, %arg7: memref<2x2xf32, #tpu.memory_space<vmem>>) attributes {dimension_semantics = [], scalar_prefetch = 0 : i64, scratch_operands = 0 : i64, tpu.core_type = #tpu.core_type<tc>} {
    %c0 = arith.constant 0 : index
    %c0_0 = arith.constant 0 : index
    %0 = vector.load %arg0[%c0, %c0_0] : memref<2x64xf32, #tpu.memory_space<vmem>>, vector<2x64xf32>
    %c0_1 = arith.constant 0 : index
    %c0_2 = arith.constant 0 : index
    %1 = vector.load %arg1[%c0_1, %c0_2] : memref<2x32xf32, #tpu.memory_space<vmem>>, vector<2x32xf32>
    %c0_3 = arith.constant 0 : index
    %c0_4 = arith.constant 0 : index
    %2 = vector.load %arg2[%c0_3, %c0_4] : memref<1x32xf32, #tpu.memory_space<vmem>>, vector<1x32xf32>
    %c0_5 = arith.constant 0 : index
    %c0_6 = arith.constant 0 : index
    %3 = vector.load %arg3[%c0_5, %c0_6] : memref<1x32xf32, #tpu.memory_space<vmem>>, vector<1x32xf32>
    %cst = arith.constant dense<0.000000e+00> : vector<2xf32>
    %4 = vector.multi_reduction <add>, %1, %cst [1] : vector<2x32xf32> to vector<2xf32>
    %5 = vector.shape_cast %4 : vector<2xf32> to vector<2x1xf32>
    %cst_7 = arith.constant 3.200000e+01 : f32
    %6 = vector.broadcast %cst_7 : f32 to vector<2x1xf32>
    %7 = arith.divf %5, %6 : vector<2x1xf32>
    %8 = vector.broadcast %7 : vector<2x1xf32> to vector<2x32xf32>
    %9 = arith.subf %1, %8 : vector<2x32xf32>
    %10 = arith.mulf %9, %9 : vector<2x32xf32>
    %cst_8 = arith.constant dense<0.000000e+00> : vector<2xf32>
    %11 = vector.multi_reduction <add>, %10, %cst_8 [1] : vector<2x32xf32> to vector<2xf32>
    %12 = vector.shape_cast %11 : vector<2xf32> to vector<2x1xf32>
    %cst_9 = arith.constant 3.200000e+01 : f32
    %13 = vector.broadcast %cst_9 : f32 to vector<2x1xf32>
    %14 = arith.divf %12, %13 : vector<2x1xf32>
    %cst_10 = arith.constant 9.99999974E-6 : f32
    %15 = vector.broadcast %cst_10 : f32 to vector<2x1xf32>
    %16 = arith.addf %14, %15 : vector<2x1xf32>
    %17 = math.rsqrt %16 : vector<2x1xf32>
    %18 = vector.broadcast %17 : vector<2x1xf32> to vector<2x32xf32>
    %19 = arith.mulf %9, %18 : vector<2x32xf32>
    %20 = vector.broadcast %2 : vector<1x32xf32> to vector<2x32xf32>
    %21 = arith.mulf %19, %20 : vector<2x32xf32>
    %22 = vector.broadcast %3 : vector<1x32xf32> to vector<2x32xf32>
    %23 = arith.addf %21, %22 : vector<2x32xf32>
    %c0_11 = arith.constant 0 : index
    %c0_12 = arith.constant 0 : index
    %24 = vector.load %arg4[%c0_11, %c0_12] : memref<32x64xbf16, #tpu.memory_space<vmem>>, vector<32x64xbf16>
    %25 = arith.truncf %23 : vector<2x32xf32> to vector<2x32xbf16>
    %cst_13 = arith.constant dense<0.000000e+00> : vector<2x64xf32>
    %26 = tpu.matmul %25, %24, %cst_13 {dimension_numbers = #tpu.dot_dimension_numbers<[1], [0], [0], [1], [0, 0, 1, 1], [], []>} : vector<2x32xbf16>, vector<32x64xbf16>, vector<2x64xf32> -> vector<2x64xf32>
    %27 = arith.mulf %0, %0 : vector<2x64xf32>
    %cst_14 = arith.constant dense<0.000000e+00> : vector<2xf32>
    %28 = vector.multi_reduction <add>, %27, %cst_14 [1] : vector<2x64xf32> to vector<2xf32>
    %29 = vector.shape_cast %28 : vector<2xf32> to vector<2x1xf32>
    %30 = math.rsqrt %29 : vector<2x1xf32>
    %31 = vector.broadcast %30 : vector<2x1xf32> to vector<2x64xf32>
    %32 = arith.mulf %0, %31 : vector<2x64xf32>
    %33 = arith.mulf %26, %26 : vector<2x64xf32>
    %cst_15 = arith.constant dense<0.000000e+00> : vector<2xf32>
    %34 = vector.multi_reduction <add>, %33, %cst_15 [1] : vector<2x64xf32> to vector<2xf32>
    %35 = vector.shape_cast %34 : vector<2xf32> to vector<2x1xf32>
    %36 = math.rsqrt %35 : vector<2x1xf32>
    %37 = vector.broadcast %36 : vector<2x1xf32> to vector<2x64xf32>
    %38 = arith.mulf %26, %37 : vector<2x64xf32>
    %c0_16 = arith.constant 0 : index
    %c0_17 = arith.constant 0 : index
    %39 = vector.load %arg5[%c0_16, %c0_17] : memref<1x1xf32, #tpu.memory_space<vmem>>, vector<1x1xf32>
    %40 = math.exp %39 : vector<1x1xf32>
    %cst_18 = arith.constant dense<0.000000e+00> : vector<2x2xf32>
    %41 = tpu.matmul %32, %38, %cst_18 {dimension_numbers = #tpu.dot_dimension_numbers<[1], [1], [0], [0], [0, 0, 1, 0], [], []>} : vector<2x64xf32>, vector<2x64xf32>, vector<2x2xf32> -> vector<2x2xf32>
    %42 = vector.broadcast %40 : vector<1x1xf32> to vector<2x2xf32>
    %43 = arith.mulf %42, %41 : vector<2x2xf32>
    %c0_19 = arith.constant 0 : index
    %c0_20 = arith.constant 0 : index
    %44 = vector.load %arg6[%c0_19, %c0_20] : memref<2x2xf32, #tpu.memory_space<vmem>>, vector<2x2xf32>
    tpu.vector_store %arg6[%c0_19, %c0_20], %43 {strides = array<i32>} : memref<2x2xf32, #tpu.memory_space<vmem>>, vector<2x2xf32>,
    %cst_21 = arith.constant dense<0.000000e+00> : vector<2x2xf32>
    %45 = tpu.matmul %38, %32, %cst_21 {dimension_numbers = #tpu.dot_dimension_numbers<[1], [1], [0], [0], [0, 0, 1, 0], [], []>} : vector<2x64xf32>, vector<2x64xf32>, vector<2x2xf32> -> vector<2x2xf32>
    %46 = vector.broadcast %40 : vector<1x1xf32> to vector<2x2xf32>
    %47 = arith.mulf %46, %45 : vector<2x2xf32>
    %c0_22 = arith.constant 0 : index
    %c0_23 = arith.constant 0 : index
    %48 = vector.load %arg7[%c0_22, %c0_23] : memref<2x2xf32, #tpu.memory_space<vmem>>, vector<2x2xf32>
    tpu.vector_store %arg7[%c0_22, %c0_23], %47 {strides = array<i32>} : memref<2x2xf32, #tpu.memory_space<vmem>>, vector<2x2xf32>,
    return
  }
}

</mosaic_0001>

<llo_original>
// kernel: clip_forward.5
$region0: #{clip_forward.5}
  #allocation0 [shape = 'u32[]', space=smem, size = 0x4, offset = 0x4, fixed_abs, tag = 'smem constant byte address 0x4 - core index']
  #allocation1 [shape = 'u32[144,128]{1,0:T(1,128)}', space=vmem, size = 0x12000, scoped, tag = 'internal scratch']
  %s0 = inlined_call_operand.vmem [shape: f32[2,17,192], index: 0, kind: input, shape index: {}]
  %s1 = inlined_call_operand.vmem [shape: bf16[192,64], index: 1, kind: input, shape index: {}]
  %s2 = inlined_call_operand.vmem [shape: f32[17,64], index: 2, kind: input, shape index: {}]
  %s3 = inlined_call_operand.vmem [shape: f32[1,64], index: 3, kind: input, shape index: {}]
  %s4 = inlined_call_operand.vmem [shape: f32[1,64], index: 4, kind: input, shape index: {}]
  %s5 = inlined_call_operand.vmem [shape: f32[2,17,64], index: 5, kind: output, shape index: {}]
  %s6 = sld [smem:[#allocation0]]
  $region53: #{clip_forward.5} parent=0
    _
  %s8 = ssub.s32 1, %s6
  %s9 = scalar_select 0, %s8, %s6
  loop: start=0, step=1, limit=4
  $region2: #{clip_forward.5} parent=0 // loop_pre_header
    _
  $region3: #{clip_forward.5} parent=0 // loop_header
    %s11 = sphi 0, %s15
    %p12 = scmp.ge.s32.totalorder %s11, 4
    %s21 = sphi 0, %s23
    %s24 = sphi 0, %s21
    %s25 = sphi 0, %s24
    %s41 = sphi 0, %s25
    %s45 = sphi 0, %s45
    %s47 = sphi 0, %s45
    %s48 = sphi 0, %s47
    %s62 = sphi 0, %s48
    %s66 = sphi 0, %s66
    %s68 = sphi 0, %s66
    %s69 = sphi 0, %s68
    %s83 = sphi 0, %s69
    %s87 = sphi 0, %s87
    %s89 = sphi 0, %s87
    %s90 = sphi 0, %s89
    %s104 = sphi 0, %s90
    %s108 = sphi 0, %s108
    %s110 = sphi 0, %s108
    %s111 = sphi 0, %s110
    %s125 = sphi 0, %s111
    %s131 = sphi 0, %s133
    %s134 = sphi 0, %s131
    %s135 = sphi 0, %s134
    %s151 = sphi 0, %s135
  $region4: #{clip_forward.5} parent=0 // loop_header_branch
    %14 = sbr.rel (%p12) target = $region8
  $region5: #{clip_forward.5} parent=0 // loop_body
    %s16 = ssub.s32 %s11, 1
    %s17 = ssub.s32 %s11, 2
    %s18 = sadd.s32 %s11, 1
    %s19 = ssub.s32 %s11, %s18
    %p20 = scmp.eq.s32.totalorder %s19, 0
    %s22 = sadd.s32 %s21, 1
    %s23 = scalar_select %p20, %s21, %s22
    %p26 = pneg %p20
    %p27 = scmp.eq.s32.totalorder %s11, 1
    %p28 = por %p26, %p27
    %p29 = scmp.ne.s32.totalorder %s21, %s24
    %p30 = scmp.eq.s32.totalorder %s11, 0
    %p31 = por %p29, %p30
    %p32 = scmp.ne.s32.totalorder %s21, %s24
    %p33 = scmp.eq.s32.totalorder %s16, 1
    %p34 = por %p32, %p33
    %p35 = scmp.ne.s32.totalorder %s24, %s25
    %p36 = scmp.eq.s32.totalorder %s16, 0
    %p37 = por %p35, %p36
    %p38 = scmp.ne.s32.totalorder %s24, %s25
    %p39 = scmp.eq.s32.totalorder %s17, 1
    %p40 = por %p38, %p39
    %p42 = scmp.ne.s32.totalorder %s25, %s41
    %p43 = scmp.eq.s32.totalorder %s17, 0
    %p44 = por %p42, %p43
    %s46 = sadd.s32 %s45, 1
    %p49 = scmp.eq.s32.totalorder %s11, 1
    %p50 = scmp.ne.s32.totalorder %s45, %s47
    %p51 = scmp.eq.s32.totalorder %s11, 0
    %p52 = por %p50, %p51
    %p53 = scmp.ne.s32.totalorder %s45, %s47
    %p54 = scmp.eq.s32.totalorder %s16, 1
    %p55 = por %p53, %p54
    %p56 = scmp.ne.s32.totalorder %s47, %s48
    %p57 = scmp.eq.s32.totalorder %s16, 0
    %p58 = por %p56, %p57
    %p59 = scmp.ne.s32.totalorder %s47, %s48
    %p60 = scmp.eq.s32.totalorder %s17, 1
    %p61 = por %p59, %p60
    %p63 = scmp.ne.s32.totalorder %s48, %s62
    %p64 = scmp.eq.s32.totalorder %s17, 0
    %p65 = por %p63, %p64
    %s67 = sadd.s32 %s66, 1
    %p70 = scmp.eq.s32.totalorder %s11, 1
    %p71 = scmp.ne.s32.totalorder %s66, %s68
    %p72 = scmp.eq.s32.totalorder %s11, 0
    %p73 = por %p71, %p72
    %p74 = scmp.ne.s32.totalorder %s66, %s68
    %p75 = scmp.eq.s32.totalorder %s16, 1
    %p76 = por %p74, %p75
    %p77 = scmp.ne.s32.totalorder %s68, %s69
    %p78 = scmp.eq.s32.totalorder %s16, 0
    %p79 = por %p77, %p78
    %p80 = scmp.ne.s32.totalorder %s68, %s69
    %p81 = scmp.eq.s32.totalorder %s17, 1
    %p82 = por %p80, %p81
    %p84 = scmp.ne.s32.totalorder %s69, %s83
    %p85 = scmp.eq.s32.totalorder %s17, 0
    %p86 = por %p84, %p85
    %s88 = sadd.s32 %s87, 1
    %p91 = scmp.eq.s32.totalorder %s11, 1
    %p92 = scmp.ne.s32.totalorder %s87, %s89
    %p93 = scmp.eq.s32.totalorder %s11, 0
    %p94 = por %p92, %p93
    %p95 = scmp.ne.s32.totalorder %s87, %s89
    %p96 = scmp.eq.s32.totalorder %s16, 1
    %p97 = por %p95, %p96
    %p98 = scmp.ne.s32.totalorder %s89, %s90
    %p99 = scmp.eq.s32.totalorder %s16, 0
    %p100 = por %p98, %p99
    %p101 = scmp.ne.s32.totalorder %s89, %s90
    %p102 = scmp.eq.s32.totalorder %s17, 1
    %p103 = por %p101, %p102
    %p105 = scmp.ne.s32.totalorder %s90, %s104
    %p106 = scmp.eq.s32.totalorder %s17, 0
    %p107 = por %p105, %p106
    %s109 = sadd.s32 %s108, 1
    %p112 = scmp.eq.s32.totalorder %s11, 1
    %p113 = scmp.ne.s32.totalorder %s108, %s110
    %p114 = scmp.eq.s32.totalorder %s11, 0
    %p115 = por %p113, %p114
    %p116 = scmp.ne.s32.totalorder %s108, %s110
    %p117 = scmp.eq.s32.totalorder %s16, 1
    %p118 = por %p116, %p117
    %p119 = scmp.ne.s32.totalorder %s110, %s111
    %p120 = scmp.eq.s32.totalorder %s16, 0
    %p121 = por %p119, %p120
    %p122 = scmp.ne.s32.totalorder %s110, %s111
    %p123 = scmp.eq.s32.totalorder %s17, 1
    %p124 = por %p122, %p123
    %p126 = scmp.ne.s32.totalorder %s111, %s125
    %p127 = scmp.eq.s32.totalorder %s17, 0
    %p128 = por %p126, %p127
    %s129 = ssub.s32 %s11, %s18
    %p130 = scmp.eq.s32.totalorder %s129, 0
    %s132 = sadd.s32 %s131, 1
    %s133 = scalar_select %p130, %s131, %s132
    %p136 = pneg %p130
    %p137 = scmp.eq.s32.totalorder %s11, 1
    %p138 = por %p136, %p137
    %p139 = scmp.ne.s32.totalorder %s131, %s134
    %p140 = scmp.eq.s32.totalorder %s11, 0
    %p141 = por %p139, %p140
    %p142 = scmp.ne.s32.totalorder %s131, %s134
    %p143 = scmp.eq.s32.totalorder %s16, 1
    %p144 = por %p142, %p143
    %p145 = scmp.ne.s32.totalorder %s134, %s135
    %p146 = scmp.eq.s32.totalorder %s16, 0
    %p147 = por %p145, %p146
    %p148 = scmp.ne.s32.totalorder %s134, %s135
    %p149 = scmp.eq.s32.totalorder %s17, 1
    %p150 = por %p148, %p149
    %p152 = scmp.ne.s32.totalorder %s135, %s151
    %p153 = scmp.eq.s32.totalorder %s17, 0
    %p154 = por %p152, %p153
    %p155 = scmp.le.s32.totalorder 1, %s11
    %p156 = scmp.lt.s32.totalorder %s11, 3
    %p157 = pnand %p155, %p156
    %p158 = pneg %p157
    // Predicated region
    $region9: #{clip_forward.5} parent=5 // pred_check
      _
    $region10: #{clip_forward.5} parent=5 // pred_check_branch
      %160 = sbr.rel (%p157) target = $region12
    $region11: #{clip_forward.5} parent=5 // pred_region
      %s161 = ssub.s32 %s11, 1
      // Predicated region
      $region13: #{clip_forward.5} parent=11 // pred_check
        %p162 = pneg %p58
      $region14: #{clip_forward.5} parent=11 // pred_check_branch
        %164 = sbr.rel (%p162) target = $region16
      $region15: #{clip_forward.5} parent=11 // pred_region
        _
      $region16: #{clip_forward.5} parent=11 // pred_fallthru
        _
      // Predicated region
      $region17: #{clip_forward.5} parent=11 // pred_check
        %p165 = pneg %p79
      $region18: #{clip_forward.5} parent=11 // pred_check_branch
        %167 = sbr.rel (%p165) target = $region20
      $region19: #{clip_forward.5} parent=11 // pred_region
        _
      $region20: #{clip_forward.5} parent=11 // pred_fallthru
        _
      // Predicated region
      $region21: #{clip_forward.5} parent=11 // pred_check
        %p168 = pneg %p100
      $region22: #{clip_forward.5} parent=11 // pred_check_branch
        %170 = sbr.rel (%p168) target = $region24
      $region23: #{clip_forward.5} parent=11 // pred_region
        _
      $region24: #{clip_forward.5} parent=11 // pred_fallthru
        _
      // Predicated region
      $region25: #{clip_forward.5} parent=11 // pred_check
        %p171 = pneg %p121
      $region26: #{clip_forward.5} parent=11 // pred_check_branch
        %173 = sbr.rel (%p171) target = $region28
      $region27: #{clip_forward.5} parent=11 // pred_region
        _
      $region28: #{clip_forward.5} parent=11 // pred_fallthru
        _
    $region12: #{clip_forward.5} parent=5 // pred_fallthru
      _
    %p174 = scmp.lt.s32.totalorder %s11, 2
    // Predicated region
    $region29: #{clip_forward.5} parent=5 // pred_check
      %p175 = pneg %p174
    $region30: #{clip_forward.5} parent=5 // pred_check_branch
      %177 = sbr.rel (%p175) target = $region32
    $region31: #{clip_forward.5} parent=5 // pred_region
      // Predicated region
      $region33: #{clip_forward.5} parent=31 // pred_check
        %p178 = pneg %p31
      $region34: #{clip_forward.5} parent=31 // pred_check_branch
        %180 = sbr.rel (%p178) target = $region36
      $region35: #{clip_forward.5} parent=31 // pred_region
        %p181 = scmp.lt.s32.totalorder %s11, 1
        %s182 = scalar_select %p181, %s11, 1
        %s183 = smul.addr %s182, 6
        %s184 = smul.addr %s183, 8
        %s185 = scalar_lea.vmem %s0, %s184
      $region36: #{clip_forward.5} parent=31 // pred_fallthru
        _
    $region32: #{clip_forward.5} parent=5 // pred_fallthru
      _
    %p186 = scmp.le.s32.totalorder 1, %s11
    %p187 = scmp.lt.s32.totalorder %s11, 3
    %p188 = pnand %p186, %p187
    %p189 = pneg %p188
    // Predicated region
    $region37: #{clip_forward.5} parent=5 // pred_check
      _
    $region38: #{clip_forward.5} parent=5 // pred_check_branch
      %191 = sbr.rel (%p188) target = $region40
    $region39: #{clip_forward.5} parent=5 // pred_region
      %s192 = ssub.s32 %s11, 1
      %p193 = scmp.lt.s32.totalorder %s16, 1
      %s194 = scalar_select %p193, %s16, 1
      %s195 = smul.addr %s194, 6
      %s196 = smul.addr %s195, 8
      %s197 = scalar_lea.vmem %s0, %s196
      %p198 = pneg %p37
      %p199 = pneg %p34
      %p200 = pneg %p58
      %p201 = pneg %p55
      %p202 = pneg %p79
      %p203 = pneg %p76
      %p204 = pneg %p100
      %p205 = pneg %p97
      %p206 = pneg %p121
      %p207 = pneg %p118
      %p208 = pneg %p147
      %p209 = pneg %p144
      %p210 = scmp.lt.s32.totalorder %s16, 1
      %s211 = scalar_select %p210, %s16, 1
      %s212 = smul.addr %s211, 3
      %s213 = smul.addr %s212, 8
      %s214 = scalar_lea.vmem %s5, %s213
      %p215 = scmp.lt.s32.totalorder %s16, 1
      %s216 = scalar_select %p215, %s16, 1
      %s217 = smul.addr %s216, 6
      %s218 = smul.addr %s217, 8
      %s219 = scalar_lea.vmem %s0, %s218
      %p220 = scmp.lt.s32.totalorder %s16, 1
      %s221 = scalar_select %p220, %s16, 1
      %s222 = smul.addr %s221, 3
      %s223 = smul.addr %s222, 8
      %s224 = scalar_lea.vmem %s5, %s223
      %v226 = vld [vmem:[%s219] sm:$0xff]
      %v227 = vld [vmem:[%s219 + $0x8] sm:$0xff]
      %v228 = vld [vmem:[%s219 + $0x10] sm:$0xff]
      %v229 = vld [vmem:[%s219 + $0x18] sm:$0xff]
      %v230 = vld [vmem:[%s219 + $0x20] sm:$0x1]
      %v231 = vld [vmem:[%s219 + $0x28] sm:$0x1]
      %v232 = vld [vmem:[%s1] sm:$0xf]
      %v233 = vld [vmem:[%s1 + $0x4] sm:$0xf]
      %v234 = vld [vmem:[%s1 + $0x8] sm:$0xf]
      %v235 = vld [vmem:[%s1 + $0xc] sm:$0xf]
      %v236 = vld [vmem:[%s1 + $0x10] sm:$0xf]
      %v237 = vld [vmem:[%s1 + $0x14] sm:$0xf]
      %v238 = vld [vmem:[%s1 + $0x18] sm:$0xf]
      %v239 = vld [vmem:[%s1 + $0x1c] sm:$0xf]
      %v240 = vld [vmem:[%s1 + $0x20] sm:$0xf]
      %v241 = vld [vmem:[%s1 + $0x24] sm:$0xf]
      %v242 = vld [vmem:[%s1 + $0x28] sm:$0xf]
      %v243 = vld [vmem:[%s1 + $0x2c] sm:$0xf]
      %v244 = vld [vmem:[%s1 + $0x30] sm:$0xf]
      %v245 = vld [vmem:[%s1 + $0x34] sm:$0xf]
      %v246 = vld [vmem:[%s1 + $0x38] sm:$0xf]
      %v247 = vld [vmem:[%s1 + $0x3c] sm:$0xf]
      %v248 = vld [vmem:[%s1 + $0x40] sm:$0xf]
      %v249 = vld [vmem:[%s1 + $0x44] sm:$0xf]
      %v250 = vld [vmem:[%s1 + $0x48] sm:$0xf]
      %v251 = vld [vmem:[%s1 + $0x4c] sm:$0xf]
      %v252 = vld [vmem:[%s1 + $0x50] sm:$0xf]
      %v253 = vld [vmem:[%s1 + $0x54] sm:$0xf]
      %v254 = vld [vmem:[%s1 + $0x58] sm:$0xf]
      %v255 = vld [vmem:[%s1 + $0x5c] sm:$0xf]
      %v256 = vpack.c.bf16 %v228, %v226
      %v257 = vpack.c.bf16 %v229, %v227
      %v258 = vpack.c.bf16 %v230, %v230
      %v259 = vpack.c.bf16 %v231, %v231
      %v260 = vld [vmem:[%s2] sm:$0xff]
      %v261 = vld [vmem:[%s2 + $0x8] sm:$0xff]
      %v262 = vld [vmem:[%s2 + $0x10] sm:$0x1]
      %v287 = vunpack.c.l.b16 %v232
      %v288 = vunpack.c.l.b16 %v233
      %v289 = vunpack.c.l.b16 %v234
      %v290 = vunpack.c.l.b16 %v235
      %v291 = vunpack.c.l.b16 %v236
      %v292 = vunpack.c.l.b16 %v237
      %v293 = vunpack.c.l.b16 %v238
      %v294 = vunpack.c.l.b16 %v239
      %v295 = vunpack.c.l.b16 %v240
      %v296 = vunpack.c.l.b16 %v241
      %v297 = vunpack.c.l.b16 %v242
      %v298 = vunpack.c.l.b16 %v243
      %v299 = vunpack.c.l.b16 %v244
      %v300 = vunpack.c.l.b16 %v245
      %v301 = vunpack.c.l.b16 %v246
      %v302 = vunpack.c.l.b16 %v247
      %v303 = vunpack.c.l.b16 %v248
      %v304 = vunpack.c.l.b16 %v249
      %v305 = vunpack.c.l.b16 %v250
      %v306 = vunpack.c.l.b16 %v251
      %v307 = vunpack.c.l.b16 %v252
      %v308 = vunpack.c.l.b16 %v253
      %v309 = vunpack.c.l.b16 %v254
      %v310 = vunpack.c.l.b16 %v255
      %v311 = vpack.c.b16 %v288, %v287
      %v312 = vpack.c.b16 %v290, %v289
      %v313 = vpack.c.b16 %v292, %v291
      %v314 = vpack.c.b16 %v294, %v293
      %v315 = vpack.c.b16 %v296, %v295
      %v316 = vpack.c.b16 %v298, %v297
      %v317 = vpack.c.b16 %v300, %v299
      %v318 = vpack.c.b16 %v302, %v301
      %v319 = vpack.c.b16 %v304, %v303
      %v320 = vpack.c.b16 %v306, %v305
      %v321 = vpack.c.b16 %v308, %v307
      %v322 = vpack.c.b16 %v310, %v309
      %vm335 = vcmask 523264
      %v337 = vsel %vm335, %v257, 0
      %v340 = vsel %vm335, %v259, 0
      %342 = vmatprep.subr.bf16.mxu0 0
      %343 = vmatpush1.bf16.msra.mxu0 %v318
      %344 = vmatprep.subr.bf16.mxu0 0
      %345 = vmatpush1.bf16.msra.mxu0 %v317
      %346 = vmatprep.subr.bf16.mxu0 0
      %347 = vmatpush1.bf16.msra.mxu0 %v316
      %348 = vmatprep.subr.bf16.mxu0 0
      %349 = vmatpush1.bf16.msra.mxu0 %v315
      %350 = vmatprep.subr.bf16.mxu0 0
      %351 = vmatpush1.bf16.msra.mxu0 %v314
      %352 = vmatprep.subr.bf16.mxu0 0
      %353 = vmatpush1.bf16.msra.mxu0 %v313
      %354 = vmatprep.subr.bf16.mxu0 0
      %355 = vmatpush1.bf16.msra.mxu0 %v312
      %356 = vmatprep.subr.bf16.mxu0 0
      %357 = vmatpush1.bf16.msra.mxu0 %v311
      %358 = vmatprep.subr.bf16.mxu0 0
      %359 = vmatpush2.bf16.msra.mxu0 0
      %360 = vmatprep.subr.bf16.mxu0 0
      %361 = vmatpush2.bf16.msra.mxu0 0
      %362 = vmatprep.subr.bf16.mxu0 0
      %363 = vmatpush2.bf16.msra.mxu0 0
      %364 = vmatprep.subr.bf16.mxu0 0
      %365 = vmatpush2.bf16.msra.mxu0 0
      %366 = vmatprep.subr.bf16.mxu0 0
      %367 = vmatpush2.bf16.msra.mxu0 %v322
      %368 = vmatprep.subr.bf16.mxu0 0
      %369 = vmatpush2.bf16.msra.mxu0 %v321
      %370 = vmatprep.subr.bf16.mxu0 0
      %371 = vmatpush2.bf16.msra.mxu0 %v320
      %372 = vmatprep.subr.bf16.mxu0 0
      %373 = vmatpush2.bf16.msra.mxu0 %v319
      %374 = vmatprep.mubr.bf16.mxu0 %v337
      %375 = vmatmul.mubr.bf16.gmra.mxu0 %v256
      %v376 = vpop.f32.mrf.mxu0
      %v377 = vadd.f32 %v260, %v376
      %v378 = vpop.f32.mrf.mxu0
      %v379 = vpop.f32.mrf.mxu0
      %v380 = vadd.f32 %v261, %v379
      %v381 = vpop.f32.mrf.mxu0
      %382 = vmatprep.mubr.bf16.mxu0 %v340
      %383 = vmatmul.mubr.bf16.gmra.mxu0 %v258
      %v384 = vpop.f32.mrf.mxu0
      %v385 = vadd.f32 %v262, %v384
      %v386 = vpop.f32.mrf.mxu0
      %v387 = vpop.f32.mrf.mxu0
      %v388 = vpop.f32.mrf.mxu0
      %389 = vdwg.mxu0
      %v390 = vld [vmem:[%s3] sm:$0x1]
      %v391 = vld [vmem:[%s4] sm:$0x1]
      %v392 = vsel %vm335, %v377, 0.0
      %393 = vadd.xlane.f32.xlu0 %v392
      %v394 = vpop.xlane.xlu0 %393
      %v395 = vsel %vm335, %v380, 0.0
      %396 = vadd.xlane.f32.xlu0 %v395
      %v397 = vpop.xlane.xlu0 %396
      %vm398 = vcmask 516096
      %v399 = vsel %vm398, %v385, 0.0
      %400 = vadd.xlane.f32.xlu0 %v399
      %v401 = vpop.xlane.xlu0 %400
      %v402 = vrcp.pop 64.0
      %v403 = vmul.f32 %v394, %v402
      %v404 = vmul.f32 %v397, %v402
      %v405 = vmul.f32 %v401, %v402
      %v406 = vsub.f32 %v377, %v403
      %v407 = vsub.f32 %v380, %v404
      %v408 = vsub.f32 %v385, %v405
      %v409 = vmul.f32 %v406, %v406
      %v410 = vmul.f32 %v407, %v407
      %v411 = vmul.f32 %v408, %v408
      %v412 = vsel %vm335, %v409, 0.0
      %413 = vadd.xlane.f32.xlu0 %v412
      %v414 = vpop.xlane.xlu0 %413
      %v415 = vsel %vm335, %v410, 0.0
      %416 = vadd.xlane.f32.xlu0 %v415
      %v417 = vpop.xlane.xlu0 %416
      %v418 = vsel %vm398, %v411, 0.0
      %419 = vadd.xlane.f32.xlu0 %v418
      %v420 = vpop.xlane.xlu0 %419
      %v421 = vmul.f32 %v414, %v402
      %v422 = vmul.f32 %v417, %v402
      %v423 = vmul.f32 %v420, %v402
      %v424 = vadd.f32 %v421, 1e-05
      %v425 = vadd.f32 %v422, 1e-05
      %v426 = vadd.f32 %v423, 1e-05
      %v427 = vrsqrt.pop %v424
      %v428 = vrsqrt.pop %v425
      %v429 = vrsqrt.pop %v426
      %v430 = vmul.f32 %v406, %v427
      %v431 = vmul.f32 %v407, %v428
      %v432 = vmul.f32 %v408, %v429
      %v434 = vlaneseq
      %v435 = vshrl.u32 %v434, 7
      %v436 = vsub.s32 0, %v435
      %v437 = vrot.slane %v390, %v436
      %v439 = vmul.f32 %v430, %v437
      %v440 = vmul.f32 %v431, %v437
      %v441 = vmul.f32 %v432, %v437
      %v443 = vlaneseq
      %v444 = vshrl.u32 %v443, 7
      %v445 = vsub.s32 0, %v444
      %v446 = vrot.slane %v391, %v445
      %v448 = vadd.f32 %v439, %v446
      %v449 = vadd.f32 %v440, %v446
      %v450 = vadd.f32 %v441, %v446
      %451 = vst.msk [vmem:[%s224] sm:$0xff] %vm335, %v448
      %452 = vst.msk [vmem:[%s224 + $0x8] sm:$0xff] %vm335, %v449
      %453 = vst.msk [vmem:[%s224 + $0x10] sm:$0x1] %vm398, %v450
      %p454 = scmp.lt.s32.totalorder %s16, 1
      %s455 = scalar_select %p454, %s16, 1
      %s456 = smul.addr %s455, 3
      %s457 = smul.addr %s456, 8
      %s458 = scalar_lea.vmem %s5, %s457
      // Predicated region
      $region41: #{clip_forward.5} parent=39 // pred_check
        %p459 = pneg %p144
      $region42: #{clip_forward.5} parent=39 // pred_check_branch
        %461 = sbr.rel (%p459) target = $region44
      $region43: #{clip_forward.5} parent=39 // pred_region
        _
      $region44: #{clip_forward.5} parent=39 // pred_fallthru
        _
    $region40: #{clip_forward.5} parent=5 // pred_fallthru
      _
    %p462 = scmp.le.s32.totalorder 2, %s11
    // Predicated region
    $region45: #{clip_forward.5} parent=5 // pred_check
      %p463 = pneg %p462
    $region46: #{clip_forward.5} parent=5 // pred_check_branch
      %465 = sbr.rel (%p463) target = $region48
    $region47: #{clip_forward.5} parent=5 // pred_region
      %s466 = ssub.s32 %s11, 2
      // Predicated region
      $region49: #{clip_forward.5} parent=47 // pred_check
        %p467 = pneg %p150
      $region50: #{clip_forward.5} parent=47 // pred_check_branch
        %469 = sbr.rel (%p467) target = $region52
      $region51: #{clip_forward.5} parent=47 // pred_region
        %p470 = scmp.lt.s32.totalorder %s17, 1
        %s471 = scalar_select %p470, %s17, 1
        %s472 = smul.addr %s471, 3
        %s473 = smul.addr %s472, 8
        %s474 = scalar_lea.vmem %s5, %s473
      $region52: #{clip_forward.5} parent=47 // pred_fallthru
        _
    $region48: #{clip_forward.5} parent=5 // pred_fallthru
      _
  $region6: #{clip_forward.5} parent=0 // loop_footer
    %s15 = sadd.s32 1, %s11
  $region7: #{clip_forward.5} parent=0 // loop_footer_branch
    %10 = sbr.rel target = $region3
  $region8: #{clip_forward.5} parent=0 // loop_exit
    _

// kernel: clip_forward.7
$region0: #{clip_forward.7}
  #allocation0 [shape = 'u32[]', space=smem, size = 0x4, offset = 0x4, fixed_abs, tag = 'smem constant byte address 0x4 - core index']
  #allocation1 [shape = 'u32[144,128]{1,0:T(1,128)}', space=vmem, size = 0x12000, scoped, tag = 'internal scratch']
  %s0 = inlined_call_operand.vmem [shape: f32[2,17,64], index: 0, kind: input, shape index: {}]
  %s1 = inlined_call_operand.vmem [shape: f32[1,64], index: 1, kind: input, shape index: {}]
  %s2 = inlined_call_operand.vmem [shape: f32[1,64], index: 2, kind: input, shape index: {}]
  %s3 = inlined_call_operand.vmem [shape: bf16[64,64], index: 3, kind: input, shape index: {}]
  %s4 = inlined_call_operand.hbm [shape: f32[2,17,64], index: 4, kind: output, shape index: {0}]
  %s5 = inlined_call_operand.vmem [shape: f32[2,17,64], index: 5, kind: output, shape index: {1}]
  %6 = xla_tuple %s4, %s5
  %s7 = sld [smem:[#allocation0]]
  $region57: #{clip_forward.7} parent=0
    _
  %s9 = ssub.s32 1, %s7
  %s10 = scalar_select 0, %s9, %s7
  $region1: #{clip_forward.7} parent=0
    #allocation2 [shape = 'u8[24576]{0}', space=vmem, size = 0x6000, scoped, tag = 'output window, operand 0']
    #allocation3 [shape = 's32[2]{0}', space=sflag, size = 0x8, scoped, tag = 'scoped memory for clip_forward.7']
    %11 = vsyncpa [#allocation3], 0
    %s12 = scalar_lea.sflag [#allocation3], 1
    %13 = vsyncpa %s12, 0
    loop: start=0, step=1, limit=4
    $region2: #{clip_forward.7} parent=1 // loop_pre_header
      _
    $region3: #{clip_forward.7} parent=1 // loop_header
      %s15 = sphi 0, %s19
      %p16 = scmp.ge.s32.totalorder %s15, 4
      %s25 = sphi 0, %s27
      %s28 = sphi 0, %s25
      %s29 = sphi 0, %s28
      %s45 = sphi 0, %s29
      %s49 = sphi 0, %s49
      %s51 = sphi 0, %s49
      %s52 = sphi 0, %s51
      %s66 = sphi 0, %s52
      %s70 = sphi 0, %s70
      %s72 = sphi 0, %s70
      %s73 = sphi 0, %s72
      %s87 = sphi 0, %s73
      %s91 = sphi 0, %s91
      %s93 = sphi 0, %s91
      %s94 = sphi 0, %s93
      %s108 = sphi 0, %s94
      %s114 = sphi 0, %s116
      %s117 = sphi 0, %s114
      %s118 = sphi 0, %s117
      %s134 = sphi 0, %s118
      %s140 = sphi 0, %s142
      %s143 = sphi 0, %s140
      %s144 = sphi 0, %s143
      %s160 = sphi 0, %s144
    $region4: #{clip_forward.7} parent=1 // loop_header_branch
      %18 = sbr.rel (%p16) target = $region8
    $region5: #{clip_forward.7} parent=1 // loop_body
      %s20 = ssub.s32 %s15, 1
      %s21 = ssub.s32 %s15, 2
      %s22 = sadd.s32 %s15, 1
      %s23 = ssub.s32 %s15, %s22
      %p24 = scmp.eq.s32.totalorder %s23, 0
      %s26 = sadd.s32 %s25, 1
      %s27 = scalar_select %p24, %s25, %s26
      %p30 = pneg %p24
      %p31 = scmp.eq.s32.totalorder %s15, 1
      %p32 = por %p30, %p31
      %p33 = scmp.ne.s32.totalorder %s25, %s28
      %p34 = scmp.eq.s32.totalorder %s15, 0
      %p35 = por %p33, %p34
      %p36 = scmp.ne.s32.totalorder %s25, %s28
      %p37 = scmp.eq.s32.totalorder %s20, 1
      %p38 = por %p36, %p37
      %p39 = scmp.ne.s32.totalorder %s28, %s29
      %p40 = scmp.eq.s32.totalorder %s20, 0
      %p41 = por %p39, %p40
      %p42 = scmp.ne.s32.totalorder %s28, %s29
      %p43 = scmp.eq.s32.totalorder %s21, 1
      %p44 = por %p42, %p43
      %p46 = scmp.ne.s32.totalorder %s29, %s45
      %p47 = scmp.eq.s32.totalorder %s21, 0
      %p48 = por %p46, %p47
      %s50 = sadd.s32 %s49, 1
      %p53 = scmp.eq.s32.totalorder %s15, 1
      %p54 = scmp.ne.s32.totalorder %s49, %s51
      %p55 = scmp.eq.s32.totalorder %s15, 0
      %p56 = por %p54, %p55
      %p57 = scmp.ne.s32.totalorder %s49, %s51
      %p58 = scmp.eq.s32.totalorder %s20, 1
      %p59 = por %p57, %p58
      %p60 = scmp.ne.s32.totalorder %s51, %s52
      %p61 = scmp.eq.s32.totalorder %s20, 0
      %p62 = por %p60, %p61
      %p63 = scmp.ne.s32.totalorder %s51, %s52
      %p64 = scmp.eq.s32.totalorder %s21, 1
      %p65 = por %p63, %p64
      %p67 = scmp.ne.s32.totalorder %s52, %s66
      %p68 = scmp.eq.s32.totalorder %s21, 0
      %p69 = por %p67, %p68
      %s71 = sadd.s32 %s70, 1
      %p74 = scmp.eq.s32.totalorder %s15, 1
      %p75 = scmp.ne.s32.totalorder %s70, %s72
      %p76 = scmp.eq.s32.totalorder %s15, 0
      %p77 = por %p75, %p76
      %p78 = scmp.ne.s32.totalorder %s70, %s72
      %p79 = scmp.eq.s32.totalorder %s20, 1
      %p80 = por %p78, %p79
      %p81 = scmp.ne.s32.totalorder %s72, %s73
      %p82 = scmp.eq.s32.totalorder %s20, 0
      %p83 = por %p81, %p82
      %p84 = scmp.ne.s32.totalorder %s72, %s73
      %p85 = scmp.eq.s32.totalorder %s21, 1
      %p86 = por %p84, %p85
      %p88 = scmp.ne.s32.totalorder %s73, %s87
      %p89 = scmp.eq.s32.totalorder %s21, 0
      %p90 = por %p88, %p89
      %s92 = sadd.s32 %s91, 1
      %p95 = scmp.eq.s32.totalorder %s15, 1
      %p96 = scmp.ne.s32.totalorder %s91, %s93
      %p97 = scmp.eq.s32.totalorder %s15, 0
      %p98 = por %p96, %p97
      %p99 = scmp.ne.s32.totalorder %s91, %s93
      %p100 = scmp.eq.s32.totalorder %s20, 1
      %p101 = por %p99, %p100
      %p102 = scmp.ne.s32.totalorder %s93, %s94
      %p103 = scmp.eq.s32.totalorder %s20, 0
      %p104 = por %p102, %p103
      %p105 = scmp.ne.s32.totalorder %s93, %s94
      %p106 = scmp.eq.s32.totalorder %s21, 1
      %p107 = por %p105, %p106
      %p109 = scmp.ne.s32.totalorder %s94, %s108
      %p110 = scmp.eq.s32.totalorder %s21, 0
      %p111 = por %p109, %p110
      %s112 = ssub.s32 %s15, %s22
      %p113 = scmp.eq.s32.totalorder %s112, 0
      %s115 = sadd.s32 %s114, 1
      %s116 = scalar_select %p113, %s114, %s115
      %p119 = pneg %p113
      %p120 = scmp.eq.s32.totalorder %s15, 1
      %p121 = por %p119, %p120
      %p122 = scmp.ne.s32.totalorder %s114, %s117
      %p123 = scmp.eq.s32.totalorder %s15, 0
      %p124 = por %p122, %p123
      %p125 = scmp.ne.s32.totalorder %s114, %s117
      %p126 = scmp.eq.s32.totalorder %s20, 1
      %p127 = por %p125, %p126
      %p128 = scmp.ne.s32.totalorder %s117, %s118
      %p129 = scmp.eq.s32.totalorder %s20, 0
      %p130 = por %p128, %p129
      %p131 = scmp.ne.s32.totalorder %s117, %s118
      %p132 = scmp.eq.s32.totalorder %s21, 1
      %p133 = por %p131, %p132
      %p135 = scmp.ne.s32.totalorder %s118, %s134
      %p136 = scmp.eq.s32.totalorder %s21, 0
      %p137 = por %p135, %p136
      %s138 = ssub.s32 %s15, %s22
      %p139 = scmp.eq.s32.totalorder %s138, 0
      %s141 = sadd.s32 %s140, 1
      %s142 = scalar_select %p139, %s140, %s141
      %p145 = pneg %p139
      %p146 = scmp.eq.s32.totalorder %s15, 1
      %p147 = por %p145, %p146
      %p148 = scmp.ne.s32.totalorder %s140, %s143
      %p149 = scmp.eq.s32.totalorder %s15, 0
      %p150 = por %p148, %p149
      %p151 = scmp.ne.s32.totalorder %s140, %s143
      %p152 = scmp.eq.s32.totalorder %s20, 1
      %p153 = por %p151, %p152
      %p154 = scmp.ne.s32.totalorder %s143, %s144
      %p155 = scmp.eq.s32.totalorder %s20, 0
      %p156 = por %p154, %p155
      %p157 = scmp.ne.s32.totalorder %s143, %s144
      %p158 = scmp.eq.s32.totalorder %s21, 1
      %p159 = por %p157, %p158
      %p161 = scmp.ne.s32.totalorder %s144, %s160
      %p162 = scmp.eq.s32.totalorder %s21, 0
      %p163 = por %p161, %p162
      %p164 = scmp.le.s32.totalorder 1, %s15
      %p165 = scmp.lt.s32.totalorder %s15, 3
      %p166 = pnand %p164, %p165
      %p167 = pneg %p166
      // Predicated region
      $region9: #{clip_forward.7} parent=5 // pred_check
        _
      $region10: #{clip_forward.7} parent=5 // pred_check_branch
        %169 = sbr.rel (%p166) target = $region12
      $region11: #{clip_forward.7} parent=5 // pred_region
        %s170 = ssub.s32 %s15, 1
        // Predicated region
        $region13: #{clip_forward.7} parent=11 // pred_check
          %p171 = pneg %p62
        $region14: #{clip_forward.7} parent=11 // pred_check_branch
          %173 = sbr.rel (%p171) target = $region16
        $region15: #{clip_forward.7} parent=11 // pred_region
          _
        $region16: #{clip_forward.7} parent=11 // pred_fallthru
          _
        // Predicated region
        $region17: #{clip_forward.7} parent=11 // pred_check
          %p174 = pneg %p83
        $region18: #{clip_forward.7} parent=11 // pred_check_branch
          %176 = sbr.rel (%p174) target = $region20
        $region19: #{clip_forward.7} parent=11 // pred_region
          _
        $region20: #{clip_forward.7} parent=11 // pred_fallthru
          _
        // Predicated region
        $region21: #{clip_forward.7} parent=11 // pred_check
          %p177 = pneg %p104
        $region22: #{clip_forward.7} parent=11 // pred_check_branch
          %179 = sbr.rel (%p177) target = $region24
        $region23: #{clip_forward.7} parent=11 // pred_region
          _
        $region24: #{clip_forward.7} parent=11 // pred_fallthru
          _
      $region12: #{clip_forward.7} parent=5 // pred_fallthru
        _
      %p180 = scmp.lt.s32.totalorder %s15, 2
      // Predicated region
      $region25: #{clip_forward.7} parent=5 // pred_check
        %p181 = pneg %p180
      $region26: #{clip_forward.7} parent=5 // pred_check_branch
        %183 = sbr.rel (%p181) target = $region28
      $region27: #{clip_forward.7} parent=5 // pred_region
        // Predicated region
        $region29: #{clip_forward.7} parent=27 // pred_check
          %p184 = pneg %p35
        $region30: #{clip_forward.7} parent=27 // pred_check_branch
          %186 = sbr.rel (%p184) target = $region32
        $region31: #{clip_forward.7} parent=27 // pred_region
          %p187 = scmp.lt.s32.totalorder %s15, 1
          %s188 = scalar_select %p187, %s15, 1
          %s189 = smul.addr %s188, 3
          %s190 = smul.addr %s189, 8
          %s191 = scalar_lea.vmem %s0, %s190
        $region32: #{clip_forward.7} parent=27 // pred_fallthru
          _
      $region28: #{clip_forward.7} parent=5 // pred_fallthru
        _
      %p192 = scmp.le.s32.totalorder 1, %s15
      %p193 = scmp.lt.s32.totalorder %s15, 3
      %p194 = pnand %p192, %p193
      %p195 = pneg %p194
      // Predicated region
      $region33: #{clip_forward.7} parent=5 // pred_check
        _
      $region34: #{clip_forward.7} parent=5 // pred_check_branch
        %197 = sbr.rel (%p194) target = $region36
      $region35: #{clip_forward.7} parent=5 // pred_region
        %s198 = ssub.s32 %s15, 1
        %p199 = scmp.lt.s32.totalorder %s20, 1
        %s200 = scalar_select %p199, %s20, 1
        %s201 = smul.addr %s200, 3
        %s202 = smul.addr %s201, 8
        %s203 = scalar_lea.vmem %s0, %s202
        %p204 = pneg %p41
        %p205 = pneg %p38
        %p206 = pneg %p62
        %p207 = pneg %p59
        %p208 = pneg %p83
        %p209 = pneg %p80
        %p210 = pneg %p104
        %p211 = pneg %p101
        %p212 = pneg %p130
        %p213 = pneg %p127
        %s214 = sand.u32 %s117, 1
        %s215 = scalar_lea.sflag [#allocation3], %s214
        %s216 = sand.u32 %s117, 1
        %s217 = smul.addr %s216, 24
        %s218 = scalar_lea.vmem [#allocation2], %s217
        %p219 = pneg %p156
        %p220 = pneg %p153
        %p221 = scmp.lt.s32.totalorder %s20, 1
        %s222 = scalar_select %p221, %s20, 1
        %s223 = smul.addr %s222, 3
        %s224 = smul.addr %s223, 8
        %s225 = scalar_lea.vmem %s5, %s224
        %p226 = scmp.lt.s32.totalorder %s20, 1
        %s227 = scalar_select %p226, %s20, 1
        %s228 = smul.addr %s227, 3
        %s229 = smul.addr %s228, 8
        %s230 = scalar_lea.vmem %s0, %s229
        %p231 = scmp.lt.s32.totalorder %s20, 1
        %s232 = scalar_select %p231, %s20, 1
        %s233 = smul.addr %s232, 3
        %s234 = smul.addr %s233, 8
        %s235 = scalar_lea.vmem %s5, %s234
        %v237 = vld [vmem:[%s230] sm:$0xff]
        %v238 = vld [vmem:[%s230 + $0x8] sm:$0xff]
        %v239 = vld [vmem:[%s230 + $0x10] sm:$0x1]
        %v240 = vld [vmem:[%s1] sm:$0x1]
        %v241 = vld [vmem:[%s2] sm:$0x1]
        %vm242 = vcmask 523264
        %v243 = vsel %vm242, %v237, 0.0
        %244 = vadd.xlane.f32.xlu0 %v243
        %v245 = vpop.xlane.xlu0 %244
        %v246 = vsel %vm242, %v238, 0.0
        %247 = vadd.xlane.f32.xlu0 %v246
        %v248 = vpop.xlane.xlu0 %247
        %vm249 = vcmask 516096
        %v250 = vsel %vm249, %v239, 0.0
        %251 = vadd.xlane.f32.xlu0 %v250
        %v252 = vpop.xlane.xlu0 %251
        %v253 = vrcp.pop 64.0
        %v254 = vmul.f32 %v245, %v253
        %v255 = vmul.f32 %v248, %v253
        %v256 = vmul.f32 %v252, %v253
        %v257 = vsub.f32 %v237, %v254
        %v258 = vsub.f32 %v238, %v255
        %v259 = vsub.f32 %v239, %v256
        %v260 = vmul.f32 %v257, %v257
        %v261 = vmul.f32 %v258, %v258
        %v262 = vmul.f32 %v259, %v259
        %v263 = vsel %vm242, %v260, 0.0
        %264 = vadd.xlane.f32.xlu0 %v263
        %v265 = vpop.xlane.xlu0 %264
        %v266 = vsel %vm242, %v261, 0.0
        %267 = vadd.xlane.f32.xlu0 %v266
        %v268 = vpop.xlane.xlu0 %267
        %v269 = vsel %vm249, %v262, 0.0
        %270 = vadd.xlane.f32.xlu0 %v269
        %v271 = vpop.xlane.xlu0 %270
        %v272 = vmul.f32 %v265, %v253
        %v273 = vmul.f32 %v268, %v253
        %v274 = vmul.f32 %v271, %v253
        %v275 = vadd.f32 %v272, 1e-05
        %v276 = vadd.f32 %v273, 1e-05
        %v277 = vadd.f32 %v274, 1e-05
        %v278 = vrsqrt.pop %v275
        %v279 = vrsqrt.pop %v276
        %v280 = vrsqrt.pop %v277
        %v281 = vmul.f32 %v257, %v278
        %v282 = vmul.f32 %v258, %v279
        %v283 = vmul.f32 %v259, %v280
        %v285 = vlaneseq
        %v286 = vshrl.u32 %v285, 7
        %v287 = vsub.s32 0, %v286
        %v288 = vrot.slane %v240, %v287
        %v290 = vmul.f32 %v281, %v288
        %v291 = vmul.f32 %v282, %v288
        %v292 = vmul.f32 %v283, %v288
        %v294 = vlaneseq
        %v295 = vshrl.u32 %v294, 7
        %v296 = vsub.s32 0, %v295
        %v297 = vrot.slane %v241, %v296
        %v299 = vadd.f32 %v290, %v297
        %v300 = vadd.f32 %v291, %v297
        %v301 = vadd.f32 %v292, %v297
        %302 = vst.msk [vmem:[%s218] sm:$0xff] %vm242, %v299
        %303 = vst.msk [vmem:[%s218 + $0x8] sm:$0xff] %vm242, %v300
        %304 = vst.msk [vmem:[%s218 + $0x10] sm:$0x1] %vm249, %v301
        %v305 = vld [vmem:[%s3] sm:$0xf]
        %v306 = vld [vmem:[%s3 + $0x4] sm:$0xf]
        %v307 = vld [vmem:[%s3 + $0x8] sm:$0xf]
        %v308 = vld [vmem:[%s3 + $0xc] sm:$0xf]
        %v309 = vld [vmem:[%s3 + $0x10] sm:$0xf]
        %v310 = vld [vmem:[%s3 + $0x14] sm:$0xf]
        %v311 = vld [vmem:[%s3 + $0x18] sm:$0xf]
        %v312 = vld [vmem:[%s3 + $0x1c] sm:$0xf]
        %v313 = vpack.c.bf16 %v300, %v299
        %v314 = vpack.c.bf16 %v301, %v301
        %v323 = vunpack.c.l.b16 %v305
        %v324 = vunpack.c.l.b16 %v306
        %v325 = vunpack.c.l.b16 %v307
        %v326 = vunpack.c.l.b16 %v308
        %v327 = vunpack.c.l.b16 %v309
        %v328 = vunpack.c.l.b16 %v310
        %v329 = vunpack.c.l.b16 %v311
        %v330 = vunpack.c.l.b16 %v312
        %v331 = vpack.c.b16 %v324, %v323
        %v332 = vpack.c.b16 %v326, %v325
        %v333 = vpack.c.b16 %v328, %v327
        %v334 = vpack.c.b16 %v330, %v329
        %v340 = vsel %vm242, %v313, 0
        %v343 = vsel %vm242, %v314, 0
        %345 = vmatprep.subr.bf16.mxu0 0
        %346 = vmatpush1.bf16.msra.mxu0 0
        %347 = vmatprep.subr.bf16.mxu0 0
        %348 = vmatpush1.bf16.msra.mxu0 0
        %349 = vmatprep.subr.bf16.mxu0 0
        %350 = vmatpush1.bf16.msra.mxu0 0
        %351 = vmatprep.subr.bf16.mxu0 0
        %352 = vmatpush1.bf16.msra.mxu0 0
        %353 = vmatprep.subr.bf16.mxu0 0
        %354 = vmatpush1.bf16.msra.mxu0 %v334
        %355 = vmatprep.subr.bf16.mxu0 0
        %356 = vmatpush1.bf16.msra.mxu0 %v333
        %357 = vmatprep.subr.bf16.mxu0 0
        %358 = vmatpush1.bf16.msra.mxu0 %v332
        %359 = vmatprep.subr.bf16.mxu0 0
        %360 = vmatpush1.bf16.msra.mxu0 %v331
        %361 = vmatprep.subr.bf16.mxu0 0
        %362 = vmatpush2.bf16.msra.mxu0 0
        %363 = vmatprep.subr.bf16.mxu0 0
        %364 = vmatpush2.bf16.msra.mxu0 0
        %365 = vmatprep.subr.bf16.mxu0 0
        %366 = vmatpush2.bf16.msra.mxu0 0
        %367 = vmatprep.subr.bf16.mxu0 0
        %368 = vmatpush2.bf16.msra.mxu0 0
        %369 = vmatprep.subr.bf16.mxu0 0
        %370 = vmatpush2.bf16.msra.mxu0 0
        %371 = vmatprep.subr.bf16.mxu0 0
        %372 = vmatpush2.bf16.msra.mxu0 0
        %373 = vmatprep.subr.bf16.mxu0 0
        %374 = vmatpush2.bf16.msra.mxu0 0
        %375 = vmatprep.subr.bf16.mxu0 0
        %376 = vmatpush2.bf16.msra.mxu0 0
        %377 = vmatprep.mubr.bf16.mxu0 0
        %378 = vmatmul.mubr.bf16.gmra.mxu0 %v340
        %v379 = vpop.f32.mrf.mxu0
        %v380 = vadd.f32 0.0, %v379
        %v381 = vpop.f32.mrf.mxu0
        %v382 = vpop.f32.mrf.mxu0
        %v383 = vadd.f32 0.0, %v382
        %v384 = vpop.f32.mrf.mxu0
        %385 = vmatprep.mubr.bf16.mxu0 0
        %386 = vmatmul.mubr.bf16.gmra.mxu0 %v343
        %v387 = vpop.f32.mrf.mxu0
        %v388 = vadd.f32 0.0, %v387
        %v389 = vpop.f32.mrf.mxu0
        %v390 = vpop.f32.mrf.mxu0
        %v391 = vpop.f32.mrf.mxu0
        %392 = vdwg.mxu0
        %393 = vst.msk [vmem:[%s235] sm:$0xff] %vm242, %v380
        %394 = vst.msk [vmem:[%s235 + $0x8] sm:$0xff] %vm242, %v383
        %395 = vst.msk [vmem:[%s235 + $0x10] sm:$0x1] %vm249, %v388
        %s396 = sand.u32 %s117, 1
        %s397 = scalar_lea.sflag [#allocation3], %s396
        %s398 = sand.u32 %s117, 1
        %s399 = smul.addr %s398, 24
        %s400 = scalar_lea.vmem [#allocation2], %s399
        %p401 = scmp.lt.s32.totalorder %s20, 1
        %s402 = scalar_select %p401, %s20, 1
        %s403 = smul.addr %s402, 3
        %s404 = smul.addr %s403, 8
        %s405 = scalar_lea.vmem %s5, %s404
        // Predicated region
        $region37: #{clip_forward.7} parent=35 // pred_check
          %p406 = pneg %p127
        $region38: #{clip_forward.7} parent=35 // pred_check_branch
          %408 = sbr.rel (%p406) target = $region40
        $region39: #{clip_forward.7} parent=35 // pred_region
          %s410 = ssub.s32 384, 384
          %411 = vsyncadd %s397, %s410
          %s412 = smul.addr %s20, 3
          %s413 = smul.addr %s412, 128
          %s414 = scalar_lea.hbm %s4, %s413
          %s415 = sshll.u32 %s400, 4
          %s416 = int_to_ptr.vmem [resolvable:$true] %s415
          %421 = dma.vmem_to_hbm [thread:$0]  %s416, 384, %s414, %s397, 128, 128, 8
        $region40: #{clip_forward.7} parent=35 // pred_fallthru
          _
        // Predicated region
        $region41: #{clip_forward.7} parent=35 // pred_check
          %p422 = pneg %p153
        $region42: #{clip_forward.7} parent=35 // pred_check_branch
          %424 = sbr.rel (%p422) target = $region44
        $region43: #{clip_forward.7} parent=35 // pred_region
          _
        $region44: #{clip_forward.7} parent=35 // pred_fallthru
          _
      $region36: #{clip_forward.7} parent=5 // pred_fallthru
        _
      %p425 = scmp.le.s32.totalorder 2, %s15
      // Predicated region
      $region45: #{clip_forward.7} parent=5 // pred_check
        %p426 = pneg %p425
      $region46: #{clip_forward.7} parent=5 // pred_check_branch
        %428 = sbr.rel (%p426) target = $region48
      $region47: #{clip_forward.7} parent=5 // pred_region
        %s429 = ssub.s32 %s15, 2
        // Predicated region
        $region49: #{clip_forward.7} parent=47 // pred_check
          %p430 = pneg %p133
        $region50: #{clip_forward.7} parent=47 // pred_check_branch
          %432 = sbr.rel (%p430) target = $region52
        $region51: #{clip_forward.7} parent=47 // pred_region
          %s433 = sand.u32 %s118, 1
          %s434 = scalar_lea.sflag [#allocation3], %s433
          %s435 = sand.u32 %s118, 1
          %s436 = smul.addr %s435, 24
          %s437 = scalar_lea.vmem [#allocation2], %s436
          %438 = dma.done %s434, 384
        $region52: #{clip_forward.7} parent=47 // pred_fallthru
          _
        // Predicated region
        $region53: #{clip_forward.7} parent=47 // pred_check
          %p439 = pneg %p159
        $region54: #{clip_forward.7} parent=47 // pred_check_branch
          %441 = sbr.rel (%p439) target = $region56
        $region55: #{clip_forward.7} parent=47 // pred_region
          %p442 = scmp.lt.s32.totalorder %s21, 1
          %s443 = scalar_select %p442, %s21, 1
          %s444 = smul.addr %s443, 3
          %s445 = smul.addr %s444, 8
          %s446 = scalar_lea.vmem %s5, %s445
        $region56: #{clip_forward.7} parent=47 // pred_fallthru
          _
      $region48: #{clip_forward.7} parent=5 // pred_fallthru
        _
    $region6: #{clip_forward.7} parent=1 // loop_footer
      %s19 = sadd.s32 1, %s15
    $region7: #{clip_forward.7} parent=1 // loop_footer_branch
      %14 = sbr.rel target = $region3
    $region8: #{clip_forward.7} parent=1 // loop_exit
      _
    %447 = vsyncpa [#allocation3], 1
    %s448 = scalar_lea.sflag [#allocation3], 1
    %449 = vsyncpa %s448, 1

// kernel: clip_forward.6
$region0: #{clip_forward.6}
  #allocation0 [shape = 'u32[]', space=smem, size = 0x4, offset = 0x4, fixed_abs, tag = 'smem constant byte address 0x4 - core index']
  #allocation1 [shape = 'u32[144,128]{1,0:T(1,128)}', space=vmem, size = 0x12000, scoped, tag = 'internal scratch']
  %s0 = inlined_call_operand.vmem [shape: f32[2,17,64], index: 0, kind: input, shape index: {}]
  %s1 = inlined_call_operand.vmem [shape: f32[12,1,64], index: 1, kind: input, shape index: {}]
  %s2 = inlined_call_operand.vmem [shape: f32[12,1,64], index: 2, kind: input, shape index: {}]
  %s3 = inlined_call_operand.vmem [shape: bf16[12,3,1,64,64], index: 3, kind: input, shape index: {}]
  %s4 = inlined_call_operand.vmem [shape: f32[12,3,1,1,64], index: 4, kind: input, shape index: {}]
  %s5 = inlined_call_operand.vmem [shape: bf16[12,1,64,64], index: 5, kind: input, shape index: {}]
  %s6 = inlined_call_operand.vmem [shape: f32[12,1,64], index: 6, kind: input, shape index: {}]
  %s7 = inlined_call_operand.vmem [shape: f32[12,1,64], index: 7, kind: input, shape index: {}]
  %s8 = inlined_call_operand.vmem [shape: f32[12,1,64], index: 8, kind: input, shape index: {}]
  %s9 = inlined_call_operand.vmem [shape: bf16[12,64,256], index: 9, kind: input, shape index: {}]
  %s10 = inlined_call_operand.vmem [shape: f32[12,1,256], index: 10, kind: input, shape index: {}]
  %s11 = inlined_call_operand.vmem [shape: bf16[12,256,64], index: 11, kind: input, shape index: {}]
  %s12 = inlined_call_operand.vmem [shape: f32[12,1,64], index: 12, kind: input, shape index: {}]
  %s13 = inlined_call_operand.vmem [shape: f32[2,17,64], index: 13, kind: output, shape index: {0}]
  %s14 = inlined_call_operand.hbm [shape: f32[2,17,64], index: 14, kind: output, shape index: {1}]
  %15 = xla_tuple %s13, %s14
  %s16 = sld [smem:[#allocation0]]
  $region101: #{clip_forward.6} parent=0
    _
  %s18 = ssub.s32 1, %s16
  %s19 = scalar_select 0, %s18, %s16
  $region1: #{clip_forward.6} parent=0
    #allocation2 [shape = 'u8[24576]{0}', space=vmem, size = 0x6000, scoped, tag = 'output window, operand 1']
    #allocation3 [shape = 's32[2]{0}', space=sflag, size = 0x8, scoped, tag = 'scoped memory for clip_forward.6']
    %20 = vsyncpa [#allocation3], 0
    %s21 = scalar_lea.sflag [#allocation3], 1
    %22 = vsyncpa %s21, 0
    loop: start=0, step=1, limit=26
    $region2: #{clip_forward.6} parent=1 // loop_pre_header
      _
    $region3: #{clip_forward.6} parent=1 // loop_header
      %s24 = sphi 0, %s28
      %p25 = scmp.ge.s32.totalorder %s24, 26
      %s31 = sphi 0, %s43
      %s32 = sphi 0, %s39
      %s33 = sphi 0, %s31
      %s34 = sphi 0, %s32
      %s35 = sphi 0, %s33
      %s36 = sphi 0, %s34
      %s46 = sphi 0, %s48
      %s49 = sphi 0, %s46
      %s50 = sphi 0, %s49
      %s66 = sphi 0, %s50
      %s72 = sphi 0, %s74
      %s75 = sphi 0, %s72
      %s76 = sphi 0, %s75
      %s92 = sphi 0, %s76
      %s98 = sphi 0, %s100
      %s101 = sphi 0, %s98
      %s102 = sphi 0, %s101
      %s118 = sphi 0, %s102
      %s124 = sphi 0, %s126
      %s127 = sphi 0, %s124
      %s128 = sphi 0, %s127
      %s144 = sphi 0, %s128
      %s150 = sphi 0, %s152
      %s153 = sphi 0, %s150
      %s154 = sphi 0, %s153
      %s170 = sphi 0, %s154
      %s176 = sphi 0, %s178
      %s179 = sphi 0, %s176
      %s180 = sphi 0, %s179
      %s196 = sphi 0, %s180
      %s202 = sphi 0, %s204
      %s205 = sphi 0, %s202
      %s206 = sphi 0, %s205
      %s222 = sphi 0, %s206
      %s228 = sphi 0, %s230
      %s231 = sphi 0, %s228
      %s232 = sphi 0, %s231
      %s248 = sphi 0, %s232
      %s254 = sphi 0, %s256
      %s257 = sphi 0, %s254
      %s258 = sphi 0, %s257
      %s274 = sphi 0, %s258
      %s280 = sphi 0, %s282
      %s283 = sphi 0, %s280
      %s284 = sphi 0, %s283
      %s300 = sphi 0, %s284
      %s306 = sphi 0, %s308
      %s309 = sphi 0, %s306
      %s310 = sphi 0, %s309
      %s326 = sphi 0, %s310
      %s332 = sphi 0, %s334
      %s335 = sphi 0, %s332
      %s336 = sphi 0, %s335
      %s352 = sphi 0, %s336
      %s358 = sphi 0, %s360
      %s361 = sphi 0, %s358
      %s362 = sphi 0, %s361
      %s378 = sphi 0, %s362
      %s384 = sphi 0, %s386
      %s387 = sphi 0, %s384
      %s388 = sphi 0, %s387
      %s404 = sphi 0, %s388
      %s410 = sphi 0, %s412
      %s413 = sphi 0, %s410
      %s414 = sphi 0, %s413
      %s430 = sphi 0, %s414
    $region4: #{clip_forward.6} parent=1 // loop_header_branch
      %27 = sbr.rel (%p25) target = $region8
    $region5: #{clip_forward.6} parent=1 // loop_body
      %s29 = ssub.s32 %s24, 1
      %s30 = ssub.s32 %s24, 2
      %s37 = sadd.s32 1, %s32
      %p38 = scmp.ge.s32.totalorder %s37, 12
      %s39 = scalar_select %p38, 0, %s37
      %s40 = sadd.s32 1, %s31
      %s41 = scalar_select %p38, %s40, %s31
      %p42 = scmp.ge.s32.totalorder %s41, 2
      %s43 = scalar_select %p42, 0, %s41
      %s44 = ssub.s32 %s31, %s43
      %p45 = scmp.eq.s32.totalorder %s44, 0
      %s47 = sadd.s32 %s46, 1
      %s48 = scalar_select %p45, %s46, %s47
      %p51 = pneg %p45
      %p52 = scmp.eq.s32.totalorder %s24, 23
      %p53 = por %p51, %p52
      %p54 = scmp.ne.s32.totalorder %s46, %s49
      %p55 = scmp.eq.s32.totalorder %s24, 0
      %p56 = por %p54, %p55
      %p57 = scmp.ne.s32.totalorder %s46, %s49
      %p58 = scmp.eq.s32.totalorder %s29, 23
      %p59 = por %p57, %p58
      %p60 = scmp.ne.s32.totalorder %s49, %s50
      %p61 = scmp.eq.s32.totalorder %s29, 0
      %p62 = por %p60, %p61
      %p63 = scmp.ne.s32.totalorder %s49, %s50
      %p64 = scmp.eq.s32.totalorder %s30, 23
      %p65 = por %p63, %p64
      %p67 = scmp.ne.s32.totalorder %s50, %s66
      %p68 = scmp.eq.s32.totalorder %s30, 0
      %p69 = por %p67, %p68
      %s70 = ssub.s32 %s32, %s39
      %p71 = scmp.eq.s32.totalorder %s70, 0
      %s73 = sadd.s32 %s72, 1
      %s74 = scalar_select %p71, %s72, %s73
      %p77 = pneg %p71
      %p78 = scmp.eq.s32.totalorder %s24, 23
      %p79 = por %p77, %p78
      %p80 = scmp.ne.s32.totalorder %s72, %s75
      %p81 = scmp.eq.s32.totalorder %s24, 0
      %p82 = por %p80, %p81
      %p83 = scmp.ne.s32.totalorder %s72, %s75
      %p84 = scmp.eq.s32.totalorder %s29, 23
      %p85 = por %p83, %p84
      %p86 = scmp.ne.s32.totalorder %s75, %s76
      %p87 = scmp.eq.s32.totalorder %s29, 0
      %p88 = por %p86, %p87
      %p89 = scmp.ne.s32.totalorder %s75, %s76
      %p90 = scmp.eq.s32.totalorder %s30, 23
      %p91 = por %p89, %p90
      %p93 = scmp.ne.s32.totalorder %s76, %s92
      %p94 = scmp.eq.s32.totalorder %s30, 0
      %p95 = por %p93, %p94
      %s96 = ssub.s32 %s32, %s39
      %p97 = scmp.eq.s32.totalorder %s96, 0
      %s99 = sadd.s32 %s98, 1
      %s100 = scalar_select %p97, %s98, %s99
      %p103 = pneg %p97
      %p104 = scmp.eq.s32.totalorder %s24, 23
      %p105 = por %p103, %p104
      %p106 = scmp.ne.s32.totalorder %s98, %s101
      %p107 = scmp.eq.s32.totalorder %s24, 0
      %p108 = por %p106, %p107
      %p109 = scmp.ne.s32.totalorder %s98, %s101
      %p110 = scmp.eq.s32.totalorder %s29, 23
      %p111 = por %p109, %p110
      %p112 = scmp.ne.s32.totalorder %s101, %s102
      %p113 = scmp.eq.s32.totalorder %s29, 0
      %p114 = por %p112, %p113
      %p115 = scmp.ne.s32.totalorder %s101, %s102
      %p116 = scmp.eq.s32.totalorder %s30, 23
      %p117 = por %p115, %p116
      %p119 = scmp.ne.s32.totalorder %s102, %s118
      %p120 = scmp.eq.s32.totalorder %s30, 0
      %p121 = por %p119, %p120
      %s122 = ssub.s32 %s32, %s39
      %p123 = scmp.eq.s32.totalorder %s122, 0
      %s125 = sadd.s32 %s124, 1
      %s126 = scalar_select %p123, %s124, %s125
      %p129 = pneg %p123
      %p130 = scmp.eq.s32.totalorder %s24, 23
      %p131 = por %p129, %p130
      %p132 = scmp.ne.s32.totalorder %s124, %s127
      %p133 = scmp.eq.s32.totalorder %s24, 0
      %p134 = por %p132, %p133
      %p135 = scmp.ne.s32.totalorder %s124, %s127
      %p136 = scmp.eq.s32.totalorder %s29, 23
      %p137 = por %p135, %p136
      %p138 = scmp.ne.s32.totalorder %s127, %s128
      %p139 = scmp.eq.s32.totalorder %s29, 0
      %p140 = por %p138, %p139
      %p141 = scmp.ne.s32.totalorder %s127, %s128
      %p142 = scmp.eq.s32.totalorder %s30, 23
      %p143 = por %p141, %p142
      %p145 = scmp.ne.s32.totalorder %s128, %s144
      %p146 = scmp.eq.s32.totalorder %s30, 0
      %p147 = por %p145, %p146
      %s148 = ssub.s32 %s32, %s39
      %p149 = scmp.eq.s32.totalorder %s148, 0
      %s151 = sadd.s32 %s150, 1
      %s152 = scalar_select %p149, %s150, %s151
      %p155 = pneg %p149
      %p156 = scmp.eq.s32.totalorder %s24, 23
      %p157 = por %p155, %p156
      %p158 = scmp.ne.s32.totalorder %s150, %s153
      %p159 = scmp.eq.s32.totalorder %s24, 0
      %p160 = por %p158, %p159
      %p161 = scmp.ne.s32.totalorder %s150, %s153
      %p162 = scmp.eq.s32.totalorder %s29, 23
      %p163 = por %p161, %p162
      %p164 = scmp.ne.s32.totalorder %s153, %s154
      %p165 = scmp.eq.s32.totalorder %s29, 0
      %p166 = por %p164, %p165
      %p167 = scmp.ne.s32.totalorder %s153, %s154
      %p168 = scmp.eq.s32.totalorder %s30, 23
      %p169 = por %p167, %p168
      %p171 = scmp.ne.s32.totalorder %s154, %s170
      %p172 = scmp.eq.s32.totalorder %s30, 0
      %p173 = por %p171, %p172
      %s174 = ssub.s32 %s32, %s39
      %p175 = scmp.eq.s32.totalorder %s174, 0
      %s177 = sadd.s32 %s176, 1
      %s178 = scalar_select %p175, %s176, %s177
      %p181 = pneg %p175
      %p182 = scmp.eq.s32.totalorder %s24, 23
      %p183 = por %p181, %p182
      %p184 = scmp.ne.s32.totalorder %s176, %s179
      %p185 = scmp.eq.s32.totalorder %s24, 0
      %p186 = por %p184, %p185
      %p187 = scmp.ne.s32.totalorder %s176, %s179
      %p188 = scmp.eq.s32.totalorder %s29, 23
      %p189 = por %p187, %p188
      %p190 = scmp.ne.s32.totalorder %s179, %s180
      %p191 = scmp.eq.s32.totalorder %s29, 0
      %p192 = por %p190, %p191
      %p193 = scmp.ne.s32.totalorder %s179, %s180
      %p194 = scmp.eq.s32.totalorder %s30, 23
      %p195 = por %p193, %p194
      %p197 = scmp.ne.s32.totalorder %s180, %s196
      %p198 = scmp.eq.s32.totalorder %s30, 0
      %p199 = por %p197, %p198
      %s200 = ssub.s32 %s32, %s39
      %p201 = scmp.eq.s32.totalorder %s200, 0
      %s203 = sadd.s32 %s202, 1
      %s204 = scalar_select %p201, %s202, %s203
      %p207 = pneg %p201
      %p208 = scmp.eq.s32.totalorder %s24, 23
      %p209 = por %p207, %p208
      %p210 = scmp.ne.s32.totalorder %s202, %s205
      %p211 = scmp.eq.s32.totalorder %s24, 0
      %p212 = por %p210, %p211
      %p213 = scmp.ne.s32.totalorder %s202, %s205
      %p214 = scmp.eq.s32.totalorder %s29, 23
      %p215 = por %p213, %p214
      %p216 = scmp.ne.s32.totalorder %s205, %s206
      %p217 = scmp.eq.s32.totalorder %s29, 0
      %p218 = por %p216, %p217
      %p219 = scmp.ne.s32.totalorder %s205, %s206
      %p220 = scmp.eq.s32.totalorder %s30, 23
      %p221 = por %p219, %p220
      %p223 = scmp.ne.s32.totalorder %s206, %s222
      %p224 = scmp.eq.s32.totalorder %s30, 0
      %p225 = por %p223, %p224
      %s226 = ssub.s32 %s32, %s39
      %p227 = scmp.eq.s32.totalorder %s226, 0
      %s229 = sadd.s32 %s228, 1
      %s230 = scalar_select %p227, %s228, %s229
      %p233 = pneg %p227
      %p234 = scmp.eq.s32.totalorder %s24, 23
      %p235 = por %p233, %p234
      %p236 = scmp.ne.s32.totalorder %s228, %s231
      %p237 = scmp.eq.s32.totalorder %s24, 0
      %p238 = por %p236, %p237
      %p239 = scmp.ne.s32.totalorder %s228, %s231
      %p240 = scmp.eq.s32.totalorder %s29, 23
      %p241 = por %p239, %p240
      %p242 = scmp.ne.s32.totalorder %s231, %s232
      %p243 = scmp.eq.s32.totalorder %s29, 0
      %p244 = por %p242, %p243
      %p245 = scmp.ne.s32.totalorder %s231, %s232
      %p246 = scmp.eq.s32.totalorder %s30, 23
      %p247 = por %p245, %p246
      %p249 = scmp.ne.s32.totalorder %s232, %s248
      %p250 = scmp.eq.s32.totalorder %s30, 0
      %p251 = por %p249, %p250
      %s252 = ssub.s32 %s32, %s39
      %p253 = scmp.eq.s32.totalorder %s252, 0
      %s255 = sadd.s32 %s254, 1
      %s256 = scalar_select %p253, %s254, %s255
      %p259 = pneg %p253
      %p260 = scmp.eq.s32.totalorder %s24, 23
      %p261 = por %p259, %p260
      %p262 = scmp.ne.s32.totalorder %s254, %s257
      %p263 = scmp.eq.s32.totalorder %s24, 0
      %p264 = por %p262, %p263
      %p265 = scmp.ne.s32.totalorder %s254, %s257
      %p266 = scmp.eq.s32.totalorder %s29, 23
      %p267 = por %p265, %p266
      %p268 = scmp.ne.s32.totalorder %s257, %s258
      %p269 = scmp.eq.s32.totalorder %s29, 0
      %p270 = por %p268, %p269
      %p271 = scmp.ne.s32.totalorder %s257, %s258
      %p272 = scmp.eq.s32.totalorder %s30, 23
      %p273 = por %p271, %p272
      %p275 = scmp.ne.s32.totalorder %s258, %s274
      %p276 = scmp.eq.s32.totalorder %s30, 0
      %p277 = por %p275, %p276
      %s278 = ssub.s32 %s32, %s39
      %p279 = scmp.eq.s32.totalorder %s278, 0
      %s281 = sadd.s32 %s280, 1
      %s282 = scalar_select %p279, %s280, %s281
      %p285 = pneg %p279
      %p286 = scmp.eq.s32.totalorder %s24, 23
      %p287 = por %p285, %p286
      %p288 = scmp.ne.s32.totalorder %s280, %s283
      %p289 = scmp.eq.s32.totalorder %s24, 0
      %p290 = por %p288, %p289
      %p291 = scmp.ne.s32.totalorder %s280, %s283
      %p292 = scmp.eq.s32.totalorder %s29, 23
      %p293 = por %p291, %p292
      %p294 = scmp.ne.s32.totalorder %s283, %s284
      %p295 = scmp.eq.s32.totalorder %s29, 0
      %p296 = por %p294, %p295
      %p297 = scmp.ne.s32.totalorder %s283, %s284
      %p298 = scmp.eq.s32.totalorder %s30, 23
      %p299 = por %p297, %p298
      %p301 = scmp.ne.s32.totalorder %s284, %s300
      %p302 = scmp.eq.s32.totalorder %s30, 0
      %p303 = por %p301, %p302
      %s304 = ssub.s32 %s32, %s39
      %p305 = scmp.eq.s32.totalorder %s304, 0
      %s307 = sadd.s32 %s306, 1
      %s308 = scalar_select %p305, %s306, %s307
      %p311 = pneg %p305
      %p312 = scmp.eq.s32.totalorder %s24, 23
      %p313 = por %p311, %p312
      %p314 = scmp.ne.s32.totalorder %s306, %s309
      %p315 = scmp.eq.s32.totalorder %s24, 0
      %p316 = por %p314, %p315
      %p317 = scmp.ne.s32.totalorder %s306, %s309
      %p318 = scmp.eq.s32.totalorder %s29, 23
      %p319 = por %p317, %p318
      %p320 = scmp.ne.s32.totalorder %s309, %s310
      %p321 = scmp.eq.s32.totalorder %s29, 0
      %p322 = por %p320, %p321
      %p323 = scmp.ne.s32.totalorder %s309, %s310
      %p324 = scmp.eq.s32.totalorder %s30, 23
      %p325 = por %p323, %p324
      %p327 = scmp.ne.s32.totalorder %s310, %s326
      %p328 = scmp.eq.s32.totalorder %s30, 0
      %p329 = por %p327, %p328
      %s330 = ssub.s32 %s32, %s39
      %p331 = scmp.eq.s32.totalorder %s330, 0
      %s333 = sadd.s32 %s332, 1
      %s334 = scalar_select %p331, %s332, %s333
      %p337 = pneg %p331
      %p338 = scmp.eq.s32.totalorder %s24, 23
      %p339 = por %p337, %p338
      %p340 = scmp.ne.s32.totalorder %s332, %s335
      %p341 = scmp.eq.s32.totalorder %s24, 0
      %p342 = por %p340, %p341
      %p343 = scmp.ne.s32.totalorder %s332, %s335
      %p344 = scmp.eq.s32.totalorder %s29, 23
      %p345 = por %p343, %p344
      %p346 = scmp.ne.s32.totalorder %s335, %s336
      %p347 = scmp.eq.s32.totalorder %s29, 0
      %p348 = por %p346, %p347
      %p349 = scmp.ne.s32.totalorder %s335, %s336
      %p350 = scmp.eq.s32.totalorder %s30, 23
      %p351 = por %p349, %p350
      %p353 = scmp.ne.s32.totalorder %s336, %s352
      %p354 = scmp.eq.s32.totalorder %s30, 0
      %p355 = por %p353, %p354
      %s356 = ssub.s32 %s32, %s39
      %p357 = scmp.eq.s32.totalorder %s356, 0
      %s359 = sadd.s32 %s358, 1
      %s360 = scalar_select %p357, %s358, %s359
      %p363 = pneg %p357
      %p364 = scmp.eq.s32.totalorder %s24, 23
      %p365 = por %p363, %p364
      %p366 = scmp.ne.s32.totalorder %s358, %s361
      %p367 = scmp.eq.s32.totalorder %s24, 0
      %p368 = por %p366, %p367
      %p369 = scmp.ne.s32.totalorder %s358, %s361
      %p370 = scmp.eq.s32.totalorder %s29, 23
      %p371 = por %p369, %p370
      %p372 = scmp.ne.s32.totalorder %s361, %s362
      %p373 = scmp.eq.s32.totalorder %s29, 0
      %p374 = por %p372, %p373
      %p375 = scmp.ne.s32.totalorder %s361, %s362
      %p376 = scmp.eq.s32.totalorder %s30, 23
      %p377 = por %p375, %p376
      %p379 = scmp.ne.s32.totalorder %s362, %s378
      %p380 = scmp.eq.s32.totalorder %s30, 0
      %p381 = por %p379, %p380
      %s382 = ssub.s32 %s31, %s43
      %p383 = scmp.eq.s32.totalorder %s382, 0
      %s385 = sadd.s32 %s384, 1
      %s386 = scalar_select %p383, %s384, %s385
      %p389 = pneg %p383
      %p390 = scmp.eq.s32.totalorder %s24, 23
      %p391 = por %p389, %p390
      %p392 = scmp.ne.s32.totalorder %s384, %s387
      %p393 = scmp.eq.s32.totalorder %s24, 0
      %p394 = por %p392, %p393
      %p395 = scmp.ne.s32.totalorder %s384, %s387
      %p396 = scmp.eq.s32.totalorder %s29, 23
      %p397 = por %p395, %p396
      %p398 = scmp.ne.s32.totalorder %s387, %s388
      %p399 = scmp.eq.s32.totalorder %s29, 0
      %p400 = por %p398, %p399
      %p401 = scmp.ne.s32.totalorder %s387, %s388
      %p402 = scmp.eq.s32.totalorder %s30, 23
      %p403 = por %p401, %p402
      %p405 = scmp.ne.s32.totalorder %s388, %s404
      %p406 = scmp.eq.s32.totalorder %s30, 0
      %p407 = por %p405, %p406
      %s408 = ssub.s32 %s31, %s43
      %p409 = scmp.eq.s32.totalorder %s408, 0
      %s411 = sadd.s32 %s410, 1
      %s412 = scalar_select %p409, %s410, %s411
      %p415 = pneg %p409
      %p416 = scmp.eq.s32.totalorder %s24, 23
      %p417 = por %p415, %p416
      %p418 = scmp.ne.s32.totalorder %s410, %s413
      %p419 = scmp.eq.s32.totalorder %s24, 0
      %p420 = por %p418, %p419
      %p421 = scmp.ne.s32.totalorder %s410, %s413
      %p422 = scmp.eq.s32.totalorder %s29, 23
      %p423 = por %p421, %p422
      %p424 = scmp.ne.s32.totalorder %s413, %s414
      %p425 = scmp.eq.s32.totalorder %s29, 0
      %p426 = por %p424, %p425
      %p427 = scmp.ne.s32.totalorder %s413, %s414
      %p428 = scmp.eq.s32.totalorder %s30, 23
      %p429 = por %p427, %p428
      %p431 = scmp.ne.s32.totalorder %s414, %s430
      %p432 = scmp.eq.s32.totalorder %s30, 0
      %p433 = por %p431, %p432
      %p434 = scmp.le.s32.totalorder 1, %s24
      %p435 = scmp.lt.s32.totalorder %s24, 25
      %p436 = pnand %p434, %p435
      %p437 = pneg %p436
      // Predicated region
      $region9: #{clip_forward.6} parent=5 // pred_check
        _
      $region10: #{clip_forward.6} parent=5 // pred_check_branch
        %439 = sbr.rel (%p436) target = $region12
      $region11: #{clip_forward.6} parent=5 // pred_region
        %s440 = ssub.s32 %s24, 1
      $region12: #{clip_forward.6} parent=5 // pred_fallthru
        _
      %p441 = scmp.lt.s32.totalorder %s24, 24
      // Predicated region
      $region13: #{clip_forward.6} parent=5 // pred_check
        %p442 = pneg %p441
      $region14: #{clip_forward.6} parent=5 // pred_check_branch
        %444 = sbr.rel (%p442) target = $region16
      $region15: #{clip_forward.6} parent=5 // pred_region
        // Predicated region
        $region17: #{clip_forward.6} parent=15 // pred_check
          %p445 = pneg %p56
        $region18: #{clip_forward.6} parent=15 // pred_check_branch
          %447 = sbr.rel (%p445) target = $region20
        $region19: #{clip_forward.6} parent=15 // pred_region
          %p448 = scmp.lt.s32.totalorder %s31, 1
          %s449 = scalar_select %p448, %s31, 1
          %s450 = smul.addr %s449, 3
          %s451 = smul.addr %s450, 8
          %s452 = scalar_lea.vmem %s0, %s451
        $region20: #{clip_forward.6} parent=15 // pred_fallthru
          _
        // Predicated region
        $region21: #{clip_forward.6} parent=15 // pred_check
          %p453 = pneg %p82
        $region22: #{clip_forward.6} parent=15 // pred_check_branch
          %455 = sbr.rel (%p453) target = $region24
        $region23: #{clip_forward.6} parent=15 // pred_region
          %p456 = scmp.lt.s32.totalorder %s32, 11
          %s457 = scalar_select %p456, %s32, 11
          %s458 = scalar_lea.vmem %s1, %s457
        $region24: #{clip_forward.6} parent=15 // pred_fallthru
          _
        // Predicated region
        $region25: #{clip_forward.6} parent=15 // pred_check
          %p459 = pneg %p108
        $region26: #{clip_forward.6} parent=15 // pred_check_branch
          %461 = sbr.rel (%p459) target = $region28
        $region27: #{clip_forward.6} parent=15 // pred_region
          %p462 = scmp.lt.s32.totalorder %s32, 11
          %s463 = scalar_select %p462, %s32, 11
          %s464 = scalar_lea.vmem %s2, %s463
        $region28: #{clip_forward.6} parent=15 // pred_fallthru
          _
        // Predicated region
        $region29: #{clip_forward.6} parent=15 // pred_check
          %p465 = pneg %p134
        $region30: #{clip_forward.6} parent=15 // pred_check_branch
          %467 = sbr.rel (%p465) target = $region32
        $region31: #{clip_forward.6} parent=15 // pred_region
          %p468 = scmp.lt.s32.totalorder %s32, 11
          %s469 = scalar_select %p468, %s32, 11
          %s470 = smul.addr %s469, 24
          %s471 = smul.addr %s470, 4
          %s472 = scalar_lea.vmem %s3, %s471
        $region32: #{clip_forward.6} parent=15 // pred_fallthru
          _
        // Predicated region
        $region33: #{clip_forward.6} parent=15 // pred_check
          %p473 = pneg %p160
        $region34: #{clip_forward.6} parent=15 // pred_check_branch
          %475 = sbr.rel (%p473) target = $region36
        $region35: #{clip_forward.6} parent=15 // pred_region
          %p476 = scmp.lt.s32.totalorder %s32, 11
          %s477 = scalar_select %p476, %s32, 11
          %s478 = smul.addr %s477, 3
          %s479 = scalar_lea.vmem %s4, %s478
        $region36: #{clip_forward.6} parent=15 // pred_fallthru
          _
        // Predicated region
        $region37: #{clip_forward.6} parent=15 // pred_check
          %p480 = pneg %p186
        $region38: #{clip_forward.6} parent=15 // pred_check_branch
          %482 = sbr.rel (%p480) target = $region40
        $region39: #{clip_forward.6} parent=15 // pred_region
          %p483 = scmp.lt.s32.totalorder %s32, 11
          %s484 = scalar_select %p483, %s32, 11
          %s485 = smul.addr %s484, 8
          %s486 = smul.addr %s485, 4
          %s487 = scalar_lea.vmem %s5, %s486
        $region40: #{clip_forward.6} parent=15 // pred_fallthru
          _
        // Predicated region
        $region41: #{clip_forward.6} parent=15 // pred_check
          %p488 = pneg %p212
        $region42: #{clip_forward.6} parent=15 // pred_check_branch
          %490 = sbr.rel (%p488) target = $region44
        $region43: #{clip_forward.6} parent=15 // pred_region
          %p491 = scmp.lt.s32.totalorder %s32, 11
          %s492 = scalar_select %p491, %s32, 11
          %s493 = scalar_lea.vmem %s6, %s492
        $region44: #{clip_forward.6} parent=15 // pred_fallthru
          _
        // Predicated region
        $region45: #{clip_forward.6} parent=15 // pred_check
          %p494 = pneg %p238
        $region46: #{clip_forward.6} parent=15 // pred_check_branch
          %496 = sbr.rel (%p494) target = $region48
        $region47: #{clip_forward.6} parent=15 // pred_region
          %p497 = scmp.lt.s32.totalorder %s32, 11
          %s498 = scalar_select %p497, %s32, 11
          %s499 = scalar_lea.vmem %s7, %s498
        $region48: #{clip_forward.6} parent=15 // pred_fallthru
          _
        // Predicated region
        $region49: #{clip_forward.6} parent=15 // pred_check
          %p500 = pneg %p264
        $region50: #{clip_forward.6} parent=15 // pred_check_branch
          %502 = sbr.rel (%p500) target = $region52
        $region51: #{clip_forward.6} parent=15 // pred_region
          %p503 = scmp.lt.s32.totalorder %s32, 11
          %s504 = scalar_select %p503, %s32, 11
          %s505 = scalar_lea.vmem %s8, %s504
        $region52: #{clip_forward.6} parent=15 // pred_fallthru
          _
        // Predicated region
        $region53: #{clip_forward.6} parent=15 // pred_check
          %p506 = pneg %p290
        $region54: #{clip_forward.6} parent=15 // pred_check_branch
          %508 = sbr.rel (%p506) target = $region56
        $region55: #{clip_forward.6} parent=15 // pred_region
          %p509 = scmp.lt.s32.totalorder %s32, 11
          %s510 = scalar_select %p509, %s32, 11
          %s511 = smul.addr %s510, 16
          %s512 = smul.addr %s511, 4
          %s513 = scalar_lea.vmem %s9, %s512
        $region56: #{clip_forward.6} parent=15 // pred_fallthru
          _
        // Predicated region
        $region57: #{clip_forward.6} parent=15 // pred_check
          %p514 = pneg %p316
        $region58: #{clip_forward.6} parent=15 // pred_check_branch
          %516 = sbr.rel (%p514) target = $region60
        $region59: #{clip_forward.6} parent=15 // pred_region
          %p517 = scmp.lt.s32.totalorder %s32, 11
          %s518 = scalar_select %p517, %s32, 11
          %s519 = smul.addr %s518, 2
          %s520 = scalar_lea.vmem %s10, %s519
        $region60: #{clip_forward.6} parent=15 // pred_fallthru
          _
        // Predicated region
        $region61: #{clip_forward.6} parent=15 // pred_check
          %p521 = pneg %p342
        $region62: #{clip_forward.6} parent=15 // pred_check_branch
          %523 = sbr.rel (%p521) target = $region64
        $region63: #{clip_forward.6} parent=15 // pred_region
          %p524 = scmp.lt.s32.totalorder %s32, 11
          %s525 = scalar_select %p524, %s32, 11
          %s526 = smul.addr %s525, 32
          %s527 = smul.addr %s526, 4
          %s528 = scalar_lea.vmem %s11, %s527
        $region64: #{clip_forward.6} parent=15 // pred_fallthru
          _
        // Predicated region
        $region65: #{clip_forward.6} parent=15 // pred_check
          %p529 = pneg %p368
        $region66: #{clip_forward.6} parent=15 // pred_check_branch
          %531 = sbr.rel (%p529) target = $region68
        $region67: #{clip_forward.6} parent=15 // pred_region
          %p532 = scmp.lt.s32.totalorder %s32, 11
          %s533 = scalar_select %p532, %s32, 11
          %s534 = scalar_lea.vmem %s12, %s533
        $region68: #{clip_forward.6} parent=15 // pred_fallthru
          _
      $region16: #{clip_forward.6} parent=5 // pred_fallthru
        _
      %p535 = scmp.le.s32.totalorder 1, %s24
      %p536 = scmp.lt.s32.totalorder %s24, 25
      %p537 = pnand %p535, %p536
      %p538 = pneg %p537
      // Predicated region
      $region69: #{clip_forward.6} parent=5 // pred_check
        _
      $region70: #{clip_forward.6} parent=5 // pred_check_branch
        %540 = sbr.rel (%p537) target = $region72
      $region71: #{clip_forward.6} parent=5 // pred_region
        %s541 = ssub.s32 %s24, 1
        %p542 = scmp.lt.s32.totalorder %s33, 1
        %s543 = scalar_select %p542, %s33, 1
        %s544 = smul.addr %s543, 3
        %s545 = smul.addr %s544, 8
        %s546 = scalar_lea.vmem %s0, %s545
        %p547 = pneg %p62
        %p548 = pneg %p59
        %p549 = scmp.lt.s32.totalorder %s34, 11
        %s550 = scalar_select %p549, %s34, 11
        %s551 = scalar_lea.vmem %s1, %s550
        %p552 = pneg %p88
        %p553 = pneg %p85
        %p554 = scmp.lt.s32.totalorder %s34, 11
        %s555 = scalar_select %p554, %s34, 11
        %s556 = scalar_lea.vmem %s2, %s555
        %p557 = pneg %p114
        %p558 = pneg %p111
        %p559 = scmp.lt.s32.totalorder %s34, 11
        %s560 = scalar_select %p559, %s34, 11
        %s561 = smul.addr %s560, 24
        %s562 = smul.addr %s561, 4
        %s563 = scalar_lea.vmem %s3, %s562
        %p564 = pneg %p140
        %p565 = pneg %p137
        %p566 = scmp.lt.s32.totalorder %s34, 11
        %s567 = scalar_select %p566, %s34, 11
        %s568 = smul.addr %s567, 3
        %s569 = scalar_lea.vmem %s4, %s568
        %p570 = pneg %p166
        %p571 = pneg %p163
        %p572 = scmp.lt.s32.totalorder %s34, 11
        %s573 = scalar_select %p572, %s34, 11
        %s574 = smul.addr %s573, 8
        %s575 = smul.addr %s574, 4
        %s576 = scalar_lea.vmem %s5, %s575
        %p577 = pneg %p192
        %p578 = pneg %p189
        %p579 = scmp.lt.s32.totalorder %s34, 11
        %s580 = scalar_select %p579, %s34, 11
        %s581 = scalar_lea.vmem %s6, %s580
        %p582 = pneg %p218
        %p583 = pneg %p215
        %p584 = scmp.lt.s32.totalorder %s34, 11
        %s585 = scalar_select %p584, %s34, 11
        %s586 = scalar_lea.vmem %s7, %s585
        %p587 = pneg %p244
        %p588 = pneg %p241
        %p589 = scmp.lt.s32.totalorder %s34, 11
        %s590 = scalar_select %p589, %s34, 11
        %s591 = scalar_lea.vmem %s8, %s590
        %p592 = pneg %p270
        %p593 = pneg %p267
        %p594 = scmp.lt.s32.totalorder %s34, 11
        %s595 = scalar_select %p594, %s34, 11
        %s596 = smul.addr %s595, 16
        %s597 = smul.addr %s596, 4
        %s598 = scalar_lea.vmem %s9, %s597
        %p599 = pneg %p296
        %p600 = pneg %p293
        %p601 = scmp.lt.s32.totalorder %s34, 11
        %s602 = scalar_select %p601, %s34, 11
        %s603 = smul.addr %s602, 2
        %s604 = scalar_lea.vmem %s10, %s603
        %p605 = pneg %p322
        %p606 = pneg %p319
        %p607 = scmp.lt.s32.totalorder %s34, 11
        %s608 = scalar_select %p607, %s34, 11
        %s609 = smul.addr %s608, 32
        %s610 = smul.addr %s609, 4
        %s611 = scalar_lea.vmem %s11, %s610
        %p612 = pneg %p348
        %p613 = pneg %p345
        %p614 = scmp.lt.s32.totalorder %s34, 11
        %s615 = scalar_select %p614, %s34, 11
        %s616 = scalar_lea.vmem %s12, %s615
        %p617 = pneg %p374
        %p618 = pneg %p371
        %p619 = pneg %p400
        %p620 = pneg %p397
        %p621 = scmp.lt.s32.totalorder %s33, 1
        %s622 = scalar_select %p621, %s33, 1
        %s623 = smul.addr %s622, 3
        %s624 = smul.addr %s623, 8
        %s625 = scalar_lea.vmem %s13, %s624
        %p626 = pneg %p426
        %p627 = pneg %p423
        %s628 = sand.u32 %s413, 1
        %s629 = scalar_lea.sflag [#allocation3], %s628
        %s630 = sand.u32 %s413, 1
        %s631 = smul.addr %s630, 24
        %s632 = scalar_lea.vmem [#allocation2], %s631
        %p633 = scmp.lt.s32.totalorder %s33, 1
        %s634 = scalar_select %p633, %s33, 1
        %s635 = smul.addr %s634, 3
        %s636 = smul.addr %s635, 8
        %s637 = scalar_lea.vmem %s0, %s636
        %p638 = scmp.lt.s32.totalorder %s34, 11
        %s639 = scalar_select %p638, %s34, 11
        %s640 = scalar_lea.vmem %s1, %s639
        %p641 = scmp.lt.s32.totalorder %s34, 11
        %s642 = scalar_select %p641, %s34, 11
        %s643 = scalar_lea.vmem %s2, %s642
        %p644 = scmp.lt.s32.totalorder %s34, 11
        %s645 = scalar_select %p644, %s34, 11
        %s646 = smul.addr %s645, 24
        %s647 = smul.addr %s646, 4
        %s648 = scalar_lea.vmem %s3, %s647
        %p649 = scmp.lt.s32.totalorder %s34, 11
        %s650 = scalar_select %p649, %s34, 11
        %s651 = smul.addr %s650, 3
        %s652 = scalar_lea.vmem %s4, %s651
        %p653 = scmp.lt.s32.totalorder %s34, 11
        %s654 = scalar_select %p653, %s34, 11
        %s655 = smul.addr %s654, 8
        %s656 = smul.addr %s655, 4
        %s657 = scalar_lea.vmem %s5, %s656
        %p658 = scmp.lt.s32.totalorder %s34, 11
        %s659 = scalar_select %p658, %s34, 11
        %s660 = scalar_lea.vmem %s6, %s659
        %p661 = scmp.lt.s32.totalorder %s34, 11
        %s662 = scalar_select %p661, %s34, 11
        %s663 = scalar_lea.vmem %s7, %s662
        %p664 = scmp.lt.s32.totalorder %s34, 11
        %s665 = scalar_select %p664, %s34, 11
        %s666 = scalar_lea.vmem %s8, %s665
        %p667 = scmp.lt.s32.totalorder %s34, 11
        %s668 = scalar_select %p667, %s34, 11
        %s669 = smul.addr %s668, 16
        %s670 = smul.addr %s669, 4
        %s671 = scalar_lea.vmem %s9, %s670
        %p672 = scmp.lt.s32.totalorder %s34, 11
        %s673 = scalar_select %p672, %s34, 11
        %s674 = smul.addr %s673, 2
        %s675 = scalar_lea.vmem %s10, %s674
        %p676 = scmp.lt.s32.totalorder %s34, 11
        %s677 = scalar_select %p676, %s34, 11
        %s678 = smul.addr %s677, 32
        %s679 = smul.addr %s678, 4
        %s680 = scalar_lea.vmem %s11, %s679
        %p681 = scmp.lt.s32.totalorder %s34, 11
        %s682 = scalar_select %p681, %s34, 11
        %s683 = scalar_lea.vmem %s12, %s682
        %p684 = scmp.lt.s32.totalorder %s33, 1
        %s685 = scalar_select %p684, %s33, 1
        %s686 = smul.addr %s685, 3
        %s687 = smul.addr %s686, 8
        %s688 = scalar_lea.vmem %s13, %s687
        %p690 = scmp.eq.s32.totalorder %s34, 0
        // Predicated region
        $region73: #{clip_forward.6} parent=71 // pred_check
          %p691 = pneg %p690
        $region74: #{clip_forward.6} parent=71 // pred_check_branch
          %693 = sbr.rel (%p691) target = $region76
        $region75: #{clip_forward.6} parent=71 // pred_region
          %v694 = vld [vmem:[%s637] sm:$0xff]
          %v695 = vld [vmem:[%s637 + $0x8] sm:$0xff]
          %v696 = vld [vmem:[%s637 + $0x10] sm:$0x1]
          %vm697 = vcmask 523264
          %698 = vst.msk [vmem:[%s688] sm:$0xff] %vm697, %v694
          %699 = vst.msk [vmem:[%s688 + $0x8] sm:$0xff] %vm697, %v695
          %vm700 = vcmask 516096
          %701 = vst.msk [vmem:[%s688 + $0x10] sm:$0x1] %vm700, %v696
        $region76: #{clip_forward.6} parent=71 // pred_fallthru
          _
        %v702 = vld [vmem:[%s688] sm:$0xff]
        %v703 = vld [vmem:[%s688 + $0x8] sm:$0xff]
        %v704 = vld [vmem:[%s688 + $0x10] sm:$0x1]
        %v705 = vld [vmem:[%s640] sm:$0x1]
        %v706 = vld [vmem:[%s643] sm:$0x1]
        %vm707 = vcmask 523264
        %v708 = vsel %vm707, %v702, 0.0
        %709 = vadd.xlane.f32.xlu0 %v708
        %v710 = vpop.xlane.xlu0 %709
        %v711 = vsel %vm707, %v703, 0.0
        %712 = vadd.xlane.f32.xlu0 %v711
        %v713 = vpop.xlane.xlu0 %712
        %vm714 = vcmask 516096
        %v715 = vsel %vm714, %v704, 0.0
        %716 = vadd.xlane.f32.xlu0 %v715
        %v717 = vpop.xlane.xlu0 %716
        %v718 = vrcp.pop 64.0
        %v719 = vmul.f32 %v710, %v718
        %v720 = vmul.f32 %v713, %v718
        %v721 = vmul.f32 %v717, %v718
        %v722 = vsub.f32 %v702, %v719
        %v723 = vsub.f32 %v703, %v720
        %v724 = vsub.f32 %v704, %v721
        %v725 = vmul.f32 %v722, %v722
        %v726 = vmul.f32 %v723, %v723
        %v727 = vmul.f32 %v724, %v724
        %v728 = vsel %vm707, %v725, 0.0
        %729 = vadd.xlane.f32.xlu0 %v728
        %v730 = vpop.xlane.xlu0 %729
        %v731 = vsel %vm707, %v726, 0.0
        %732 = vadd.xlane.f32.xlu0 %v731
        %v733 = vpop.xlane.xlu0 %732
        %v734 = vsel %vm714, %v727, 0.0
        %735 = vadd.xlane.f32.xlu0 %v734
        %v736 = vpop.xlane.xlu0 %735
        %v737 = vmul.f32 %v730, %v718
        %v738 = vmul.f32 %v733, %v718
        %v739 = vmul.f32 %v736, %v718
        %v740 = vadd.f32 %v737, 1e-05
        %v741 = vadd.f32 %v738, 1e-05
        %v742 = vadd.f32 %v739, 1e-05
        %v743 = vrsqrt.pop %v740
        %v744 = vrsqrt.pop %v741
        %v745 = vrsqrt.pop %v742
        %v746 = vmul.f32 %v722, %v743
        %v747 = vmul.f32 %v723, %v744
        %v748 = vmul.f32 %v724, %v745
        %v750 = vlaneseq
        %v751 = vshrl.u32 %v750, 7
        %v752 = vsub.s32 0, %v751
        %v753 = vrot.slane %v705, %v752
        %v755 = vmul.f32 %v746, %v753
        %v756 = vmul.f32 %v747, %v753
        %v757 = vmul.f32 %v748, %v753
        %v759 = vlaneseq
        %v760 = vshrl.u32 %v759, 7
        %v761 = vsub.s32 0, %v760
        %v762 = vrot.slane %v706, %v761
        %v764 = vadd.f32 %v755, %v762
        %v765 = vadd.f32 %v756, %v762
        %v766 = vadd.f32 %v757, %v762
        %v767 = vld [vmem:[%s648] sm:$0xf]
        %v768 = vld [vmem:[%s648 + $0x4] sm:$0xf]
        %v769 = vld [vmem:[%s648 + $0x8] sm:$0xf]
        %v770 = vld [vmem:[%s648 + $0xc] sm:$0xf]
        %v771 = vld [vmem:[%s648 + $0x10] sm:$0xf]
        %v772 = vld [vmem:[%s648 + $0x14] sm:$0xf]
        %v773 = vld [vmem:[%s648 + $0x18] sm:$0xf]
        %v774 = vld [vmem:[%s648 + $0x1c] sm:$0xf]
        %v775 = vpack.c.bf16 %v765, %v764
        %v776 = vpack.c.bf16 %v766, %v766
        %v777 = vld [vmem:[%s652] sm:$0x1]
        %v779 = vlaneseq
        %v780 = vshrl.u32 %v779, 7
        %v781 = vsub.s32 0, %v780
        %v782 = vrot.slane %v777, %v781
        %v792 = vunpack.c.l.b16 %v767
        %v793 = vunpack.c.l.b16 %v768
        %v794 = vunpack.c.l.b16 %v769
        %v795 = vunpack.c.l.b16 %v770
        %v796 = vunpack.c.l.b16 %v771
        %v797 = vunpack.c.l.b16 %v772
        %v798 = vunpack.c.l.b16 %v773
        %v799 = vunpack.c.l.b16 %v774
        %v800 = vpack.c.b16 %v793, %v792
        %v801 = vpack.c.b16 %v795, %v794
        %v802 = vpack.c.b16 %v797, %v796
        %v803 = vpack.c.b16 %v799, %v798
        %v809 = vsel %vm707, %v775, 0
        %v812 = vsel %vm707, %v776, 0
        %814 = vmatprep.subr.bf16.mxu0 0
        %815 = vmatpush1.bf16.msra.mxu0 0
        %816 = vmatprep.subr.bf16.mxu0 0
        %817 = vmatpush1.bf16.msra.mxu0 0
        %818 = vmatprep.subr.bf16.mxu0 0
        %819 = vmatpush1.bf16.msra.mxu0 0
        %820 = vmatprep.subr.bf16.mxu0 0
        %821 = vmatpush1.bf16.msra.mxu0 0
        %822 = vmatprep.subr.bf16.mxu0 0
        %823 = vmatpush1.bf16.msra.mxu0 %v803
        %824 = vmatprep.subr.bf16.mxu0 0
        %825 = vmatpush1.bf16.msra.mxu0 %v802
        %826 = vmatprep.subr.bf16.mxu0 0
        %827 = vmatpush1.bf16.msra.mxu0 %v801
        %828 = vmatprep.subr.bf16.mxu0 0
        %829 = vmatpush1.bf16.msra.mxu0 %v800
        %830 = vmatprep.subr.bf16.mxu0 0
        %831 = vmatpush2.bf16.msra.mxu0 0
        %832 = vmatprep.subr.bf16.mxu0 0
        %833 = vmatpush2.bf16.msra.mxu0 0
        %834 = vmatprep.subr.bf16.mxu0 0
        %835 = vmatpush2.bf16.msra.mxu0 0
        %836 = vmatprep.subr.bf16.mxu0 0
        %837 = vmatpush2.bf16.msra.mxu0 0
        %838 = vmatprep.subr.bf16.mxu0 0
        %839 = vmatpush2.bf16.msra.mxu0 0
        %840 = vmatprep.subr.bf16.mxu0 0
        %841 = vmatpush2.bf16.msra.mxu0 0
        %842 = vmatprep.subr.bf16.mxu0 0
        %843 = vmatpush2.bf16.msra.mxu0 0
        %844 = vmatprep.subr.bf16.mxu0 0
        %845 = vmatpush2.bf16.msra.mxu0 0
        %846 = vmatprep.mubr.bf16.mxu0 0
        %847 = vmatmul.mubr.bf16.gmra.mxu0 %v809
        %v848 = vpop.f32.mrf.mxu0
        %v849 = vadd.f32 %v782, %v848
        %v850 = vpop.f32.mrf.mxu0
        %v851 = vpop.f32.mrf.mxu0
        %v852 = vadd.f32 %v782, %v851
        %v853 = vpop.f32.mrf.mxu0
        %854 = vmatprep.mubr.bf16.mxu0 0
        %855 = vmatmul.mubr.bf16.gmra.mxu0 %v812
        %v856 = vpop.f32.mrf.mxu0
        %v857 = vadd.f32 %v782, %v856
        %v858 = vpop.f32.mrf.mxu0
        %v859 = vpop.f32.mrf.mxu0
        %v860 = vpop.f32.mrf.mxu0
        %861 = vdwg.mxu0
        %s862 = scalar_lea.vmem %s648, 32
        %v863 = vld [vmem:[%s862] sm:$0xf]
        %v864 = vld [vmem:[%s862 + $0x4] sm:$0xf]
        %v865 = vld [vmem:[%s862 + $0x8] sm:$0xf]
        %v866 = vld [vmem:[%s862 + $0xc] sm:$0xf]
        %v867 = vld [vmem:[%s862 + $0x10] sm:$0xf]
        %v868 = vld [vmem:[%s862 + $0x14] sm:$0xf]
        %v869 = vld [vmem:[%s862 + $0x18] sm:$0xf]
        %v870 = vld [vmem:[%s862 + $0x1c] sm:$0xf]
        %s871 = scalar_lea.vmem %s652, 1
        %v872 = vld [vmem:[%s871] sm:$0x1]
        %v874 = vlaneseq
        %v875 = vshrl.u32 %v874, 7
        %v876 = vsub.s32 0, %v875
        %v877 = vrot.slane %v872, %v876
        %v887 = vunpack.c.l.b16 %v863
        %v888 = vunpack.c.l.b16 %v864
        %v889 = vunpack.c.l.b16 %v865
        %v890 = vunpack.c.l.b16 %v866
        %v891 = vunpack.c.l.b16 %v867
        %v892 = vunpack.c.l.b16 %v868
        %v893 = vunpack.c.l.b16 %v869
        %v894 = vunpack.c.l.b16 %v870
        %v895 = vpack.c.b16 %v888, %v887
        %v896 = vpack.c.b16 %v890, %v889
        %v897 = vpack.c.b16 %v892, %v891
        %v898 = vpack.c.b16 %v894, %v893
        %903 = vmatprep.subr.bf16.mxu0 0
        %904 = vmatpush1.bf16.msra.mxu0 0
        %905 = vmatprep.subr.bf16.mxu0 0
        %906 = vmatpush1.bf16.msra.mxu0 0
        %907 = vmatprep.subr.bf16.mxu0 0
        %908 = vmatpush1.bf16.msra.mxu0 0
        %909 = vmatprep.subr.bf16.mxu0 0
        %910 = vmatpush1.bf16.msra.mxu0 0
        %911 = vmatprep.subr.bf16.mxu0 0
        %912 = vmatpush1.bf16.msra.mxu0 %v898
        %913 = vmatprep.subr.bf16.mxu0 0
        %914 = vmatpush1.bf16.msra.mxu0 %v897
        %915 = vmatprep.subr.bf16.mxu0 0
        %916 = vmatpush1.bf16.msra.mxu0 %v896
        %917 = vmatprep.subr.bf16.mxu0 0
        %918 = vmatpush1.bf16.msra.mxu0 %v895
        %919 = vmatprep.subr.bf16.mxu0 0
        %920 = vmatpush2.bf16.msra.mxu0 0
        %921 = vmatprep.subr.bf16.mxu0 0
        %922 = vmatpush2.bf16.msra.mxu0 0
        %923 = vmatprep.subr.bf16.mxu0 0
        %924 = vmatpush2.bf16.msra.mxu0 0
        %925 = vmatprep.subr.bf16.mxu0 0
        %926 = vmatpush2.bf16.msra.mxu0 0
        %927 = vmatprep.subr.bf16.mxu0 0
        %928 = vmatpush2.bf16.msra.mxu0 0
        %929 = vmatprep.subr.bf16.mxu0 0
        %930 = vmatpush2.bf16.msra.mxu0 0
        %931 = vmatprep.subr.bf16.mxu0 0
        %932 = vmatpush2.bf16.msra.mxu0 0
        %933 = vmatprep.subr.bf16.mxu0 0
        %934 = vmatpush2.bf16.msra.mxu0 0
        %935 = vmatprep.mubr.bf16.mxu0 0
        %936 = vmatmul.mubr.bf16.gmra.mxu0 %v809
        %v937 = vpop.f32.mrf.mxu0
        %v938 = vadd.f32 %v877, %v937
        %v939 = vpop.f32.mrf.mxu0
        %v940 = vpop.f32.mrf.mxu0
        %v941 = vadd.f32 %v877, %v940
        %v942 = vpop.f32.mrf.mxu0
        %943 = vmatprep.mubr.bf16.mxu0 0
        %944 = vmatmul.mubr.bf16.gmra.mxu0 %v812
        %v945 = vpop.f32.mrf.mxu0
        %v946 = vadd.f32 %v877, %v945
        %v947 = vpop.f32.mrf.mxu0
        %v948 = vpop.f32.mrf.mxu0
        %v949 = vpop.f32.mrf.mxu0
        %950 = vdwg.mxu0
        %s951 = scalar_lea.vmem %s648, 64
        %v952 = vld [vmem:[%s951] sm:$0xf]
        %v953 = vld [vmem:[%s951 + $0x4] sm:$0xf]
        %v954 = vld [vmem:[%s951 + $0x8] sm:$0xf]
        %v955 = vld [vmem:[%s951 + $0xc] sm:$0xf]
        %v956 = vld [vmem:[%s951 + $0x10] sm:$0xf]
        %v957 = vld [vmem:[%s951 + $0x14] sm:$0xf]
        %v958 = vld [vmem:[%s951 + $0x18] sm:$0xf]
        %v959 = vld [vmem:[%s951 + $0x1c] sm:$0xf]
        %s960 = scalar_lea.vmem %s652, 2
        %v961 = vld [vmem:[%s960] sm:$0x1]
        %v963 = vlaneseq
        %v964 = vshrl.u32 %v963, 7
        %v965 = vsub.s32 0, %v964
        %v966 = vrot.slane %v961, %v965
        %v976 = vunpack.c.l.b16 %v952
        %v977 = vunpack.c.l.b16 %v953
        %v978 = vunpack.c.l.b16 %v954
        %v979 = vunpack.c.l.b16 %v955
        %v980 = vunpack.c.l.b16 %v956
        %v981 = vunpack.c.l.b16 %v957
        %v982 = vunpack.c.l.b16 %v958
        %v983 = vunpack.c.l.b16 %v959
        %v984 = vpack.c.b16 %v977, %v976
        %v985 = vpack.c.b16 %v979, %v978
        %v986 = vpack.c.b16 %v981, %v980
        %v987 = vpack.c.b16 %v983, %v982
        %992 = vmatprep.subr.bf16.mxu0 0
        %993 = vmatpush1.bf16.msra.mxu0 0
        %994 = vmatprep.subr.bf16.mxu0 0
        %995 = vmatpush1.bf16.msra.mxu0 0
        %996 = vmatprep.subr.bf16.mxu0 0
        %997 = vmatpush1.bf16.msra.mxu0 0
        %998 = vmatprep.subr.bf16.mxu0 0
        %999 = vmatpush1.bf16.msra.mxu0 0
        %1000 = vmatprep.subr.bf16.mxu0 0
        %1001 = vmatpush1.bf16.msra.mxu0 %v987
        %1002 = vmatprep.subr.bf16.mxu0 0
        %1003 = vmatpush1.bf16.msra.mxu0 %v986
        %1004 = vmatprep.subr.bf16.mxu0 0
        %1005 = vmatpush1.bf16.msra.mxu0 %v985
        %1006 = vmatprep.subr.bf16.mxu0 0
        %1007 = vmatpush1.bf16.msra.mxu0 %v984
        %1008 = vmatprep.subr.bf16.mxu0 0
        %1009 = vmatpush2.bf16.msra.mxu0 0
        %1010 = vmatprep.subr.bf16.mxu0 0
        %1011 = vmatpush2.bf16.msra.mxu0 0
        %1012 = vmatprep.subr.bf16.mxu0 0
        %1013 = vmatpush2.bf16.msra.mxu0 0
        %1014 = vmatprep.subr.bf16.mxu0 0
        %1015 = vmatpush2.bf16.msra.mxu0 0
        %1016 = vmatprep.subr.bf16.mxu0 0
        %1017 = vmatpush2.bf16.msra.mxu0 0
        %1018 = vmatprep.subr.bf16.mxu0 0
        %1019 = vmatpush2.bf16.msra.mxu0 0
        %1020 = vmatprep.subr.bf16.mxu0 0
        %1021 = vmatpush2.bf16.msra.mxu0 0
        %1022 = vmatprep.subr.bf16.mxu0 0
        %1023 = vmatpush2.bf16.msra.mxu0 0
        %1024 = vmatprep.mubr.bf16.mxu0 0
        %1025 = vmatmul.mubr.bf16.gmra.mxu0 %v809
        %v1026 = vpop.f32.mrf.mxu0
        %v1027 = vadd.f32 %v966, %v1026
        %v1028 = vpop.f32.mrf.mxu0
        %v1029 = vpop.f32.mrf.mxu0
        %v1030 = vadd.f32 %v966, %v1029
        %v1031 = vpop.f32.mrf.mxu0
        %1032 = vmatprep.mubr.bf16.mxu0 0
        %1033 = vmatmul.mubr.bf16.gmra.mxu0 %v812
        %v1034 = vpop.f32.mrf.mxu0
        %v1035 = vadd.f32 %v966, %v1034
        %v1036 = vpop.f32.mrf.mxu0
        %v1037 = vpop.f32.mrf.mxu0
        %v1038 = vpop.f32.mrf.mxu0
        %1039 = vdwg.mxu0
        %v1041 = vsel %vm707, %v849, 0
        %v1044 = vsel %vm707, %v852, 0
        %v1047 = vsel %vm707, %v857, 0
        %v1050 = vsel %vm707, %v938, 0
        %v1053 = vsel %vm707, %v941, 0
        %v1056 = vsel %vm707, %v946, 0
        %1058 = vmatprep.subr.mxu0 0.0
        %1059 = vmatpush1.xpose.msra.mxu0 0.0
        %1060 = vmatprep.subr.mxu0 0.0
        %1061 = vmatpush1.xpose.msra.mxu0 0.0
        %1062 = vmatprep.subr.mxu0 0.0
        %1063 = vmatpush1.xpose.msra.mxu0 0.0
        %1064 = vmatprep.subr.mxu0 0.0
        %1065 = vmatpush1.xpose.msra.mxu0 0.0
        %1066 = vmatprep.subr.mxu0 0.0
        %1067 = vmatpush1.xpose.msra.mxu0 0.0
        %1068 = vmatprep.subr.mxu0 0.0
        %1069 = vmatpush1.xpose.msra.mxu0 0.0
        %1070 = vmatprep.subr.mxu0 0.0
        %1071 = vmatpush1.xpose.msra.mxu0 0.0
        %1072 = vmatprep.subr.mxu0 0.0
        %1073 = vmatpush1.xpose.msra.mxu0 0.0
        %1074 = vmatprep.subr.mxu0 0.0
        %1075 = vmatpush1.xpose.msra.mxu0 0.0
        %1076 = vmatprep.subr.mxu0 0.0
        %1077 = vmatpush1.xpose.msra.mxu0 0.0
        %1078 = vmatprep.subr.mxu0 0.0
        %1079 = vmatpush1.xpose.msra.mxu0 0.0
        %1080 = vmatprep.subr.mxu0 0.0
        %1081 = vmatpush1.xpose.msra.mxu0 0.0
        %1082 = vmatprep.subr.mxu0 0.0
        %1083 = vmatpush1.xpose.msra.mxu0 0.0
        %1084 = vmatprep.subr.mxu0 0.0
        %1085 = vmatpush1.xpose.msra.mxu0 %v1056
        %1086 = vmatprep.subr.mxu0 0.0
        %1087 = vmatpush1.xpose.msra.mxu0 %v1053
        %1088 = vmatprep.subr.mxu0 0.0
        %1089 = vmatpush1.xpose.msra.mxu0 %v1050
        %1090 = vmatprep.subr.mxu0 0.0
        %1091 = vmatpush2.xpose.msra.mxu0 0.0
        %1092 = vmatprep.subr.mxu0 0.0
        %1093 = vmatpush2.xpose.msra.mxu0 0.0
        %1094 = vmatprep.subr.mxu0 0.0
        %1095 = vmatpush2.xpose.msra.mxu0 0.0
        %1096 = vmatprep.subr.mxu0 0.0
        %1097 = vmatpush2.xpose.msra.mxu0 0.0
        %1098 = vmatprep.subr.mxu0 0.0
        %1099 = vmatpush2.xpose.msra.mxu0 0.0
        %1100 = vmatprep.subr.mxu0 0.0
        %1101 = vmatpush2.xpose.msra.mxu0 0.0
        %1102 = vmatprep.subr.mxu0 0.0
        %1103 = vmatpush2.xpose.msra.mxu0 0.0
        %1104 = vmatprep.subr.mxu0 0.0
        %1105 = vmatpush2.xpose.msra.mxu0 0.0
        %1106 = vmatprep.subr.mxu0 0.0
        %1107 = vmatpush2.xpose.msra.mxu0 0.0
        %1108 = vmatprep.subr.mxu0 0.0
        %1109 = vmatpush2.xpose.msra.mxu0 0.0
        %1110 = vmatprep.subr.mxu0 0.0
        %1111 = vmatpush2.xpose.msra.mxu0 0.0
        %1112 = vmatprep.subr.mxu0 0.0
        %1113 = vmatpush2.xpose.msra.mxu0 0.0
        %1114 = vmatprep.subr.mxu0 0.0
        %1115 = vmatpush2.xpose.msra.mxu0 0.0
        %1116 = vmatprep.subr.mxu0 0.0
        %1117 = vmatpush2.xpose.msra.mxu0 0.0
        %1118 = vmatprep.subr.mxu0 0.0
        %1119 = vmatpush2.xpose.msra.mxu0 0.0
        %1120 = vmatprep.subr.mxu0 0.0
        %1121 = vmatpush2.xpose.msra.mxu0 0.0
        %1122 = vmatprep.mubr.f32.mxu0 0.0
        %1123 = vmatmul.mubr.f32.gmra.mxu0 %v1041
        %v1124 = vpop.f32.mrf.mxu0
        %v1125 = vadd.f32 0.0, %v1124
        %v1126 = vpop.f32.mrf.mxu0
        %1127 = vmatprep.mubr.f32.mxu0 0.0
        %1128 = vmatmul.mubr.f32.gmra.mxu0 %v1044
        %v1129 = vpop.f32.mrf.mxu0
        %v1130 = vadd.f32 0.0, %v1129
        %v1131 = vpop.f32.mrf.mxu0
        %1132 = vmatprep.mubr.f32.mxu0 0.0
        %1133 = vmatmul.mubr.f32.gmra.mxu0 %v1047
        %v1134 = vpop.f32.mrf.mxu0
        %v1135 = vadd.f32 0.0, %v1134
        %v1136 = vpop.f32.mrf.mxu0
        %1137 = vdwg.mxu0
        %v1138 = vmul.f32 %v1125, 0.125
        %v1139 = vmul.f32 %v1130, 0.125
        %v1140 = vmul.f32 %v1135, 0.125
        %vm1141 = vcmask 138240
        %v1142 = vsel %vm1141, %v1138, -inf
        %1143 = vmax.xlane.f32.xlu0 %v1142
        %v1144 = vpop.xlane.xlu0 %1143
        %v1145 = vsel %vm1141, %v1139, -inf
        %1146 = vmax.xlane.f32.xlu0 %v1145
        %v1147 = vpop.xlane.xlu0 %1146
        %vm1148 = vcmask 131072
        %v1149 = vsel %vm1148, %v1140, -inf
        %1150 = vmax.xlane.f32.xlu0 %v1149
        %v1151 = vpop.xlane.xlu0 %1150
        %v1152 = vsub.f32 %v1138, %v1144
        %v1153 = vsub.f32 %v1139, %v1147
        %v1154 = vsub.f32 %v1140, %v1151
        %v1155 = vmul.f32 %v1152, 1.442695
        %v1156 = vpow.pop %v1155
        %v1157 = vmul.f32 %v1153, 1.442695
        %v1158 = vpow.pop %v1157
        %v1159 = vmul.f32 %v1154, 1.442695
        %v1160 = vpow.pop %v1159
        %v1161 = vsel %vm1141, %v1156, 0.0
        %1162 = vadd.xlane.f32.xlu0 %v1161
        %v1163 = vpop.xlane.xlu0 %1162
        %v1164 = vsel %vm1141, %v1158, 0.0
        %1165 = vadd.xlane.f32.xlu0 %v1164
        %v1166 = vpop.xlane.xlu0 %1165
        %v1167 = vsel %vm1148, %v1160, 0.0
        %1168 = vadd.xlane.f32.xlu0 %v1167
        %v1169 = vpop.xlane.xlu0 %1168
        %v1170 = vrcp.pop %v1163
        %v1171 = vrcp.pop %v1166
        %v1172 = vrcp.pop %v1169
        %v1173 = vmul.f32 %v1156, %v1170
        %v1174 = vmul.f32 %v1158, %v1171
        %v1175 = vmul.f32 %v1160, %v1172
        %v1177 = vsel %vm1141, %v1173, 0
        %v1180 = vsel %vm1141, %v1174, 0
        %v1183 = vsel %vm1141, %v1175, 0
        %vm1185 = vcmask 1040384
        %v1187 = vsel %vm1185, %v1035, 0
        %1189 = vmatprep.subr.mxu0 0.0
        %1190 = vmatpush1.msra.mxu0 0.0
        %1191 = vmatprep.subr.mxu0 0.0
        %1192 = vmatpush1.msra.mxu0 0.0
        %1193 = vmatprep.subr.mxu0 0.0
        %1194 = vmatpush1.msra.mxu0 0.0
        %1195 = vmatprep.subr.mxu0 0.0
        %1196 = vmatpush1.msra.mxu0 0.0
        %1197 = vmatprep.subr.mxu0 0.0
        %1198 = vmatpush1.msra.mxu0 0.0
        %1199 = vmatprep.subr.mxu0 0.0
        %1200 = vmatpush1.msra.mxu0 0.0
        %1201 = vmatprep.subr.mxu0 0.0
        %1202 = vmatpush1.msra.mxu0 0.0
        %1203 = vmatprep.subr.mxu0 0.0
        %1204 = vmatpush1.msra.mxu0 0.0
        %1205 = vmatprep.subr.mxu0 0.0
        %1206 = vmatpush1.msra.mxu0 0.0
        %1207 = vmatprep.subr.mxu0 0.0
        %1208 = vmatpush1.msra.mxu0 0.0
        %1209 = vmatprep.subr.mxu0 0.0
        %1210 = vmatpush1.msra.mxu0 0.0
        %1211 = vmatprep.subr.mxu0 0.0
        %1212 = vmatpush1.msra.mxu0 0.0
        %1213 = vmatprep.subr.mxu0 0.0
        %1214 = vmatpush1.msra.mxu0 0.0
        %1215 = vmatprep.subr.mxu0 0.0
        %1216 = vmatpush1.msra.mxu0 %v1187
        %1217 = vmatprep.subr.mxu0 0.0
        %1218 = vmatpush1.msra.mxu0 %v1030
        %1219 = vmatprep.subr.mxu0 0.0
        %1220 = vmatpush1.msra.mxu0 %v1027
        %1221 = vmatprep.subr.mxu0 0.0
        %1222 = vmatpush2.msra.mxu0 0.0
        %1223 = vmatprep.subr.mxu0 0.0
        %1224 = vmatpush2.msra.mxu0 0.0
        %1225 = vmatprep.subr.mxu0 0.0
        %1226 = vmatpush2.msra.mxu0 0.0
        %1227 = vmatprep.subr.mxu0 0.0
        %1228 = vmatpush2.msra.mxu0 0.0
        %1229 = vmatprep.subr.mxu0 0.0
        %1230 = vmatpush2.msra.mxu0 0.0
        %1231 = vmatprep.subr.mxu0 0.0
        %1232 = vmatpush2.msra.mxu0 0.0
        %1233 = vmatprep.subr.mxu0 0.0
        %1234 = vmatpush2.msra.mxu0 0.0
        %1235 = vmatprep.subr.mxu0 0.0
        %1236 = vmatpush2.msra.mxu0 0.0
        %1237 = vmatprep.subr.mxu0 0.0
        %1238 = vmatpush2.msra.mxu0 0.0
        %1239 = vmatprep.subr.mxu0 0.0
        %1240 = vmatpush2.msra.mxu0 0.0
        %1241 = vmatprep.subr.mxu0 0.0
        %1242 = vmatpush2.msra.mxu0 0.0
        %1243 = vmatprep.subr.mxu0 0.0
        %1244 = vmatpush2.msra.mxu0 0.0
        %1245 = vmatprep.subr.mxu0 0.0
        %1246 = vmatpush2.msra.mxu0 0.0
        %1247 = vmatprep.subr.mxu0 0.0
        %1248 = vmatpush2.msra.mxu0 0.0
        %1249 = vmatprep.subr.mxu0 0.0
        %1250 = vmatpush2.msra.mxu0 0.0
        %1251 = vmatprep.subr.mxu0 0.0
        %1252 = vmatpush2.msra.mxu0 0.0
        %1253 = vmatprep.mubr.f32.mxu0 0.0
        %1254 = vmatmul.mubr.f32.gmra.mxu0 %v1177
        %v1255 = vpop.f32.mrf.mxu0
        %v1256 = vadd.f32 0.0, %v1255
        %v1257 = vpop.f32.mrf.mxu0
        %1258 = vmatprep.mubr.f32.mxu0 0.0
        %1259 = vmatmul.mubr.f32.gmra.mxu0 %v1180
        %v1260 = vpop.f32.mrf.mxu0
        %v1261 = vadd.f32 0.0, %v1260
        %v1262 = vpop.f32.mrf.mxu0
        %1263 = vmatprep.mubr.f32.mxu0 0.0
        %1264 = vmatmul.mubr.f32.gmra.mxu0 %v1183
        %v1265 = vpop.f32.mrf.mxu0
        %v1266 = vadd.f32 0.0, %v1265
        %v1267 = vpop.f32.mrf.mxu0
        %1268 = vdwg.mxu0
        %v1269 = vld [vmem:[%s657] sm:$0xf]
        %v1270 = vld [vmem:[%s657 + $0x4] sm:$0xf]
        %v1271 = vld [vmem:[%s657 + $0x8] sm:$0xf]
        %v1272 = vld [vmem:[%s657 + $0xc] sm:$0xf]
        %v1273 = vld [vmem:[%s657 + $0x10] sm:$0xf]
        %v1274 = vld [vmem:[%s657 + $0x14] sm:$0xf]
        %v1275 = vld [vmem:[%s657 + $0x18] sm:$0xf]
        %v1276 = vld [vmem:[%s657 + $0x1c] sm:$0xf]
        %v1277 = vpack.c.bf16 %v1261, %v1256
        %v1278 = vpack.c.bf16 %v1266, %v1266
        %v1287 = vunpack.c.l.b16 %v1269
        %v1288 = vunpack.c.l.b16 %v1270
        %v1289 = vunpack.c.l.b16 %v1271
        %v1290 = vunpack.c.l.b16 %v1272
        %v1291 = vunpack.c.l.b16 %v1273
        %v1292 = vunpack.c.l.b16 %v1274
        %v1293 = vunpack.c.l.b16 %v1275
        %v1294 = vunpack.c.l.b16 %v1276
        %v1295 = vpack.c.b16 %v1288, %v1287
        %v1296 = vpack.c.b16 %v1290, %v1289
        %v1297 = vpack.c.b16 %v1292, %v1291
        %v1298 = vpack.c.b16 %v1294, %v1293
        %v1304 = vsel %vm707, %v1277, 0
        %v1307 = vsel %vm707, %v1278, 0
        %1309 = vmatprep.subr.bf16.mxu0 0
        %1310 = vmatpush1.bf16.msra.mxu0 0
        %1311 = vmatprep.subr.bf16.mxu0 0
        %1312 = vmatpush1.bf16.msra.mxu0 0
        %1313 = vmatprep.subr.bf16.mxu0 0
        %1314 = vmatpush1.bf16.msra.mxu0 0
        %1315 = vmatprep.subr.bf16.mxu0 0
        %1316 = vmatpush1.bf16.msra.mxu0 0
        %1317 = vmatprep.subr.bf16.mxu0 0
        %1318 = vmatpush1.bf16.msra.mxu0 %v1298
        %1319 = vmatprep.subr.bf16.mxu0 0
        %1320 = vmatpush1.bf16.msra.mxu0 %v1297
        %1321 = vmatprep.subr.bf16.mxu0 0
        %1322 = vmatpush1.bf16.msra.mxu0 %v1296
        %1323 = vmatprep.subr.bf16.mxu0 0
        %1324 = vmatpush1.bf16.msra.mxu0 %v1295
        %1325 = vmatprep.subr.bf16.mxu0 0
        %1326 = vmatpush2.bf16.msra.mxu0 0
        %1327 = vmatprep.subr.bf16.mxu0 0
        %1328 = vmatpush2.bf16.msra.mxu0 0
        %1329 = vmatprep.subr.bf16.mxu0 0
        %1330 = vmatpush2.bf16.msra.mxu0 0
        %1331 = vmatprep.subr.bf16.mxu0 0
        %1332 = vmatpush2.bf16.msra.mxu0 0
        %1333 = vmatprep.subr.bf16.mxu0 0
        %1334 = vmatpush2.bf16.msra.mxu0 0
        %1335 = vmatprep.subr.bf16.mxu0 0
        %1336 = vmatpush2.bf16.msra.mxu0 0
        %1337 = vmatprep.subr.bf16.mxu0 0
        %1338 = vmatpush2.bf16.msra.mxu0 0
        %1339 = vmatprep.subr.bf16.mxu0 0
        %1340 = vmatpush2.bf16.msra.mxu0 0
        %1341 = vmatprep.mubr.bf16.mxu0 0
        %1342 = vmatmul.mubr.bf16.gmra.mxu0 %v1304
        %v1343 = vpop.f32.mrf.mxu0
        %v1344 = vadd.f32 0.0, %v1343
        %v1345 = vpop.f32.mrf.mxu0
        %v1346 = vpop.f32.mrf.mxu0
        %v1347 = vadd.f32 0.0, %v1346
        %v1348 = vpop.f32.mrf.mxu0
        %1349 = vmatprep.mubr.bf16.mxu0 0
        %1350 = vmatmul.mubr.bf16.gmra.mxu0 %v1307
        %v1351 = vpop.f32.mrf.mxu0
        %v1352 = vadd.f32 0.0, %v1351
        %v1353 = vpop.f32.mrf.mxu0
        %v1354 = vpop.f32.mrf.mxu0
        %v1355 = vpop.f32.mrf.mxu0
        %1356 = vdwg.mxu0
        %v1357 = vadd.f32 %v702, %v1344
        %v1358 = vadd.f32 %v703, %v1347
        %v1359 = vadd.f32 %v704, %v1352
        %v1360 = vld [vmem:[%s660] sm:$0x1]
        %v1362 = vlaneseq
        %v1363 = vshrl.u32 %v1362, 7
        %v1364 = vsub.s32 0, %v1363
        %v1365 = vrot.slane %v1360, %v1364
        %v1367 = vadd.f32 %v1357, %v1365
        %v1368 = vadd.f32 %v1358, %v1365
        %v1369 = vadd.f32 %v1359, %v1365
        %v1370 = vld [vmem:[%s663] sm:$0x1]
        %v1371 = vld [vmem:[%s666] sm:$0x1]
        %v1372 = vsel %vm707, %v1367, 0.0
        %1373 = vadd.xlane.f32.xlu0 %v1372
        %v1374 = vpop.xlane.xlu0 %1373
        %v1375 = vsel %vm707, %v1368, 0.0
        %1376 = vadd.xlane.f32.xlu0 %v1375
        %v1377 = vpop.xlane.xlu0 %1376
        %v1378 = vsel %vm714, %v1369, 0.0
        %1379 = vadd.xlane.f32.xlu0 %v1378
        %v1380 = vpop.xlane.xlu0 %1379
        %v1381 = vmul.f32 %v1374, %v718
        %v1382 = vmul.f32 %v1377, %v718
        %v1383 = vmul.f32 %v1380, %v718
        %v1384 = vsub.f32 %v1367, %v1381
        %v1385 = vsub.f32 %v1368, %v1382
        %v1386 = vsub.f32 %v1369, %v1383
        %v1387 = vmul.f32 %v1384, %v1384
        %v1388 = vmul.f32 %v1385, %v1385
        %v1389 = vmul.f32 %v1386, %v1386
        %v1390 = vsel %vm707, %v1387, 0.0
        %1391 = vadd.xlane.f32.xlu0 %v1390
        %v1392 = vpop.xlane.xlu0 %1391
        %v1393 = vsel %vm707, %v1388, 0.0
        %1394 = vadd.xlane.f32.xlu0 %v1393
        %v1395 = vpop.xlane.xlu0 %1394
        %v1396 = vsel %vm714, %v1389, 0.0
        %1397 = vadd.xlane.f32.xlu0 %v1396
        %v1398 = vpop.xlane.xlu0 %1397
        %v1399 = vmul.f32 %v1392, %v718
        %v1400 = vmul.f32 %v1395, %v718
        %v1401 = vmul.f32 %v1398, %v718
        %v1402 = vadd.f32 %v1399, 1e-05
        %v1403 = vadd.f32 %v1400, 1e-05
        %v1404 = vadd.f32 %v1401, 1e-05
        %v1405 = vrsqrt.pop %v1402
        %v1406 = vrsqrt.pop %v1403
        %v1407 = vrsqrt.pop %v1404
        %v1408 = vmul.f32 %v1384, %v1405
        %v1409 = vmul.f32 %v1385, %v1406
        %v1410 = vmul.f32 %v1386, %v1407
        %v1412 = vlaneseq
        %v1413 = vshrl.u32 %v1412, 7
        %v1414 = vsub.s32 0, %v1413
        %v1415 = vrot.slane %v1370, %v1414
        %v1417 = vmul.f32 %v1408, %v1415
        %v1418 = vmul.f32 %v1409, %v1415
        %v1419 = vmul.f32 %v1410, %v1415
        %v1421 = vlaneseq
        %v1422 = vshrl.u32 %v1421, 7
        %v1423 = vsub.s32 0, %v1422
        %v1424 = vrot.slane %v1371, %v1423
        %v1426 = vadd.f32 %v1417, %v1424
        %v1427 = vadd.f32 %v1418, %v1424
        %v1428 = vadd.f32 %v1419, %v1424
        %v1429 = vld [vmem:[%s671] sm:$0xff]
        %v1430 = vld [vmem:[%s671 + $0x8] sm:$0xff]
        %v1431 = vld [vmem:[%s671 + $0x10] sm:$0xff]
        %v1432 = vld [vmem:[%s671 + $0x18] sm:$0xff]
        %v1433 = vld [vmem:[%s671 + $0x20] sm:$0xff]
        %v1434 = vld [vmem:[%s671 + $0x28] sm:$0xff]
        %v1435 = vld [vmem:[%s671 + $0x30] sm:$0xff]
        %v1436 = vld [vmem:[%s671 + $0x38] sm:$0xff]
        %v1437 = vpack.c.bf16 %v1427, %v1426
        %v1438 = vpack.c.bf16 %v1428, %v1428
        %v1439 = vld [vmem:[%s675] sm:$0x3]
        %v1441 = vlaneseq
        %v1442 = vshrl.u32 %v1441, 7
        %v1443 = vsub.s32 0, %v1442
        %v1444 = vrot.slane %v1439, %v1443
        %v1445 = vlaneseq
        %v1446 = vshrl.u32 %v1445, 7
        %v1447 = vsub.s32 1, %v1446
        %v1448 = vrot.slane %v1439, %v1447
        %v1459 = vunpack.c.l.b16 %v1429
        %v1460 = vunpack.c.h.b16 %v1429
        %v1461 = vunpack.c.l.b16 %v1430
        %v1462 = vunpack.c.h.b16 %v1430
        %v1463 = vunpack.c.l.b16 %v1431
        %v1464 = vunpack.c.h.b16 %v1431
        %v1465 = vunpack.c.l.b16 %v1432
        %v1466 = vunpack.c.h.b16 %v1432
        %v1467 = vunpack.c.l.b16 %v1433
        %v1468 = vunpack.c.h.b16 %v1433
        %v1469 = vunpack.c.l.b16 %v1434
        %v1470 = vunpack.c.h.b16 %v1434
        %v1471 = vunpack.c.l.b16 %v1435
        %v1472 = vunpack.c.h.b16 %v1435
        %v1473 = vunpack.c.l.b16 %v1436
        %v1474 = vunpack.c.h.b16 %v1436
        %v1475 = vpack.c.b16 %v1461, %v1459
        %v1476 = vpack.c.b16 %v1462, %v1460
        %v1477 = vpack.c.b16 %v1465, %v1463
        %v1478 = vpack.c.b16 %v1466, %v1464
        %v1479 = vpack.c.b16 %v1469, %v1467
        %v1480 = vpack.c.b16 %v1470, %v1468
        %v1481 = vpack.c.b16 %v1473, %v1471
        %v1482 = vpack.c.b16 %v1474, %v1472
        %v1492 = vsel %vm707, %v1437, 0
        %v1495 = vsel %vm707, %v1438, 0
        %1497 = vmatprep.subr.bf16.mxu0 0
        %1498 = vmatpush1.bf16.msra.mxu0 0
        %1499 = vmatprep.subr.bf16.mxu0 0
        %1500 = vmatpush1.bf16.msra.mxu0 0
        %1501 = vmatprep.subr.bf16.mxu0 0
        %1502 = vmatpush1.bf16.msra.mxu0 0
        %1503 = vmatprep.subr.bf16.mxu0 0
        %1504 = vmatpush1.bf16.msra.mxu0 0
        %1505 = vmatprep.subr.bf16.mxu0 %v1482
        %1506 = vmatpush1.bf16.msra.mxu0 %v1481
        %1507 = vmatprep.subr.bf16.mxu0 %v1480
        %1508 = vmatpush1.bf16.msra.mxu0 %v1479
        %1509 = vmatprep.subr.bf16.mxu0 %v1478
        %1510 = vmatpush1.bf16.msra.mxu0 %v1477
        %1511 = vmatprep.subr.bf16.mxu0 %v1476
        %1512 = vmatpush1.bf16.msra.mxu0 %v1475
        %1513 = vmatprep.subr.bf16.mxu0 0
        %1514 = vmatpush2.bf16.msra.mxu0 0
        %1515 = vmatprep.subr.bf16.mxu0 0
        %1516 = vmatpush2.bf16.msra.mxu0 0
        %1517 = vmatprep.subr.bf16.mxu0 0
        %1518 = vmatpush2.bf16.msra.mxu0 0
        %1519 = vmatprep.subr.bf16.mxu0 0
        %1520 = vmatpush2.bf16.msra.mxu0 0
        %1521 = vmatprep.subr.bf16.mxu0 0
        %1522 = vmatpush2.bf16.msra.mxu0 0
        %1523 = vmatprep.subr.bf16.mxu0 0
        %1524 = vmatpush2.bf16.msra.mxu0 0
        %1525 = vmatprep.subr.bf16.mxu0 0
        %1526 = vmatpush2.bf16.msra.mxu0 0
        %1527 = vmatprep.subr.bf16.mxu0 0
        %1528 = vmatpush2.bf16.msra.mxu0 0
        %1529 = vmatprep.mubr.bf16.mxu0 0
        %1530 = vmatmul.mubr.bf16.gmra.mxu0 %v1492
        %v1531 = vpop.f32.mrf.mxu0
        %v1532 = vadd.f32 %v1444, %v1531
        %v1533 = vpop.f32.mrf.mxu0
        %v1534 = vadd.f32 %v1448, %v1533
        %v1535 = vpop.f32.mrf.mxu0
        %v1536 = vadd.f32 %v1444, %v1535
        %v1537 = vpop.f32.mrf.mxu0
        %v1538 = vadd.f32 %v1448, %v1537
        %1539 = vmatprep.mubr.bf16.mxu0 0
        %1540 = vmatmul.mubr.bf16.gmra.mxu0 %v1495
        %v1541 = vpop.f32.mrf.mxu0
        %v1542 = vadd.f32 %v1444, %v1541
        %v1543 = vpop.f32.mrf.mxu0
        %v1544 = vadd.f32 %v1448, %v1543
        %v1545 = vpop.f32.mrf.mxu0
        %v1546 = vpop.f32.mrf.mxu0
        %1547 = vdwg.mxu0
        %v1548 = vmul.f32 %v1532, 1.702
        %v1549 = vmul.f32 %v1534, 1.702
        %v1550 = vmul.f32 %v1536, 1.702
        %v1551 = vmul.f32 %v1538, 1.702
        %v1552 = vmul.f32 %v1542, 1.702
        %v1553 = vmul.f32 %v1544, 1.702
        %v1554 = vxor.u32 %v1548, 2147483648
        %v1555 = vxor.u32 %v1549, 2147483648
        %v1556 = vxor.u32 %v1550, 2147483648
        %v1557 = vxor.u32 %v1551, 2147483648
        %v1558 = vxor.u32 %v1552, 2147483648
        %v1559 = vxor.u32 %v1553, 2147483648
        %v1560 = vmul.f32 %v1554, 1.442695
        %v1561 = vpow.pop %v1560
        %v1562 = vmul.f32 %v1555, 1.442695
        %v1563 = vpow.pop %v1562
        %v1564 = vmul.f32 %v1556, 1.442695
        %v1565 = vpow.pop %v1564
        %v1566 = vmul.f32 %v1557, 1.442695
        %v1567 = vpow.pop %v1566
        %v1568 = vmul.f32 %v1558, 1.442695
        %v1569 = vpow.pop %v1568
        %v1570 = vmul.f32 %v1559, 1.442695
        %v1571 = vpow.pop %v1570
        %v1572 = vadd.f32 %v1561, 1.0
        %v1573 = vadd.f32 %v1563, 1.0
        %v1574 = vadd.f32 %v1565, 1.0
        %v1575 = vadd.f32 %v1567, 1.0
        %v1576 = vadd.f32 %v1569, 1.0
        %v1577 = vadd.f32 %v1571, 1.0
        %v1578 = vrcp.pop %v1572
        %v1579 = vmul.f32 1.0, %v1578
        %v1580 = vrcp.pop %v1573
        %v1581 = vmul.f32 1.0, %v1580
        %v1582 = vrcp.pop %v1574
        %v1583 = vmul.f32 1.0, %v1582
        %v1584 = vrcp.pop %v1575
        %v1585 = vmul.f32 1.0, %v1584
        %v1586 = vrcp.pop %v1576
        %v1587 = vmul.f32 1.0, %v1586
        %v1588 = vrcp.pop %v1577
        %v1589 = vmul.f32 1.0, %v1588
        %v1590 = vmul.f32 %v1532, %v1579
        %v1591 = vmul.f32 %v1534, %v1581
        %v1592 = vmul.f32 %v1536, %v1583
        %v1593 = vmul.f32 %v1538, %v1585
        %v1594 = vmul.f32 %v1542, %v1587
        %v1595 = vmul.f32 %v1544, %v1589
        %v1596 = vld [vmem:[%s680] sm:$0xf]
        %v1597 = vld [vmem:[%s680 + $0x4] sm:$0xf]
        %v1598 = vld [vmem:[%s680 + $0x8] sm:$0xf]
        %v1599 = vld [vmem:[%s680 + $0xc] sm:$0xf]
        %v1600 = vld [vmem:[%s680 + $0x10] sm:$0xf]
        %v1601 = vld [vmem:[%s680 + $0x14] sm:$0xf]
        %v1602 = vld [vmem:[%s680 + $0x18] sm:$0xf]
        %v1603 = vld [vmem:[%s680 + $0x1c] sm:$0xf]
        %v1604 = vld [vmem:[%s680 + $0x20] sm:$0xf]
        %v1605 = vld [vmem:[%s680 + $0x24] sm:$0xf]
        %v1606 = vld [vmem:[%s680 + $0x28] sm:$0xf]
        %v1607 = vld [vmem:[%s680 + $0x2c] sm:$0xf]
        %v1608 = vld [vmem:[%s680 + $0x30] sm:$0xf]
        %v1609 = vld [vmem:[%s680 + $0x34] sm:$0xf]
        %v1610 = vld [vmem:[%s680 + $0x38] sm:$0xf]
        %v1611 = vld [vmem:[%s680 + $0x3c] sm:$0xf]
        %v1612 = vld [vmem:[%s680 + $0x40] sm:$0xf]
        %v1613 = vld [vmem:[%s680 + $0x44] sm:$0xf]
        %v1614 = vld [vmem:[%s680 + $0x48] sm:$0xf]
        %v1615 = vld [vmem:[%s680 + $0x4c] sm:$0xf]
        %v1616 = vld [vmem:[%s680 + $0x50] sm:$0xf]
        %v1617 = vld [vmem:[%s680 + $0x54] sm:$0xf]
        %v1618 = vld [vmem:[%s680 + $0x58] sm:$0xf]
        %v1619 = vld [vmem:[%s680 + $0x5c] sm:$0xf]
        %v1620 = vld [vmem:[%s680 + $0x60] sm:$0xf]
        %v1621 = vld [vmem:[%s680 + $0x64] sm:$0xf]
        %v1622 = vld [vmem:[%s680 + $0x68] sm:$0xf]
        %v1623 = vld [vmem:[%s680 + $0x6c] sm:$0xf]
        %v1624 = vld [vmem:[%s680 + $0x70] sm:$0xf]
        %v1625 = vld [vmem:[%s680 + $0x74] sm:$0xf]
        %v1626 = vld [vmem:[%s680 + $0x78] sm:$0xf]
        %v1627 = vld [vmem:[%s680 + $0x7c] sm:$0xf]
        %v1628 = vpack.c.bf16 %v1592, %v1590
        %v1629 = vpack.c.bf16 %v1593, %v1591
        %v1630 = vpack.c.bf16 %v1594, %v1594
        %v1631 = vpack.c.bf16 %v1595, %v1595
        %v1664 = vunpack.c.l.b16 %v1596
        %v1665 = vunpack.c.l.b16 %v1597
        %v1666 = vunpack.c.l.b16 %v1598
        %v1667 = vunpack.c.l.b16 %v1599
        %v1668 = vunpack.c.l.b16 %v1600
        %v1669 = vunpack.c.l.b16 %v1601
        %v1670 = vunpack.c.l.b16 %v1602
        %v1671 = vunpack.c.l.b16 %v1603
        %v1672 = vunpack.c.l.b16 %v1604
        %v1673 = vunpack.c.l.b16 %v1605
        %v1674 = vunpack.c.l.b16 %v1606
        %v1675 = vunpack.c.l.b16 %v1607
        %v1676 = vunpack.c.l.b16 %v1608
        %v1677 = vunpack.c.l.b16 %v1609
        %v1678 = vunpack.c.l.b16 %v1610
        %v1679 = vunpack.c.l.b16 %v1611
        %v1680 = vunpack.c.l.b16 %v1612
        %v1681 = vunpack.c.l.b16 %v1613
        %v1682 = vunpack.c.l.b16 %v1614
        %v1683 = vunpack.c.l.b16 %v1615
        %v1684 = vunpack.c.l.b16 %v1616
        %v1685 = vunpack.c.l.b16 %v1617
        %v1686 = vunpack.c.l.b16 %v1618
        %v1687 = vunpack.c.l.b16 %v1619
        %v1688 = vunpack.c.l.b16 %v1620
        %v1689 = vunpack.c.l.b16 %v1621
        %v1690 = vunpack.c.l.b16 %v1622
        %v1691 = vunpack.c.l.b16 %v1623
        %v1692 = vunpack.c.l.b16 %v1624
        %v1693 = vunpack.c.l.b16 %v1625
        %v1694 = vunpack.c.l.b16 %v1626
        %v1695 = vunpack.c.l.b16 %v1627
        %v1696 = vpack.c.b16 %v1665, %v1664
        %v1697 = vpack.c.b16 %v1667, %v1666
        %v1698 = vpack.c.b16 %v1669, %v1668
        %v1699 = vpack.c.b16 %v1671, %v1670
        %v1700 = vpack.c.b16 %v1673, %v1672
        %v1701 = vpack.c.b16 %v1675, %v1674
        %v1702 = vpack.c.b16 %v1677, %v1676
        %v1703 = vpack.c.b16 %v1679, %v1678
        %v1704 = vpack.c.b16 %v1681, %v1680
        %v1705 = vpack.c.b16 %v1683, %v1682
        %v1706 = vpack.c.b16 %v1685, %v1684
        %v1707 = vpack.c.b16 %v1687, %v1686
        %v1708 = vpack.c.b16 %v1689, %v1688
        %v1709 = vpack.c.b16 %v1691, %v1690
        %v1710 = vpack.c.b16 %v1693, %v1692
        %v1711 = vpack.c.b16 %v1695, %v1694
        %1728 = vmatprep.subr.bf16.mxu0 0
        %1729 = vmatpush1.bf16.msra.mxu0 %v1703
        %1730 = vmatprep.subr.bf16.mxu0 0
        %1731 = vmatpush1.bf16.msra.mxu0 %v1702
        %1732 = vmatprep.subr.bf16.mxu0 0
        %1733 = vmatpush1.bf16.msra.mxu0 %v1701
        %1734 = vmatprep.subr.bf16.mxu0 0
        %1735 = vmatpush1.bf16.msra.mxu0 %v1700
        %1736 = vmatprep.subr.bf16.mxu0 0
        %1737 = vmatpush1.bf16.msra.mxu0 %v1699
        %1738 = vmatprep.subr.bf16.mxu0 0
        %1739 = vmatpush1.bf16.msra.mxu0 %v1698
        %1740 = vmatprep.subr.bf16.mxu0 0
        %1741 = vmatpush1.bf16.msra.mxu0 %v1697
        %1742 = vmatprep.subr.bf16.mxu0 0
        %1743 = vmatpush1.bf16.msra.mxu0 %v1696
        %1744 = vmatprep.subr.bf16.mxu0 0
        %1745 = vmatpush2.bf16.msra.mxu0 %v1711
        %1746 = vmatprep.subr.bf16.mxu0 0
        %1747 = vmatpush2.bf16.msra.mxu0 %v1710
        %1748 = vmatprep.subr.bf16.mxu0 0
        %1749 = vmatpush2.bf16.msra.mxu0 %v1709
        %1750 = vmatprep.subr.bf16.mxu0 0
        %1751 = vmatpush2.bf16.msra.mxu0 %v1708
        %1752 = vmatprep.subr.bf16.mxu0 0
        %1753 = vmatpush2.bf16.msra.mxu0 %v1707
        %1754 = vmatprep.subr.bf16.mxu0 0
        %1755 = vmatpush2.bf16.msra.mxu0 %v1706
        %1756 = vmatprep.subr.bf16.mxu0 0
        %1757 = vmatpush2.bf16.msra.mxu0 %v1705
        %1758 = vmatprep.subr.bf16.mxu0 0
        %1759 = vmatpush2.bf16.msra.mxu0 %v1704
        %1760 = vmatprep.mubr.bf16.mxu0 %v1629
        %1761 = vmatmul.mubr.bf16.gmra.mxu0 %v1628
        %v1762 = vpop.f32.mrf.mxu0
        %v1763 = vadd.f32 0.0, %v1762
        %v1764 = vpop.f32.mrf.mxu0
        %v1765 = vpop.f32.mrf.mxu0
        %v1766 = vadd.f32 0.0, %v1765
        %v1767 = vpop.f32.mrf.mxu0
        %1768 = vmatprep.mubr.bf16.mxu0 %v1631
        %1769 = vmatmul.mubr.bf16.gmra.mxu0 %v1630
        %v1770 = vpop.f32.mrf.mxu0
        %v1771 = vadd.f32 0.0, %v1770
        %v1772 = vpop.f32.mrf.mxu0
        %v1773 = vpop.f32.mrf.mxu0
        %v1774 = vpop.f32.mrf.mxu0
        %1775 = vdwg.mxu0
        %v1776 = vadd.f32 %v1367, %v1763
        %v1777 = vadd.f32 %v1368, %v1766
        %v1778 = vadd.f32 %v1369, %v1771
        %v1779 = vld [vmem:[%s683] sm:$0x1]
        %v1781 = vlaneseq
        %v1782 = vshrl.u32 %v1781, 7
        %v1783 = vsub.s32 0, %v1782
        %v1784 = vrot.slane %v1779, %v1783
        %v1786 = vadd.f32 %v1776, %v1784
        %v1787 = vadd.f32 %v1777, %v1784
        %v1788 = vadd.f32 %v1778, %v1784
        %1789 = vst.msk [vmem:[%s688] sm:$0xff] %vm707, %v1786
        %1790 = vst.msk [vmem:[%s688 + $0x8] sm:$0xff] %vm707, %v1787
        %1791 = vst.msk [vmem:[%s688 + $0x10] sm:$0x1] %vm714, %v1788
        %p1792 = scmp.eq.s32.totalorder %s34, 10
        // Predicated region
        $region77: #{clip_forward.6} parent=71 // pred_check
          %p1793 = pneg %p1792
        $region78: #{clip_forward.6} parent=71 // pred_check_branch
          %1795 = sbr.rel (%p1793) target = $region80
        $region79: #{clip_forward.6} parent=71 // pred_region
          %1796 = vst.msk [vmem:[%s632] sm:$0xff] %vm707, %v1786
          %1797 = vst.msk [vmem:[%s632 + $0x8] sm:$0xff] %vm707, %v1787
          %1798 = vst.msk [vmem:[%s632 + $0x10] sm:$0x1] %vm714, %v1788
        $region80: #{clip_forward.6} parent=71 // pred_fallthru
          _
        %p1799 = scmp.lt.s32.totalorder %s33, 1
        %s1800 = scalar_select %p1799, %s33, 1
        %s1801 = smul.addr %s1800, 3
        %s1802 = smul.addr %s1801, 8
        %s1803 = scalar_lea.vmem %s13, %s1802
        %s1804 = sand.u32 %s413, 1
        %s1805 = scalar_lea.sflag [#allocation3], %s1804
        %s1806 = sand.u32 %s413, 1
        %s1807 = smul.addr %s1806, 24
        %s1808 = scalar_lea.vmem [#allocation2], %s1807
        // Predicated region
        $region81: #{clip_forward.6} parent=71 // pred_check
          %p1809 = pneg %p397
        $region82: #{clip_forward.6} parent=71 // pred_check_branch
          %1811 = sbr.rel (%p1809) target = $region84
        $region83: #{clip_forward.6} parent=71 // pred_region
          _
        $region84: #{clip_forward.6} parent=71 // pred_fallthru
          _
        // Predicated region
        $region85: #{clip_forward.6} parent=71 // pred_check
          %p1812 = pneg %p423
        $region86: #{clip_forward.6} parent=71 // pred_check_branch
          %1814 = sbr.rel (%p1812) target = $region88
        $region87: #{clip_forward.6} parent=71 // pred_region
          %s1816 = ssub.s32 384, 384
          %1817 = vsyncadd %s1805, %s1816
          %s1818 = smul.addr %s33, 3
          %s1819 = smul.addr %s1818, 128
          %s1820 = scalar_lea.hbm %s14, %s1819
          %s1821 = sshll.u32 %s1808, 4
          %s1822 = int_to_ptr.vmem [resolvable:$true] %s1821
          %1827 = dma.vmem_to_hbm [thread:$0]  %s1822, 384, %s1820, %s1805, 128, 128, 8
        $region88: #{clip_forward.6} parent=71 // pred_fallthru
          _
      $region72: #{clip_forward.6} parent=5 // pred_fallthru
        _
      %p1828 = scmp.le.s32.totalorder 2, %s24
      // Predicated region
      $region89: #{clip_forward.6} parent=5 // pred_check
        %p1829 = pneg %p1828
      $region90: #{clip_forward.6} parent=5 // pred_check_branch
        %1831 = sbr.rel (%p1829) target = $region92
      $region91: #{clip_forward.6} parent=5 // pred_region
        %s1832 = ssub.s32 %s24, 2
        // Predicated region
        $region93: #{clip_forward.6} parent=91 // pred_check
          %p1833 = pneg %p403
        $region94: #{clip_forward.6} parent=91 // pred_check_branch
          %1835 = sbr.rel (%p1833) target = $region96
        $region95: #{clip_forward.6} parent=91 // pred_region
          %p1836 = scmp.lt.s32.totalorder %s35, 1
          %s1837 = scalar_select %p1836, %s35, 1
          %s1838 = smul.addr %s1837, 3
          %s1839 = smul.addr %s1838, 8
          %s1840 = scalar_lea.vmem %s13, %s1839
        $region96: #{clip_forward.6} parent=91 // pred_fallthru
          _
        // Predicated region
        $region97: #{clip_forward.6} parent=91 // pred_check
          %p1841 = pneg %p429
        $region98: #{clip_forward.6} parent=91 // pred_check_branch
          %1843 = sbr.rel (%p1841) target = $region100
        $region99: #{clip_forward.6} parent=91 // pred_region
          %s1844 = sand.u32 %s414, 1
          %s1845 = scalar_lea.sflag [#allocation3], %s1844
          %s1846 = sand.u32 %s414, 1
          %s1847 = smul.addr %s1846, 24
          %s1848 = scalar_lea.vmem [#allocation2], %s1847
          %1849 = dma.done %s1845, 384
        $region100: #{clip_forward.6} parent=91 // pred_fallthru
          _
      $region92: #{clip_forward.6} parent=5 // pred_fallthru
        _
    $region6: #{clip_forward.6} parent=1 // loop_footer
      %s28 = sadd.s32 1, %s24
    $region7: #{clip_forward.6} parent=1 // loop_footer_branch
      %23 = sbr.rel target = $region3
    $region8: #{clip_forward.6} parent=1 // loop_exit
      _
    %1850 = vsyncpa [#allocation3], 1
    %s1851 = scalar_lea.sflag [#allocation3], 1
    %1852 = vsyncpa %s1851, 1

// kernel: clip_forward.9
$region0: #{clip_forward.9}
  #allocation0 [shape = 'u32[]', space=smem, size = 0x4, offset = 0x4, fixed_abs, tag = 'smem constant byte address 0x4 - core index']
  #allocation1 [shape = 'u32[144,128]{1,0:T(1,128)}', space=vmem, size = 0x12000, scoped, tag = 'internal scratch']
  #allocation2 [shape = 'f32[1,1]{1,0:T(1,128)S(1)}', space=vmem, size = 0x200, scoped, tag = 'scoped memory for clip_forward.9']
  %s0 = inlined_call_operand.vmem [shape: f32[2,64], index: 0, kind: input, shape index: {}]
  %s1 = inlined_call_operand.vmem [shape: f32[2,32], index: 1, kind: input, shape index: {}]
  %s2 = inlined_call_operand.vmem [shape: f32[1,32], index: 2, kind: input, shape index: {}]
  %s3 = inlined_call_operand.vmem [shape: f32[1,32], index: 3, kind: input, shape index: {}]
  %s4 = inlined_call_operand.vmem [shape: bf16[32,64], index: 4, kind: input, shape index: {}]
  %s5 = inlined_call_operand.<no memory space> [shape: f32[1,1], index: 5, kind: input, shape index: {}]
  %s6 = inlined_call_operand.hbm [shape: f32[2,2], index: 6, kind: output, shape index: {0}]
  %s7 = inlined_call_operand.hbm [shape: f32[2,2], index: 7, kind: output, shape index: {1}]
  %8 = xla_tuple %s6, %s7
  %s9 = sld [smem:[#allocation0]]
  $region42: #{clip_forward.9} parent=0
    _
  %s11 = ssub.s32 1, %s9
  %s12 = scalar_select 0, %s11, %s9
  %v13 = vstv %s5
  %14 = vst [vmem:[#allocation2] sm:$0x1] %v13
  $region1: #{clip_forward.9} parent=0
    #allocation3 [shape = 'u8[1024]{0}', space=vmem, size = 0x400, scoped, tag = 'output window, operand 0, single buffered']
    #allocation4 [shape = 's32[1]{0}', space=sflag, size = 0x4, scoped, tag = 'scoped memory for clip_forward.9']
    #allocation5 [shape = 'u8[1024]{0}', space=vmem, size = 0x400, scoped, tag = 'output window, operand 1, single buffered']
    #allocation6 [shape = 's32[1]{0}', space=sflag, size = 0x4, scoped, tag = 'scoped memory for clip_forward.9']
    %15 = vsyncpa [#allocation4], 0
    %16 = vsyncpa [#allocation6], 0
    // Predicated region
    $region2: #{clip_forward.9} parent=1 // pred_check
      _
    $region3: #{clip_forward.9} parent=1 // pred_check_branch
      %18 = sbr.rel (0) target = $region5
    $region4: #{clip_forward.9} parent=1 // pred_region
      _
    $region5: #{clip_forward.9} parent=1 // pred_fallthru
      _
    // Predicated region
    $region6: #{clip_forward.9} parent=1 // pred_check
      _
    $region7: #{clip_forward.9} parent=1 // pred_check_branch
      %20 = sbr.rel (0) target = $region9
    $region8: #{clip_forward.9} parent=1 // pred_region
      _
    $region9: #{clip_forward.9} parent=1 // pred_fallthru
      _
    // Predicated region
    $region10: #{clip_forward.9} parent=1 // pred_check
      _
    $region11: #{clip_forward.9} parent=1 // pred_check_branch
      %22 = sbr.rel (0) target = $region13
    $region12: #{clip_forward.9} parent=1 // pred_region
      _
    $region13: #{clip_forward.9} parent=1 // pred_fallthru
      _
    // Predicated region
    $region14: #{clip_forward.9} parent=1 // pred_check
      _
    $region15: #{clip_forward.9} parent=1 // pred_check_branch
      %24 = sbr.rel (0) target = $region17
    $region16: #{clip_forward.9} parent=1 // pred_region
      _
    $region17: #{clip_forward.9} parent=1 // pred_fallthru
      _
    // Predicated region
    $region18: #{clip_forward.9} parent=1 // pred_check
      _
    $region19: #{clip_forward.9} parent=1 // pred_check_branch
      %26 = sbr.rel (0) target = $region21
    $region20: #{clip_forward.9} parent=1 // pred_region
      _
    $region21: #{clip_forward.9} parent=1 // pred_fallthru
      _
    // Predicated region
    $region22: #{clip_forward.9} parent=1 // pred_check
      _
    $region23: #{clip_forward.9} parent=1 // pred_check_branch
      %28 = sbr.rel (0) target = $region25
    $region24: #{clip_forward.9} parent=1 // pred_region
      _
    $region25: #{clip_forward.9} parent=1 // pred_fallthru
      _
    %v30 = vld [vmem:[%s0] sm:$0x3]
    %v31 = vld [vmem:[%s1] sm:$0x3]
    %v32 = vld [vmem:[%s2] sm:$0x1]
    %v33 = vld [vmem:[%s3] sm:$0x1]
    %vm34 = vcmask 254976
    %v35 = vsel %vm34, %v31, 0.0
    %36 = vadd.xlane.f32.xlu0 %v35
    %v37 = vpop.xlane.xlu0 %36
    %v38 = vrcp.pop 32.0
    %v39 = vmul.f32 %v37, %v38
    %v40 = vsub.f32 %v31, %v39
    %v41 = vmul.f32 %v40, %v40
    %v42 = vsel %vm34, %v41, 0.0
    %43 = vadd.xlane.f32.xlu0 %v42
    %v44 = vpop.xlane.xlu0 %43
    %v45 = vmul.f32 %v44, %v38
    %v46 = vadd.f32 %v45, 1e-05
    %v47 = vrsqrt.pop %v46
    %v48 = vmul.f32 %v40, %v47
    %v50 = vlaneseq
    %v51 = vshrl.u32 %v50, 7
    %v52 = vsub.s32 0, %v51
    %v53 = vrot.slane %v32, %v52
    %v55 = vmul.f32 %v48, %v53
    %v57 = vlaneseq
    %v58 = vshrl.u32 %v57, 7
    %v59 = vsub.s32 0, %v58
    %v60 = vrot.slane %v33, %v59
    %v62 = vadd.f32 %v55, %v60
    %v63 = vld [vmem:[%s4] sm:$0xf]
    %v64 = vld [vmem:[%s4 + $0x4] sm:$0xf]
    %v65 = vld [vmem:[%s4 + $0x8] sm:$0xf]
    %v66 = vld [vmem:[%s4 + $0xc] sm:$0xf]
    %v67 = vpack.c.bf16 %v62, %v62
    %v72 = vunpack.c.l.b16 %v63
    %v73 = vunpack.c.l.b16 %v64
    %v74 = vunpack.c.l.b16 %v65
    %v75 = vunpack.c.l.b16 %v66
    %v76 = vpack.c.b16 %v73, %v72
    %v77 = vpack.c.b16 %v75, %v74
    %vm80 = vcmask 261120
    %v82 = vsel %vm80, %v67, 0
    %84 = vmatprep.subr.bf16.mxu0 0
    %85 = vmatpush1.bf16.msra.mxu0 0
    %86 = vmatprep.subr.bf16.mxu0 0
    %87 = vmatpush1.bf16.msra.mxu0 0
    %88 = vmatprep.subr.bf16.mxu0 0
    %89 = vmatpush1.bf16.msra.mxu0 0
    %90 = vmatprep.subr.bf16.mxu0 0
    %91 = vmatpush1.bf16.msra.mxu0 0
    %92 = vmatprep.subr.bf16.mxu0 0
    %93 = vmatpush1.bf16.msra.mxu0 0
    %94 = vmatprep.subr.bf16.mxu0 0
    %95 = vmatpush1.bf16.msra.mxu0 0
    %96 = vmatprep.subr.bf16.mxu0 0
    %97 = vmatpush1.bf16.msra.mxu0 %v77
    %98 = vmatprep.subr.bf16.mxu0 0
    %99 = vmatpush1.bf16.msra.mxu0 %v76
    %100 = vmatprep.subr.bf16.mxu0 0
    %101 = vmatpush2.bf16.msra.mxu0 0
    %102 = vmatprep.subr.bf16.mxu0 0
    %103 = vmatpush2.bf16.msra.mxu0 0
    %104 = vmatprep.subr.bf16.mxu0 0
    %105 = vmatpush2.bf16.msra.mxu0 0
    %106 = vmatprep.subr.bf16.mxu0 0
    %107 = vmatpush2.bf16.msra.mxu0 0
    %108 = vmatprep.subr.bf16.mxu0 0
    %109 = vmatpush2.bf16.msra.mxu0 0
    %110 = vmatprep.subr.bf16.mxu0 0
    %111 = vmatpush2.bf16.msra.mxu0 0
    %112 = vmatprep.subr.bf16.mxu0 0
    %113 = vmatpush2.bf16.msra.mxu0 0
    %114 = vmatprep.subr.bf16.mxu0 0
    %115 = vmatpush2.bf16.msra.mxu0 0
    %116 = vmatprep.mubr.bf16.mxu0 0
    %117 = vmatmul.mubr.bf16.gmra.mxu0 %v82
    %v118 = vpop.f32.mrf.mxu0
    %v119 = vadd.f32 0.0, %v118
    %v120 = vpop.f32.mrf.mxu0
    %v121 = vpop.f32.mrf.mxu0
    %v122 = vpop.f32.mrf.mxu0
    %123 = vdwg.mxu0
    %v124 = vmul.f32 %v30, %v30
    %vm125 = vcmask 517120
    %v126 = vsel %vm125, %v124, 0.0
    %127 = vadd.xlane.f32.xlu0 %v126
    %v128 = vpop.xlane.xlu0 %127
    %v129 = vrsqrt.pop %v128
    %v130 = vmul.f32 %v30, %v129
    %v131 = vmul.f32 %v119, %v119
    %v132 = vsel %vm125, %v131, 0.0
    %133 = vadd.xlane.f32.xlu0 %v132
    %v134 = vpop.xlane.xlu0 %133
    %v135 = vrsqrt.pop %v134
    %v136 = vmul.f32 %v119, %v135
    %v137 = vld [vmem:[#allocation2] sm:$0x1]
    %v138 = vmul.f32 %v137, 1.442695
    %v139 = vpow.pop %v138
    %vm140 = vcmask 523264
    %v142 = vsel %vm140, %v130, 0
    %v145 = vsel %vm140, %v136, 0
    %147 = vmatprep.subr.mxu0 0.0
    %148 = vmatpush1.xpose.msra.mxu0 0.0
    %149 = vmatprep.subr.mxu0 0.0
    %150 = vmatpush1.xpose.msra.mxu0 0.0
    %151 = vmatprep.subr.mxu0 0.0
    %152 = vmatpush1.xpose.msra.mxu0 0.0
    %153 = vmatprep.subr.mxu0 0.0
    %154 = vmatpush1.xpose.msra.mxu0 0.0
    %155 = vmatprep.subr.mxu0 0.0
    %156 = vmatpush1.xpose.msra.mxu0 0.0
    %157 = vmatprep.subr.mxu0 0.0
    %158 = vmatpush1.xpose.msra.mxu0 0.0
    %159 = vmatprep.subr.mxu0 0.0
    %160 = vmatpush1.xpose.msra.mxu0 0.0
    %161 = vmatprep.subr.mxu0 0.0
    %162 = vmatpush1.xpose.msra.mxu0 0.0
    %163 = vmatprep.subr.mxu0 0.0
    %164 = vmatpush1.xpose.msra.mxu0 0.0
    %165 = vmatprep.subr.mxu0 0.0
    %166 = vmatpush1.xpose.msra.mxu0 0.0
    %167 = vmatprep.subr.mxu0 0.0
    %168 = vmatpush1.xpose.msra.mxu0 0.0
    %169 = vmatprep.subr.mxu0 0.0
    %170 = vmatpush1.xpose.msra.mxu0 0.0
    %171 = vmatprep.subr.mxu0 0.0
    %172 = vmatpush1.xpose.msra.mxu0 0.0
    %173 = vmatprep.subr.mxu0 0.0
    %174 = vmatpush1.xpose.msra.mxu0 0.0
    %175 = vmatprep.subr.mxu0 0.0
    %176 = vmatpush1.xpose.msra.mxu0 0.0
    %177 = vmatprep.subr.mxu0 0.0
    %178 = vmatpush1.xpose.msra.mxu0 %v145
    %179 = vmatprep.subr.mxu0 0.0
    %180 = vmatpush2.xpose.msra.mxu0 0.0
    %181 = vmatprep.subr.mxu0 0.0
    %182 = vmatpush2.xpose.msra.mxu0 0.0
    %183 = vmatprep.subr.mxu0 0.0
    %184 = vmatpush2.xpose.msra.mxu0 0.0
    %185 = vmatprep.subr.mxu0 0.0
    %186 = vmatpush2.xpose.msra.mxu0 0.0
    %187 = vmatprep.subr.mxu0 0.0
    %188 = vmatpush2.xpose.msra.mxu0 0.0
    %189 = vmatprep.subr.mxu0 0.0
    %190 = vmatpush2.xpose.msra.mxu0 0.0
    %191 = vmatprep.subr.mxu0 0.0
    %192 = vmatpush2.xpose.msra.mxu0 0.0
    %193 = vmatprep.subr.mxu0 0.0
    %194 = vmatpush2.xpose.msra.mxu0 0.0
    %195 = vmatprep.subr.mxu0 0.0
    %196 = vmatpush2.xpose.msra.mxu0 0.0
    %197 = vmatprep.subr.mxu0 0.0
    %198 = vmatpush2.xpose.msra.mxu0 0.0
    %199 = vmatprep.subr.mxu0 0.0
    %200 = vmatpush2.xpose.msra.mxu0 0.0
    %201 = vmatprep.subr.mxu0 0.0
    %202 = vmatpush2.xpose.msra.mxu0 0.0
    %203 = vmatprep.subr.mxu0 0.0
    %204 = vmatpush2.xpose.msra.mxu0 0.0
    %205 = vmatprep.subr.mxu0 0.0
    %206 = vmatpush2.xpose.msra.mxu0 0.0
    %207 = vmatprep.subr.mxu0 0.0
    %208 = vmatpush2.xpose.msra.mxu0 0.0
    %209 = vmatprep.subr.mxu0 0.0
    %210 = vmatpush2.xpose.msra.mxu0 0.0
    %211 = vmatprep.mubr.f32.mxu0 0.0
    %212 = vmatmul.mubr.f32.gmra.mxu0 %v142
    %v213 = vpop.f32.mrf.mxu0
    %v214 = vadd.f32 0.0, %v213
    %v215 = vpop.f32.mrf.mxu0
    %216 = vdwg.mxu0
    %v218 = vlaneseq
    %v219 = vshrl.u32 %v218, 7
    %v220 = vsub.s32 0, %v219
    %v221 = vrot.slane %v139, %v220
    %222 = vset.pattern.permute.xlu0 0
    %223 = vperm.xlu0 %222, %v221
    %v224 = vpop.permute.xlu0 %223
    %v226 = vmul.f32 %v224, %v214
    %vm227 = vcmask 9216
    %228 = vst.msk [vmem:[#allocation3] sm:$0x3] %vm227, %v226
    %229 = vmatprep.subr.mxu0 0.0
    %230 = vmatpush1.xpose.msra.mxu0 0.0
    %231 = vmatprep.subr.mxu0 0.0
    %232 = vmatpush1.xpose.msra.mxu0 0.0
    %233 = vmatprep.subr.mxu0 0.0
    %234 = vmatpush1.xpose.msra.mxu0 0.0
    %235 = vmatprep.subr.mxu0 0.0
    %236 = vmatpush1.xpose.msra.mxu0 0.0
    %237 = vmatprep.subr.mxu0 0.0
    %238 = vmatpush1.xpose.msra.mxu0 0.0
    %239 = vmatprep.subr.mxu0 0.0
    %240 = vmatpush1.xpose.msra.mxu0 0.0
    %241 = vmatprep.subr.mxu0 0.0
    %242 = vmatpush1.xpose.msra.mxu0 0.0
    %243 = vmatprep.subr.mxu0 0.0
    %244 = vmatpush1.xpose.msra.mxu0 0.0
    %245 = vmatprep.subr.mxu0 0.0
    %246 = vmatpush1.xpose.msra.mxu0 0.0
    %247 = vmatprep.subr.mxu0 0.0
    %248 = vmatpush1.xpose.msra.mxu0 0.0
    %249 = vmatprep.subr.mxu0 0.0
    %250 = vmatpush1.xpose.msra.mxu0 0.0
    %251 = vmatprep.subr.mxu0 0.0
    %252 = vmatpush1.xpose.msra.mxu0 0.0
    %253 = vmatprep.subr.mxu0 0.0
    %254 = vmatpush1.xpose.msra.mxu0 0.0
    %255 = vmatprep.subr.mxu0 0.0
    %256 = vmatpush1.xpose.msra.mxu0 0.0
    %257 = vmatprep.subr.mxu0 0.0
    %258 = vmatpush1.xpose.msra.mxu0 0.0
    %259 = vmatprep.subr.mxu0 0.0
    %260 = vmatpush1.xpose.msra.mxu0 %v142
    %261 = vmatprep.subr.mxu0 0.0
    %262 = vmatpush2.xpose.msra.mxu0 0.0
    %263 = vmatprep.subr.mxu0 0.0
    %264 = vmatpush2.xpose.msra.mxu0 0.0
    %265 = vmatprep.subr.mxu0 0.0
    %266 = vmatpush2.xpose.msra.mxu0 0.0
    %267 = vmatprep.subr.mxu0 0.0
    %268 = vmatpush2.xpose.msra.mxu0 0.0
    %269 = vmatprep.subr.mxu0 0.0
    %270 = vmatpush2.xpose.msra.mxu0 0.0
    %271 = vmatprep.subr.mxu0 0.0
    %272 = vmatpush2.xpose.msra.mxu0 0.0
    %273 = vmatprep.subr.mxu0 0.0
    %274 = vmatpush2.xpose.msra.mxu0 0.0
    %275 = vmatprep.subr.mxu0 0.0
    %276 = vmatpush2.xpose.msra.mxu0 0.0
    %277 = vmatprep.subr.mxu0 0.0
    %278 = vmatpush2.xpose.msra.mxu0 0.0
    %279 = vmatprep.subr.mxu0 0.0
    %280 = vmatpush2.xpose.msra.mxu0 0.0
    %281 = vmatprep.subr.mxu0 0.0
    %282 = vmatpush2.xpose.msra.mxu0 0.0
    %283 = vmatprep.subr.mxu0 0.0
    %284 = vmatpush2.xpose.msra.mxu0 0.0
    %285 = vmatprep.subr.mxu0 0.0
    %286 = vmatpush2.xpose.msra.mxu0 0.0
    %287 = vmatprep.subr.mxu0 0.0
    %288 = vmatpush2.xpose.msra.mxu0 0.0
    %289 = vmatprep.subr.mxu0 0.0
    %290 = vmatpush2.xpose.msra.mxu0 0.0
    %291 = vmatprep.subr.mxu0 0.0
    %292 = vmatpush2.xpose.msra.mxu0 0.0
    %293 = vmatprep.mubr.f32.mxu0 0.0
    %294 = vmatmul.mubr.f32.gmra.mxu0 %v145
    %v295 = vpop.f32.mrf.mxu0
    %v296 = vadd.f32 0.0, %v295
    %v297 = vpop.f32.mrf.mxu0
    %298 = vdwg.mxu0
    %v299 = vmul.f32 %v224, %v296
    %300 = vst.msk [vmem:[#allocation5] sm:$0x3] %vm227, %v299
    // Predicated region
    $region26: #{clip_forward.9} parent=1 // pred_check
      _
    $region27: #{clip_forward.9} parent=1 // pred_check_branch
      %302 = sbr.rel (0) target = $region29
    $region28: #{clip_forward.9} parent=1 // pred_region
      %s304 = ssub.s32 32, 32
      %305 = vsyncadd [#allocation4], %s304
      %s307 = sshll.u32 [#allocation3], 4
      %s308 = int_to_ptr.vmem [resolvable:$true] %s307
      %310 = dma.vmem_to_hbm [thread:$0]  %s308, 32, %s6, [#allocation4]
    $region29: #{clip_forward.9} parent=1 // pred_fallthru
      _
    // Predicated region
    $region30: #{clip_forward.9} parent=1 // pred_check
      _
    $region31: #{clip_forward.9} parent=1 // pred_check_branch
      %312 = sbr.rel (0) target = $region33
    $region32: #{clip_forward.9} parent=1 // pred_region
      %s314 = ssub.s32 32, 32
      %315 = vsyncadd [#allocation6], %s314
      %s317 = sshll.u32 [#allocation5], 4
      %s318 = int_to_ptr.vmem [resolvable:$true] %s317
      %320 = dma.vmem_to_hbm [thread:$0]  %s318, 32, %s7, [#allocation6]
    $region33: #{clip_forward.9} parent=1 // pred_fallthru
      _
    // Predicated region
    $region34: #{clip_forward.9} parent=1 // pred_check
      _
    $region35: #{clip_forward.9} parent=1 // pred_check_branch
      %322 = sbr.rel (0) target = $region37
    $region36: #{clip_forward.9} parent=1 // pred_region
      %323 = dma.done [#allocation4], 32
    $region37: #{clip_forward.9} parent=1 // pred_fallthru
      _
    // Predicated region
    $region38: #{clip_forward.9} parent=1 // pred_check
      _
    $region39: #{clip_forward.9} parent=1 // pred_check_branch
      %325 = sbr.rel (0) target = $region41
    $region40: #{clip_forward.9} parent=1 // pred_region
      %326 = dma.done [#allocation6], 32
    $region41: #{clip_forward.9} parent=1 // pred_fallthru
      _
    %327 = vsyncpa [#allocation4], 1
    %328 = vsyncpa [#allocation6], 1

// kernel: clip_forward.8
$region0: #{clip_forward.8}
  #allocation0 [shape = 'u32[]', space=smem, size = 0x4, offset = 0x4, fixed_abs, tag = 'smem constant byte address 0x4 - core index']
  #allocation1 [shape = 'u32[144,128]{1,0:T(1,128)}', space=vmem, size = 0x12000, scoped, tag = 'internal scratch']
  %s0 = inlined_call_operand.vmem [shape: f32[2,8,32], index: 0, kind: input, shape index: {}]
  %s1 = inlined_call_operand.vmem [shape: f32[2,1,32], index: 1, kind: input, shape index: {}]
  %s2 = inlined_call_operand.vmem [shape: f32[2,1,32], index: 2, kind: input, shape index: {}]
  %s3 = inlined_call_operand.vmem [shape: bf16[2,3,2,32,16], index: 3, kind: input, shape index: {}]
  %s4 = inlined_call_operand.vmem [shape: f32[2,3,2,1,16], index: 4, kind: input, shape index: {}]
  %s5 = inlined_call_operand.vmem [shape: bf16[2,2,16,32], index: 5, kind: input, shape index: {}]
  %s6 = inlined_call_operand.vmem [shape: f32[2,1,32], index: 6, kind: input, shape index: {}]
  %s7 = inlined_call_operand.vmem [shape: f32[2,1,32], index: 7, kind: input, shape index: {}]
  %s8 = inlined_call_operand.vmem [shape: f32[2,1,32], index: 8, kind: input, shape index: {}]
  %s9 = inlined_call_operand.vmem [shape: bf16[2,32,128], index: 9, kind: input, shape index: {}]
  %s10 = inlined_call_operand.vmem [shape: f32[2,1,128], index: 10, kind: input, shape index: {}]
  %s11 = inlined_call_operand.vmem [shape: bf16[2,128,32], index: 11, kind: input, shape index: {}]
  %s12 = inlined_call_operand.vmem [shape: f32[2,1,32], index: 12, kind: input, shape index: {}]
  %s13 = inlined_call_operand.vmem [shape: f32[2,8,32], index: 13, kind: output, shape index: {}]
  %s14 = sld [smem:[#allocation0]]
  $region89: #{clip_forward.8} parent=0
    _
  %s16 = ssub.s32 1, %s14
  %s17 = scalar_select 0, %s16, %s14
  loop: start=0, step=1, limit=6
  $region2: #{clip_forward.8} parent=0 // loop_pre_header
    _
  $region3: #{clip_forward.8} parent=0 // loop_header
    %s19 = sphi 0, %s23
    %p20 = scmp.ge.s32.totalorder %s19, 6
    %s26 = sphi 0, %s38
    %s27 = sphi 0, %s34
    %s28 = sphi 0, %s26
    %s29 = sphi 0, %s27
    %s30 = sphi 0, %s28
    %s31 = sphi 0, %s29
    %s41 = sphi 0, %s43
    %s44 = sphi 0, %s41
    %s45 = sphi 0, %s44
    %s61 = sphi 0, %s45
    %s67 = sphi 0, %s69
    %s70 = sphi 0, %s67
    %s71 = sphi 0, %s70
    %s87 = sphi 0, %s71
    %s93 = sphi 0, %s95
    %s96 = sphi 0, %s93
    %s97 = sphi 0, %s96
    %s113 = sphi 0, %s97
    %s119 = sphi 0, %s121
    %s122 = sphi 0, %s119
    %s123 = sphi 0, %s122
    %s139 = sphi 0, %s123
    %s145 = sphi 0, %s147
    %s148 = sphi 0, %s145
    %s149 = sphi 0, %s148
    %s165 = sphi 0, %s149
    %s171 = sphi 0, %s173
    %s174 = sphi 0, %s171
    %s175 = sphi 0, %s174
    %s191 = sphi 0, %s175
    %s197 = sphi 0, %s199
    %s200 = sphi 0, %s197
    %s201 = sphi 0, %s200
    %s217 = sphi 0, %s201
    %s223 = sphi 0, %s225
    %s226 = sphi 0, %s223
    %s227 = sphi 0, %s226
    %s243 = sphi 0, %s227
    %s249 = sphi 0, %s251
    %s252 = sphi 0, %s249
    %s253 = sphi 0, %s252
    %s269 = sphi 0, %s253
    %s275 = sphi 0, %s277
    %s278 = sphi 0, %s275
    %s279 = sphi 0, %s278
    %s295 = sphi 0, %s279
    %s301 = sphi 0, %s303
    %s304 = sphi 0, %s301
    %s305 = sphi 0, %s304
    %s321 = sphi 0, %s305
    %s327 = sphi 0, %s329
    %s330 = sphi 0, %s327
    %s331 = sphi 0, %s330
    %s347 = sphi 0, %s331
    %s353 = sphi 0, %s355
    %s356 = sphi 0, %s353
    %s357 = sphi 0, %s356
    %s373 = sphi 0, %s357
    %s379 = sphi 0, %s381
    %s382 = sphi 0, %s379
    %s383 = sphi 0, %s382
    %s399 = sphi 0, %s383
  $region4: #{clip_forward.8} parent=0 // loop_header_branch
    %22 = sbr.rel (%p20) target = $region8
  $region5: #{clip_forward.8} parent=0 // loop_body
    %s24 = ssub.s32 %s19, 1
    %s25 = ssub.s32 %s19, 2
    %s32 = sadd.s32 1, %s27
    %p33 = scmp.ge.s32.totalorder %s32, 2
    %s34 = scalar_select %p33, 0, %s32
    %s35 = sadd.s32 1, %s26
    %s36 = scalar_select %p33, %s35, %s26
    %p37 = scmp.ge.s32.totalorder %s36, 2
    %s38 = scalar_select %p37, 0, %s36
    %s39 = ssub.s32 %s26, %s38
    %p40 = scmp.eq.s32.totalorder %s39, 0
    %s42 = sadd.s32 %s41, 1
    %s43 = scalar_select %p40, %s41, %s42
    %p46 = pneg %p40
    %p47 = scmp.eq.s32.totalorder %s19, 3
    %p48 = por %p46, %p47
    %p49 = scmp.ne.s32.totalorder %s41, %s44
    %p50 = scmp.eq.s32.totalorder %s19, 0
    %p51 = por %p49, %p50
    %p52 = scmp.ne.s32.totalorder %s41, %s44
    %p53 = scmp.eq.s32.totalorder %s24, 3
    %p54 = por %p52, %p53
    %p55 = scmp.ne.s32.totalorder %s44, %s45
    %p56 = scmp.eq.s32.totalorder %s24, 0
    %p57 = por %p55, %p56
    %p58 = scmp.ne.s32.totalorder %s44, %s45
    %p59 = scmp.eq.s32.totalorder %s25, 3
    %p60 = por %p58, %p59
    %p62 = scmp.ne.s32.totalorder %s45, %s61
    %p63 = scmp.eq.s32.totalorder %s25, 0
    %p64 = por %p62, %p63
    %s65 = ssub.s32 %s27, %s34
    %p66 = scmp.eq.s32.totalorder %s65, 0
    %s68 = sadd.s32 %s67, 1
    %s69 = scalar_select %p66, %s67, %s68
    %p72 = pneg %p66
    %p73 = scmp.eq.s32.totalorder %s19, 3
    %p74 = por %p72, %p73
    %p75 = scmp.ne.s32.totalorder %s67, %s70
    %p76 = scmp.eq.s32.totalorder %s19, 0
    %p77 = por %p75, %p76
    %p78 = scmp.ne.s32.totalorder %s67, %s70
    %p79 = scmp.eq.s32.totalorder %s24, 3
    %p80 = por %p78, %p79
    %p81 = scmp.ne.s32.totalorder %s70, %s71
    %p82 = scmp.eq.s32.totalorder %s24, 0
    %p83 = por %p81, %p82
    %p84 = scmp.ne.s32.totalorder %s70, %s71
    %p85 = scmp.eq.s32.totalorder %s25, 3
    %p86 = por %p84, %p85
    %p88 = scmp.ne.s32.totalorder %s71, %s87
    %p89 = scmp.eq.s32.totalorder %s25, 0
    %p90 = por %p88, %p89
    %s91 = ssub.s32 %s27, %s34
    %p92 = scmp.eq.s32.totalorder %s91, 0
    %s94 = sadd.s32 %s93, 1
    %s95 = scalar_select %p92, %s93, %s94
    %p98 = pneg %p92
    %p99 = scmp.eq.s32.totalorder %s19, 3
    %p100 = por %p98, %p99
    %p101 = scmp.ne.s32.totalorder %s93, %s96
    %p102 = scmp.eq.s32.totalorder %s19, 0
    %p103 = por %p101, %p102
    %p104 = scmp.ne.s32.totalorder %s93, %s96
    %p105 = scmp.eq.s32.totalorder %s24, 3
    %p106 = por %p104, %p105
    %p107 = scmp.ne.s32.totalorder %s96, %s97
    %p108 = scmp.eq.s32.totalorder %s24, 0
    %p109 = por %p107, %p108
    %p110 = scmp.ne.s32.totalorder %s96, %s97
    %p111 = scmp.eq.s32.totalorder %s25, 3
    %p112 = por %p110, %p111
    %p114 = scmp.ne.s32.totalorder %s97, %s113
    %p115 = scmp.eq.s32.totalorder %s25, 0
    %p116 = por %p114, %p115
    %s117 = ssub.s32 %s27, %s34
    %p118 = scmp.eq.s32.totalorder %s117, 0
    %s120 = sadd.s32 %s119, 1
    %s121 = scalar_select %p118, %s119, %s120
    %p124 = pneg %p118
    %p125 = scmp.eq.s32.totalorder %s19, 3
    %p126 = por %p124, %p125
    %p127 = scmp.ne.s32.totalorder %s119, %s122
    %p128 = scmp.eq.s32.totalorder %s19, 0
    %p129 = por %p127, %p128
    %p130 = scmp.ne.s32.totalorder %s119, %s122
    %p131 = scmp.eq.s32.totalorder %s24, 3
    %p132 = por %p130, %p131
    %p133 = scmp.ne.s32.totalorder %s122, %s123
    %p134 = scmp.eq.s32.totalorder %s24, 0
    %p135 = por %p133, %p134
    %p136 = scmp.ne.s32.totalorder %s122, %s123
    %p137 = scmp.eq.s32.totalorder %s25, 3
    %p138 = por %p136, %p137
    %p140 = scmp.ne.s32.totalorder %s123, %s139
    %p141 = scmp.eq.s32.totalorder %s25, 0
    %p142 = por %p140, %p141
    %s143 = ssub.s32 %s27, %s34
    %p144 = scmp.eq.s32.totalorder %s143, 0
    %s146 = sadd.s32 %s145, 1
    %s147 = scalar_select %p144, %s145, %s146
    %p150 = pneg %p144
    %p151 = scmp.eq.s32.totalorder %s19, 3
    %p152 = por %p150, %p151
    %p153 = scmp.ne.s32.totalorder %s145, %s148
    %p154 = scmp.eq.s32.totalorder %s19, 0
    %p155 = por %p153, %p154
    %p156 = scmp.ne.s32.totalorder %s145, %s148
    %p157 = scmp.eq.s32.totalorder %s24, 3
    %p158 = por %p156, %p157
    %p159 = scmp.ne.s32.totalorder %s148, %s149
    %p160 = scmp.eq.s32.totalorder %s24, 0
    %p161 = por %p159, %p160
    %p162 = scmp.ne.s32.totalorder %s148, %s149
    %p163 = scmp.eq.s32.totalorder %s25, 3
    %p164 = por %p162, %p163
    %p166 = scmp.ne.s32.totalorder %s149, %s165
    %p167 = scmp.eq.s32.totalorder %s25, 0
    %p168 = por %p166, %p167
    %s169 = ssub.s32 %s27, %s34
    %p170 = scmp.eq.s32.totalorder %s169, 0
    %s172 = sadd.s32 %s171, 1
    %s173 = scalar_select %p170, %s171, %s172
    %p176 = pneg %p170
    %p177 = scmp.eq.s32.totalorder %s19, 3
    %p178 = por %p176, %p177
    %p179 = scmp.ne.s32.totalorder %s171, %s174
    %p180 = scmp.eq.s32.totalorder %s19, 0
    %p181 = por %p179, %p180
    %p182 = scmp.ne.s32.totalorder %s171, %s174
    %p183 = scmp.eq.s32.totalorder %s24, 3
    %p184 = por %p182, %p183
    %p185 = scmp.ne.s32.totalorder %s174, %s175
    %p186 = scmp.eq.s32.totalorder %s24, 0
    %p187 = por %p185, %p186
    %p188 = scmp.ne.s32.totalorder %s174, %s175
    %p189 = scmp.eq.s32.totalorder %s25, 3
    %p190 = por %p188, %p189
    %p192 = scmp.ne.s32.totalorder %s175, %s191
    %p193 = scmp.eq.s32.totalorder %s25, 0
    %p194 = por %p192, %p193
    %s195 = ssub.s32 %s27, %s34
    %p196 = scmp.eq.s32.totalorder %s195, 0
    %s198 = sadd.s32 %s197, 1
    %s199 = scalar_select %p196, %s197, %s198
    %p202 = pneg %p196
    %p203 = scmp.eq.s32.totalorder %s19, 3
    %p204 = por %p202, %p203
    %p205 = scmp.ne.s32.totalorder %s197, %s200
    %p206 = scmp.eq.s32.totalorder %s19, 0
    %p207 = por %p205, %p206
    %p208 = scmp.ne.s32.totalorder %s197, %s200
    %p209 = scmp.eq.s32.totalorder %s24, 3
    %p210 = por %p208, %p209
    %p211 = scmp.ne.s32.totalorder %s200, %s201
    %p212 = scmp.eq.s32.totalorder %s24, 0
    %p213 = por %p211, %p212
    %p214 = scmp.ne.s32.totalorder %s200, %s201
    %p215 = scmp.eq.s32.totalorder %s25, 3
    %p216 = por %p214, %p215
    %p218 = scmp.ne.s32.totalorder %s201, %s217
    %p219 = scmp.eq.s32.totalorder %s25, 0
    %p220 = por %p218, %p219
    %s221 = ssub.s32 %s27, %s34
    %p222 = scmp.eq.s32.totalorder %s221, 0
    %s224 = sadd.s32 %s223, 1
    %s225 = scalar_select %p222, %s223, %s224
    %p228 = pneg %p222
    %p229 = scmp.eq.s32.totalorder %s19, 3
    %p230 = por %p228, %p229
    %p231 = scmp.ne.s32.totalorder %s223, %s226
    %p232 = scmp.eq.s32.totalorder %s19, 0
    %p233 = por %p231, %p232
    %p234 = scmp.ne.s32.totalorder %s223, %s226
    %p235 = scmp.eq.s32.totalorder %s24, 3
    %p236 = por %p234, %p235
    %p237 = scmp.ne.s32.totalorder %s226, %s227
    %p238 = scmp.eq.s32.totalorder %s24, 0
    %p239 = por %p237, %p238
    %p240 = scmp.ne.s32.totalorder %s226, %s227
    %p241 = scmp.eq.s32.totalorder %s25, 3
    %p242 = por %p240, %p241
    %p244 = scmp.ne.s32.totalorder %s227, %s243
    %p245 = scmp.eq.s32.totalorder %s25, 0
    %p246 = por %p244, %p245
    %s247 = ssub.s32 %s27, %s34
    %p248 = scmp.eq.s32.totalorder %s247, 0
    %s250 = sadd.s32 %s249, 1
    %s251 = scalar_select %p248, %s249, %s250
    %p254 = pneg %p248
    %p255 = scmp.eq.s32.totalorder %s19, 3
    %p256 = por %p254, %p255
    %p257 = scmp.ne.s32.totalorder %s249, %s252
    %p258 = scmp.eq.s32.totalorder %s19, 0
    %p259 = por %p257, %p258
    %p260 = scmp.ne.s32.totalorder %s249, %s252
    %p261 = scmp.eq.s32.totalorder %s24, 3
    %p262 = por %p260, %p261
    %p263 = scmp.ne.s32.totalorder %s252, %s253
    %p264 = scmp.eq.s32.totalorder %s24, 0
    %p265 = por %p263, %p264
    %p266 = scmp.ne.s32.totalorder %s252, %s253
    %p267 = scmp.eq.s32.totalorder %s25, 3
    %p268 = por %p266, %p267
    %p270 = scmp.ne.s32.totalorder %s253, %s269
    %p271 = scmp.eq.s32.totalorder %s25, 0
    %p272 = por %p270, %p271
    %s273 = ssub.s32 %s27, %s34
    %p274 = scmp.eq.s32.totalorder %s273, 0
    %s276 = sadd.s32 %s275, 1
    %s277 = scalar_select %p274, %s275, %s276
    %p280 = pneg %p274
    %p281 = scmp.eq.s32.totalorder %s19, 3
    %p282 = por %p280, %p281
    %p283 = scmp.ne.s32.totalorder %s275, %s278
    %p284 = scmp.eq.s32.totalorder %s19, 0
    %p285 = por %p283, %p284
    %p286 = scmp.ne.s32.totalorder %s275, %s278
    %p287 = scmp.eq.s32.totalorder %s24, 3
    %p288 = por %p286, %p287
    %p289 = scmp.ne.s32.totalorder %s278, %s279
    %p290 = scmp.eq.s32.totalorder %s24, 0
    %p291 = por %p289, %p290
    %p292 = scmp.ne.s32.totalorder %s278, %s279
    %p293 = scmp.eq.s32.totalorder %s25, 3
    %p294 = por %p292, %p293
    %p296 = scmp.ne.s32.totalorder %s279, %s295
    %p297 = scmp.eq.s32.totalorder %s25, 0
    %p298 = por %p296, %p297
    %s299 = ssub.s32 %s27, %s34
    %p300 = scmp.eq.s32.totalorder %s299, 0
    %s302 = sadd.s32 %s301, 1
    %s303 = scalar_select %p300, %s301, %s302
    %p306 = pneg %p300
    %p307 = scmp.eq.s32.totalorder %s19, 3
    %p308 = por %p306, %p307
    %p309 = scmp.ne.s32.totalorder %s301, %s304
    %p310 = scmp.eq.s32.totalorder %s19, 0
    %p311 = por %p309, %p310
    %p312 = scmp.ne.s32.totalorder %s301, %s304
    %p313 = scmp.eq.s32.totalorder %s24, 3
    %p314 = por %p312, %p313
    %p315 = scmp.ne.s32.totalorder %s304, %s305
    %p316 = scmp.eq.s32.totalorder %s24, 0
    %p317 = por %p315, %p316
    %p318 = scmp.ne.s32.totalorder %s304, %s305
    %p319 = scmp.eq.s32.totalorder %s25, 3
    %p320 = por %p318, %p319
    %p322 = scmp.ne.s32.totalorder %s305, %s321
    %p323 = scmp.eq.s32.totalorder %s25, 0
    %p324 = por %p322, %p323
    %s325 = ssub.s32 %s27, %s34
    %p326 = scmp.eq.s32.totalorder %s325, 0
    %s328 = sadd.s32 %s327, 1
    %s329 = scalar_select %p326, %s327, %s328
    %p332 = pneg %p326
    %p333 = scmp.eq.s32.totalorder %s19, 3
    %p334 = por %p332, %p333
    %p335 = scmp.ne.s32.totalorder %s327, %s330
    %p336 = scmp.eq.s32.totalorder %s19, 0
    %p337 = por %p335, %p336
    %p338 = scmp.ne.s32.totalorder %s327, %s330
    %p339 = scmp.eq.s32.totalorder %s24, 3
    %p340 = por %p338, %p339
    %p341 = scmp.ne.s32.totalorder %s330, %s331
    %p342 = scmp.eq.s32.totalorder %s24, 0
    %p343 = por %p341, %p342
    %p344 = scmp.ne.s32.totalorder %s330, %s331
    %p345 = scmp.eq.s32.totalorder %s25, 3
    %p346 = por %p344, %p345
    %p348 = scmp.ne.s32.totalorder %s331, %s347
    %p349 = scmp.eq.s32.totalorder %s25, 0
    %p350 = por %p348, %p349
    %s351 = ssub.s32 %s27, %s34
    %p352 = scmp.eq.s32.totalorder %s351, 0
    %s354 = sadd.s32 %s353, 1
    %s355 = scalar_select %p352, %s353, %s354
    %p358 = pneg %p352
    %p359 = scmp.eq.s32.totalorder %s19, 3
    %p360 = por %p358, %p359
    %p361 = scmp.ne.s32.totalorder %s353, %s356
    %p362 = scmp.eq.s32.totalorder %s19, 0
    %p363 = por %p361, %p362
    %p364 = scmp.ne.s32.totalorder %s353, %s356
    %p365 = scmp.eq.s32.totalorder %s24, 3
    %p366 = por %p364, %p365
    %p367 = scmp.ne.s32.totalorder %s356, %s357
    %p368 = scmp.eq.s32.totalorder %s24, 0
    %p369 = por %p367, %p368
    %p370 = scmp.ne.s32.totalorder %s356, %s357
    %p371 = scmp.eq.s32.totalorder %s25, 3
    %p372 = por %p370, %p371
    %p374 = scmp.ne.s32.totalorder %s357, %s373
    %p375 = scmp.eq.s32.totalorder %s25, 0
    %p376 = por %p374, %p375
    %s377 = ssub.s32 %s26, %s38
    %p378 = scmp.eq.s32.totalorder %s377, 0
    %s380 = sadd.s32 %s379, 1
    %s381 = scalar_select %p378, %s379, %s380
    %p384 = pneg %p378
    %p385 = scmp.eq.s32.totalorder %s19, 3
    %p386 = por %p384, %p385
    %p387 = scmp.ne.s32.totalorder %s379, %s382
    %p388 = scmp.eq.s32.totalorder %s19, 0
    %p389 = por %p387, %p388
    %p390 = scmp.ne.s32.totalorder %s379, %s382
    %p391 = scmp.eq.s32.totalorder %s24, 3
    %p392 = por %p390, %p391
    %p393 = scmp.ne.s32.totalorder %s382, %s383
    %p394 = scmp.eq.s32.totalorder %s24, 0
    %p395 = por %p393, %p394
    %p396 = scmp.ne.s32.totalorder %s382, %s383
    %p397 = scmp.eq.s32.totalorder %s25, 3
    %p398 = por %p396, %p397
    %p400 = scmp.ne.s32.totalorder %s383, %s399
    %p401 = scmp.eq.s32.totalorder %s25, 0
    %p402 = por %p400, %p401
    %p403 = scmp.le.s32.totalorder 1, %s19
    %p404 = scmp.lt.s32.totalorder %s19, 5
    %p405 = pnand %p403, %p404
    %p406 = pneg %p405
    // Predicated region
    $region9: #{clip_forward.8} parent=5 // pred_check
      _
    $region10: #{clip_forward.8} parent=5 // pred_check_branch
      %408 = sbr.rel (%p405) target = $region12
    $region11: #{clip_forward.8} parent=5 // pred_region
      %s409 = ssub.s32 %s19, 1
    $region12: #{clip_forward.8} parent=5 // pred_fallthru
      _
    %p410 = scmp.lt.s32.totalorder %s19, 4
    // Predicated region
    $region13: #{clip_forward.8} parent=5 // pred_check
      %p411 = pneg %p410
    $region14: #{clip_forward.8} parent=5 // pred_check_branch
      %413 = sbr.rel (%p411) target = $region16
    $region15: #{clip_forward.8} parent=5 // pred_region
      // Predicated region
      $region17: #{clip_forward.8} parent=15 // pred_check
        %p414 = pneg %p51
      $region18: #{clip_forward.8} parent=15 // pred_check_branch
        %416 = sbr.rel (%p414) target = $region20
      $region19: #{clip_forward.8} parent=15 // pred_region
        %p417 = scmp.lt.s32.totalorder %s26, 1
        %s418 = scalar_select %p417, %s26, 1
        %s419 = smul.addr %s418, 8
        %s420 = scalar_lea.vmem %s0, %s419
      $region20: #{clip_forward.8} parent=15 // pred_fallthru
        _
      // Predicated region
      $region21: #{clip_forward.8} parent=15 // pred_check
        %p421 = pneg %p77
      $region22: #{clip_forward.8} parent=15 // pred_check_branch
        %423 = sbr.rel (%p421) target = $region24
      $region23: #{clip_forward.8} parent=15 // pred_region
        %p424 = scmp.lt.s32.totalorder %s27, 1
        %s425 = scalar_select %p424, %s27, 1
        %s426 = scalar_lea.vmem %s1, %s425
      $region24: #{clip_forward.8} parent=15 // pred_fallthru
        _
      // Predicated region
      $region25: #{clip_forward.8} parent=15 // pred_check
        %p427 = pneg %p103
      $region26: #{clip_forward.8} parent=15 // pred_check_branch
        %429 = sbr.rel (%p427) target = $region28
      $region27: #{clip_forward.8} parent=15 // pred_region
        %p430 = scmp.lt.s32.totalorder %s27, 1
        %s431 = scalar_select %p430, %s27, 1
        %s432 = scalar_lea.vmem %s2, %s431
      $region28: #{clip_forward.8} parent=15 // pred_fallthru
        _
      // Predicated region
      $region29: #{clip_forward.8} parent=15 // pred_check
        %p433 = pneg %p129
      $region30: #{clip_forward.8} parent=15 // pred_check_branch
        %435 = sbr.rel (%p433) target = $region32
      $region31: #{clip_forward.8} parent=15 // pred_region
        %p436 = scmp.lt.s32.totalorder %s27, 1
        %s437 = scalar_select %p436, %s27, 1
        %s438 = smul.addr %s437, 24
        %s439 = smul.addr %s438, 4
        %s440 = scalar_lea.vmem %s3, %s439
      $region32: #{clip_forward.8} parent=15 // pred_fallthru
        _
      // Predicated region
      $region33: #{clip_forward.8} parent=15 // pred_check
        %p441 = pneg %p155
      $region34: #{clip_forward.8} parent=15 // pred_check_branch
        %443 = sbr.rel (%p441) target = $region36
      $region35: #{clip_forward.8} parent=15 // pred_region
        %p444 = scmp.lt.s32.totalorder %s27, 1
        %s445 = scalar_select %p444, %s27, 1
        %s446 = smul.addr %s445, 6
        %s447 = scalar_lea.vmem %s4, %s446
      $region36: #{clip_forward.8} parent=15 // pred_fallthru
        _
      // Predicated region
      $region37: #{clip_forward.8} parent=15 // pred_check
        %p448 = pneg %p181
      $region38: #{clip_forward.8} parent=15 // pred_check_branch
        %450 = sbr.rel (%p448) target = $region40
      $region39: #{clip_forward.8} parent=15 // pred_region
        %p451 = scmp.lt.s32.totalorder %s27, 1
        %s452 = scalar_select %p451, %s27, 1
        %s453 = smul.addr %s452, 4
        %s454 = smul.addr %s453, 4
        %s455 = scalar_lea.vmem %s5, %s454
      $region40: #{clip_forward.8} parent=15 // pred_fallthru
        _
      // Predicated region
      $region41: #{clip_forward.8} parent=15 // pred_check
        %p456 = pneg %p207
      $region42: #{clip_forward.8} parent=15 // pred_check_branch
        %458 = sbr.rel (%p456) target = $region44
      $region43: #{clip_forward.8} parent=15 // pred_region
        %p459 = scmp.lt.s32.totalorder %s27, 1
        %s460 = scalar_select %p459, %s27, 1
        %s461 = scalar_lea.vmem %s6, %s460
      $region44: #{clip_forward.8} parent=15 // pred_fallthru
        _
      // Predicated region
      $region45: #{clip_forward.8} parent=15 // pred_check
        %p462 = pneg %p233
      $region46: #{clip_forward.8} parent=15 // pred_check_branch
        %464 = sbr.rel (%p462) target = $region48
      $region47: #{clip_forward.8} parent=15 // pred_region
        %p465 = scmp.lt.s32.totalorder %s27, 1
        %s466 = scalar_select %p465, %s27, 1
        %s467 = scalar_lea.vmem %s7, %s466
      $region48: #{clip_forward.8} parent=15 // pred_fallthru
        _
      // Predicated region
      $region49: #{clip_forward.8} parent=15 // pred_check
        %p468 = pneg %p259
      $region50: #{clip_forward.8} parent=15 // pred_check_branch
        %470 = sbr.rel (%p468) target = $region52
      $region51: #{clip_forward.8} parent=15 // pred_region
        %p471 = scmp.lt.s32.totalorder %s27, 1
        %s472 = scalar_select %p471, %s27, 1
        %s473 = scalar_lea.vmem %s8, %s472
      $region52: #{clip_forward.8} parent=15 // pred_fallthru
        _
      // Predicated region
      $region53: #{clip_forward.8} parent=15 // pred_check
        %p474 = pneg %p285
      $region54: #{clip_forward.8} parent=15 // pred_check_branch
        %476 = sbr.rel (%p474) target = $region56
      $region55: #{clip_forward.8} parent=15 // pred_region
        %p477 = scmp.lt.s32.totalorder %s27, 1
        %s478 = scalar_select %p477, %s27, 1
        %s479 = smul.addr %s478, 4
        %s480 = smul.addr %s479, 4
        %s481 = scalar_lea.vmem %s9, %s480
      $region56: #{clip_forward.8} parent=15 // pred_fallthru
        _
      // Predicated region
      $region57: #{clip_forward.8} parent=15 // pred_check
        %p482 = pneg %p311
      $region58: #{clip_forward.8} parent=15 // pred_check_branch
        %484 = sbr.rel (%p482) target = $region60
      $region59: #{clip_forward.8} parent=15 // pred_region
        %p485 = scmp.lt.s32.totalorder %s27, 1
        %s486 = scalar_select %p485, %s27, 1
        %s487 = scalar_lea.vmem %s10, %s486
      $region60: #{clip_forward.8} parent=15 // pred_fallthru
        _
      // Predicated region
      $region61: #{clip_forward.8} parent=15 // pred_check
        %p488 = pneg %p337
      $region62: #{clip_forward.8} parent=15 // pred_check_branch
        %490 = sbr.rel (%p488) target = $region64
      $region63: #{clip_forward.8} parent=15 // pred_region
        %p491 = scmp.lt.s32.totalorder %s27, 1
        %s492 = scalar_select %p491, %s27, 1
        %s493 = smul.addr %s492, 16
        %s494 = smul.addr %s493, 4
        %s495 = scalar_lea.vmem %s11, %s494
      $region64: #{clip_forward.8} parent=15 // pred_fallthru
        _
      // Predicated region
      $region65: #{clip_forward.8} parent=15 // pred_check
        %p496 = pneg %p363
      $region66: #{clip_forward.8} parent=15 // pred_check_branch
        %498 = sbr.rel (%p496) target = $region68
      $region67: #{clip_forward.8} parent=15 // pred_region
        %p499 = scmp.lt.s32.totalorder %s27, 1
        %s500 = scalar_select %p499, %s27, 1
        %s501 = scalar_lea.vmem %s12, %s500
      $region68: #{clip_forward.8} parent=15 // pred_fallthru
        _
    $region16: #{clip_forward.8} parent=5 // pred_fallthru
      _
    %p502 = scmp.le.s32.totalorder 1, %s19
    %p503 = scmp.lt.s32.totalorder %s19, 5
    %p504 = pnand %p502, %p503
    %p505 = pneg %p504
    // Predicated region
    $region69: #{clip_forward.8} parent=5 // pred_check
      _
    $region70: #{clip_forward.8} parent=5 // pred_check_branch
      %507 = sbr.rel (%p504) target = $region72
    $region71: #{clip_forward.8} parent=5 // pred_region
      %s508 = ssub.s32 %s19, 1
      %p509 = scmp.lt.s32.totalorder %s28, 1
      %s510 = scalar_select %p509, %s28, 1
      %s511 = smul.addr %s510, 8
      %s512 = scalar_lea.vmem %s0, %s511
      %p513 = pneg %p57
      %p514 = pneg %p54
      %p515 = scmp.lt.s32.totalorder %s29, 1
      %s516 = scalar_select %p515, %s29, 1
      %s517 = scalar_lea.vmem %s1, %s516
      %p518 = pneg %p83
      %p519 = pneg %p80
      %p520 = scmp.lt.s32.totalorder %s29, 1
      %s521 = scalar_select %p520, %s29, 1
      %s522 = scalar_lea.vmem %s2, %s521
      %p523 = pneg %p109
      %p524 = pneg %p106
      %p525 = scmp.lt.s32.totalorder %s29, 1
      %s526 = scalar_select %p525, %s29, 1
      %s527 = smul.addr %s526, 24
      %s528 = smul.addr %s527, 4
      %s529 = scalar_lea.vmem %s3, %s528
      %p530 = pneg %p135
      %p531 = pneg %p132
      %p532 = scmp.lt.s32.totalorder %s29, 1
      %s533 = scalar_select %p532, %s29, 1
      %s534 = smul.addr %s533, 6
      %s535 = scalar_lea.vmem %s4, %s534
      %p536 = pneg %p161
      %p537 = pneg %p158
      %p538 = scmp.lt.s32.totalorder %s29, 1
      %s539 = scalar_select %p538, %s29, 1
      %s540 = smul.addr %s539, 4
      %s541 = smul.addr %s540, 4
      %s542 = scalar_lea.vmem %s5, %s541
      %p543 = pneg %p187
      %p544 = pneg %p184
      %p545 = scmp.lt.s32.totalorder %s29, 1
      %s546 = scalar_select %p545, %s29, 1
      %s547 = scalar_lea.vmem %s6, %s546
      %p548 = pneg %p213
      %p549 = pneg %p210
      %p550 = scmp.lt.s32.totalorder %s29, 1
      %s551 = scalar_select %p550, %s29, 1
      %s552 = scalar_lea.vmem %s7, %s551
      %p553 = pneg %p239
      %p554 = pneg %p236
      %p555 = scmp.lt.s32.totalorder %s29, 1
      %s556 = scalar_select %p555, %s29, 1
      %s557 = scalar_lea.vmem %s8, %s556
      %p558 = pneg %p265
      %p559 = pneg %p262
      %p560 = scmp.lt.s32.totalorder %s29, 1
      %s561 = scalar_select %p560, %s29, 1
      %s562 = smul.addr %s561, 4
      %s563 = smul.addr %s562, 4
      %s564 = scalar_lea.vmem %s9, %s563
      %p565 = pneg %p291
      %p566 = pneg %p288
      %p567 = scmp.lt.s32.totalorder %s29, 1
      %s568 = scalar_select %p567, %s29, 1
      %s569 = scalar_lea.vmem %s10, %s568
      %p570 = pneg %p317
      %p571 = pneg %p314
      %p572 = scmp.lt.s32.totalorder %s29, 1
      %s573 = scalar_select %p572, %s29, 1
      %s574 = smul.addr %s573, 16
      %s575 = smul.addr %s574, 4
      %s576 = scalar_lea.vmem %s11, %s575
      %p577 = pneg %p343
      %p578 = pneg %p340
      %p579 = scmp.lt.s32.totalorder %s29, 1
      %s580 = scalar_select %p579, %s29, 1
      %s581 = scalar_lea.vmem %s12, %s580
      %p582 = pneg %p369
      %p583 = pneg %p366
      %p584 = pneg %p395
      %p585 = pneg %p392
      %p586 = scmp.lt.s32.totalorder %s28, 1
      %s587 = scalar_select %p586, %s28, 1
      %s588 = smul.addr %s587, 8
      %s589 = scalar_lea.vmem %s13, %s588
      %p590 = scmp.lt.s32.totalorder %s28, 1
      %s591 = scalar_select %p590, %s28, 1
      %s592 = smul.addr %s591, 8
      %s593 = scalar_lea.vmem %s0, %s592
      %p594 = scmp.lt.s32.totalorder %s29, 1
      %s595 = scalar_select %p594, %s29, 1
      %s596 = scalar_lea.vmem %s1, %s595
      %p597 = scmp.lt.s32.totalorder %s29, 1
      %s598 = scalar_select %p597, %s29, 1
      %s599 = scalar_lea.vmem %s2, %s598
      %p600 = scmp.lt.s32.totalorder %s29, 1
      %s601 = scalar_select %p600, %s29, 1
      %s602 = smul.addr %s601, 24
      %s603 = smul.addr %s602, 4
      %s604 = scalar_lea.vmem %s3, %s603
      %p605 = scmp.lt.s32.totalorder %s29, 1
      %s606 = scalar_select %p605, %s29, 1
      %s607 = smul.addr %s606, 6
      %s608 = scalar_lea.vmem %s4, %s607
      %p609 = scmp.lt.s32.totalorder %s29, 1
      %s610 = scalar_select %p609, %s29, 1
      %s611 = smul.addr %s610, 4
      %s612 = smul.addr %s611, 4
      %s613 = scalar_lea.vmem %s5, %s612
      %p614 = scmp.lt.s32.totalorder %s29, 1
      %s615 = scalar_select %p614, %s29, 1
      %s616 = scalar_lea.vmem %s6, %s615
      %p617 = scmp.lt.s32.totalorder %s29, 1
      %s618 = scalar_select %p617, %s29, 1
      %s619 = scalar_lea.vmem %s7, %s618
      %p620 = scmp.lt.s32.totalorder %s29, 1
      %s621 = scalar_select %p620, %s29, 1
      %s622 = scalar_lea.vmem %s8, %s621
      %p623 = scmp.lt.s32.totalorder %s29, 1
      %s624 = scalar_select %p623, %s29, 1
      %s625 = smul.addr %s624, 4
      %s626 = smul.addr %s625, 4
      %s627 = scalar_lea.vmem %s9, %s626
      %p628 = scmp.lt.s32.totalorder %s29, 1
      %s629 = scalar_select %p628, %s29, 1
      %s630 = scalar_lea.vmem %s10, %s629
      %p631 = scmp.lt.s32.totalorder %s29, 1
      %s632 = scalar_select %p631, %s29, 1
      %s633 = smul.addr %s632, 16
      %s634 = smul.addr %s633, 4
      %s635 = scalar_lea.vmem %s11, %s634
      %p636 = scmp.lt.s32.totalorder %s29, 1
      %s637 = scalar_select %p636, %s29, 1
      %s638 = scalar_lea.vmem %s12, %s637
      %p639 = scmp.lt.s32.totalorder %s28, 1
      %s640 = scalar_select %p639, %s28, 1
      %s641 = smul.addr %s640, 8
      %s642 = scalar_lea.vmem %s13, %s641
      %p644 = scmp.eq.s32.totalorder %s29, 0
      // Predicated region
      $region73: #{clip_forward.8} parent=71 // pred_check
        %p645 = pneg %p644
      $region74: #{clip_forward.8} parent=71 // pred_check_branch
        %647 = sbr.rel (%p645) target = $region76
      $region75: #{clip_forward.8} parent=71 // pred_region
        %v648 = vld [vmem:[%s593] sm:$0xff]
        %vm649 = vcmask 261120
        %650 = vst.msk [vmem:[%s642] sm:$0xff] %vm649, %v648
      $region76: #{clip_forward.8} parent=71 // pred_fallthru
        _
      %v651 = vld [vmem:[%s642] sm:$0xff]
      %v652 = vld [vmem:[%s596] sm:$0x1]
      %v653 = vld [vmem:[%s599] sm:$0x1]
      %vm654 = vcmask 261120
      %v655 = vsel %vm654, %v651, 0.0
      %656 = vadd.xlane.f32.xlu0 %v655
      %v657 = vpop.xlane.xlu0 %656
      %v658 = vrcp.pop 32.0
      %v659 = vmul.f32 %v657, %v658
      %v660 = vsub.f32 %v651, %v659
      %v661 = vmul.f32 %v660, %v660
      %v662 = vsel %vm654, %v661, 0.0
      %663 = vadd.xlane.f32.xlu0 %v662
      %v664 = vpop.xlane.xlu0 %663
      %v665 = vmul.f32 %v664, %v658
      %v666 = vadd.f32 %v665, 1e-05
      %v667 = vrsqrt.pop %v666
      %v668 = vmul.f32 %v660, %v667
      %v670 = vlaneseq
      %v671 = vshrl.u32 %v670, 7
      %v672 = vsub.s32 0, %v671
      %v673 = vrot.slane %v652, %v672
      %v675 = vmul.f32 %v668, %v673
      %v677 = vlaneseq
      %v678 = vshrl.u32 %v677, 7
      %v679 = vsub.s32 0, %v678
      %v680 = vrot.slane %v653, %v679
      %v682 = vadd.f32 %v675, %v680
      %v683 = vld [vmem:[%s604] sm:$0xf]
      %v684 = vld [vmem:[%s604 + $0x4] sm:$0xf]
      %v685 = vld [vmem:[%s604 + $0x8] sm:$0xf]
      %v686 = vld [vmem:[%s604 + $0xc] sm:$0xf]
      %v687 = vpack.c.bf16 %v682, %v682
      %v688 = vld [vmem:[%s608] sm:$0x1]
      %v690 = vlaneseq
      %v691 = vshrl.u32 %v690, 7
      %v692 = vsub.s32 0, %v691
      %v693 = vrot.slane %v688, %v692
      %v699 = vunpack.c.l.b16 %v683
      %v700 = vunpack.c.l.b16 %v684
      %v701 = vunpack.c.l.b16 %v685
      %v702 = vunpack.c.l.b16 %v686
      %v703 = vpack.c.b16 %v700, %v699
      %v704 = vpack.c.b16 %v702, %v701
      %v708 = vsel %vm654, %v687, 0
      %710 = vmatprep.subr.bf16.mxu0 0
      %711 = vmatpush1.bf16.msra.mxu0 0
      %712 = vmatprep.subr.bf16.mxu0 0
      %713 = vmatpush1.bf16.msra.mxu0 0
      %714 = vmatprep.subr.bf16.mxu0 0
      %715 = vmatpush1.bf16.msra.mxu0 0
      %716 = vmatprep.subr.bf16.mxu0 0
      %717 = vmatpush1.bf16.msra.mxu0 0
      %718 = vmatprep.subr.bf16.mxu0 0
      %719 = vmatpush1.bf16.msra.mxu0 0
      %720 = vmatprep.subr.bf16.mxu0 0
      %721 = vmatpush1.bf16.msra.mxu0 0
      %722 = vmatprep.subr.bf16.mxu0 0
      %723 = vmatpush1.bf16.msra.mxu0 %v704
      %724 = vmatprep.subr.bf16.mxu0 0
      %725 = vmatpush1.bf16.msra.mxu0 %v703
      %726 = vmatprep.subr.bf16.mxu0 0
      %727 = vmatpush2.bf16.msra.mxu0 0
      %728 = vmatprep.subr.bf16.mxu0 0
      %729 = vmatpush2.bf16.msra.mxu0 0
      %730 = vmatprep.subr.bf16.mxu0 0
      %731 = vmatpush2.bf16.msra.mxu0 0
      %732 = vmatprep.subr.bf16.mxu0 0
      %733 = vmatpush2.bf16.msra.mxu0 0
      %734 = vmatprep.subr.bf16.mxu0 0
      %735 = vmatpush2.bf16.msra.mxu0 0
      %736 = vmatprep.subr.bf16.mxu0 0
      %737 = vmatpush2.bf16.msra.mxu0 0
      %738 = vmatprep.subr.bf16.mxu0 0
      %739 = vmatpush2.bf16.msra.mxu0 0
      %740 = vmatprep.subr.bf16.mxu0 0
      %741 = vmatpush2.bf16.msra.mxu0 0
      %742 = vmatprep.mubr.bf16.mxu0 0
      %743 = vmatmul.mubr.bf16.gmra.mxu0 %v708
      %v744 = vpop.f32.mrf.mxu0
      %v745 = vadd.f32 %v693, %v744
      %v746 = vpop.f32.mrf.mxu0
      %v747 = vpop.f32.mrf.mxu0
      %v748 = vpop.f32.mrf.mxu0
      %749 = vdwg.mxu0
      %s750 = scalar_lea.vmem %s604, 32
      %v751 = vld [vmem:[%s750] sm:$0xf]
      %v752 = vld [vmem:[%s750 + $0x4] sm:$0xf]
      %v753 = vld [vmem:[%s750 + $0x8] sm:$0xf]
      %v754 = vld [vmem:[%s750 + $0xc] sm:$0xf]
      %s755 = scalar_lea.vmem %s608, 2
      %v756 = vld [vmem:[%s755] sm:$0x1]
      %v758 = vlaneseq
      %v759 = vshrl.u32 %v758, 7
      %v760 = vsub.s32 0, %v759
      %v761 = vrot.slane %v756, %v760
      %v767 = vunpack.c.l.b16 %v751
      %v768 = vunpack.c.l.b16 %v752
      %v769 = vunpack.c.l.b16 %v753
      %v770 = vunpack.c.l.b16 %v754
      %v771 = vpack.c.b16 %v768, %v767
      %v772 = vpack.c.b16 %v770, %v769
      %775 = vmatprep.subr.bf16.mxu0 0
      %776 = vmatpush1.bf16.msra.mxu0 0
      %777 = vmatprep.subr.bf16.mxu0 0
      %778 = vmatpush1.bf16.msra.mxu0 0
      %779 = vmatprep.subr.bf16.mxu0 0
      %780 = vmatpush1.bf16.msra.mxu0 0
      %781 = vmatprep.subr.bf16.mxu0 0
      %782 = vmatpush1.bf16.msra.mxu0 0
      %783 = vmatprep.subr.bf16.mxu0 0
      %784 = vmatpush1.bf16.msra.mxu0 0
      %785 = vmatprep.subr.bf16.mxu0 0
      %786 = vmatpush1.bf16.msra.mxu0 0
      %787 = vmatprep.subr.bf16.mxu0 0
      %788 = vmatpush1.bf16.msra.mxu0 %v772
      %789 = vmatprep.subr.bf16.mxu0 0
      %790 = vmatpush1.bf16.msra.mxu0 %v771
      %791 = vmatprep.subr.bf16.mxu0 0
      %792 = vmatpush2.bf16.msra.mxu0 0
      %793 = vmatprep.subr.bf16.mxu0 0
      %794 = vmatpush2.bf16.msra.mxu0 0
      %795 = vmatprep.subr.bf16.mxu0 0
      %796 = vmatpush2.bf16.msra.mxu0 0
      %797 = vmatprep.subr.bf16.mxu0 0
      %798 = vmatpush2.bf16.msra.mxu0 0
      %799 = vmatprep.subr.bf16.mxu0 0
      %800 = vmatpush2.bf16.msra.mxu0 0
      %801 = vmatprep.subr.bf16.mxu0 0
      %802 = vmatpush2.bf16.msra.mxu0 0
      %803 = vmatprep.subr.bf16.mxu0 0
      %804 = vmatpush2.bf16.msra.mxu0 0
      %805 = vmatprep.subr.bf16.mxu0 0
      %806 = vmatpush2.bf16.msra.mxu0 0
      %807 = vmatprep.mubr.bf16.mxu0 0
      %808 = vmatmul.mubr.bf16.gmra.mxu0 %v708
      %v809 = vpop.f32.mrf.mxu0
      %v810 = vadd.f32 %v761, %v809
      %v811 = vpop.f32.mrf.mxu0
      %v812 = vpop.f32.mrf.mxu0
      %v813 = vpop.f32.mrf.mxu0
      %814 = vdwg.mxu0
      %s815 = scalar_lea.vmem %s604, 64
      %v816 = vld [vmem:[%s815] sm:$0xf]
      %v817 = vld [vmem:[%s815 + $0x4] sm:$0xf]
      %v818 = vld [vmem:[%s815 + $0x8] sm:$0xf]
      %v819 = vld [vmem:[%s815 + $0xc] sm:$0xf]
      %s820 = scalar_lea.vmem %s608, 4
      %v821 = vld [vmem:[%s820] sm:$0x1]
      %v823 = vlaneseq
      %v824 = vshrl.u32 %v823, 7
      %v825 = vsub.s32 0, %v824
      %v826 = vrot.slane %v821, %v825
      %v832 = vunpack.c.l.b16 %v816
      %v833 = vunpack.c.l.b16 %v817
      %v834 = vunpack.c.l.b16 %v818
      %v835 = vunpack.c.l.b16 %v819
      %v836 = vpack.c.b16 %v833, %v832
      %v837 = vpack.c.b16 %v835, %v834
      %840 = vmatprep.subr.bf16.mxu0 0
      %841 = vmatpush1.bf16.msra.mxu0 0
      %842 = vmatprep.subr.bf16.mxu0 0
      %843 = vmatpush1.bf16.msra.mxu0 0
      %844 = vmatprep.subr.bf16.mxu0 0
      %845 = vmatpush1.bf16.msra.mxu0 0
      %846 = vmatprep.subr.bf16.mxu0 0
      %847 = vmatpush1.bf16.msra.mxu0 0
      %848 = vmatprep.subr.bf16.mxu0 0
      %849 = vmatpush1.bf16.msra.mxu0 0
      %850 = vmatprep.subr.bf16.mxu0 0
      %851 = vmatpush1.bf16.msra.mxu0 0
      %852 = vmatprep.subr.bf16.mxu0 0
      %853 = vmatpush1.bf16.msra.mxu0 %v837
      %854 = vmatprep.subr.bf16.mxu0 0
      %855 = vmatpush1.bf16.msra.mxu0 %v836
      %856 = vmatprep.subr.bf16.mxu0 0
      %857 = vmatpush2.bf16.msra.mxu0 0
      %858 = vmatprep.subr.bf16.mxu0 0
      %859 = vmatpush2.bf16.msra.mxu0 0
      %860 = vmatprep.subr.bf16.mxu0 0
      %861 = vmatpush2.bf16.msra.mxu0 0
      %862 = vmatprep.subr.bf16.mxu0 0
      %863 = vmatpush2.bf16.msra.mxu0 0
      %864 = vmatprep.subr.bf16.mxu0 0
      %865 = vmatpush2.bf16.msra.mxu0 0
      %866 = vmatprep.subr.bf16.mxu0 0
      %867 = vmatpush2.bf16.msra.mxu0 0
      %868 = vmatprep.subr.bf16.mxu0 0
      %869 = vmatpush2.bf16.msra.mxu0 0
      %870 = vmatprep.subr.bf16.mxu0 0
      %871 = vmatpush2.bf16.msra.mxu0 0
      %872 = vmatprep.mubr.bf16.mxu0 0
      %873 = vmatmul.mubr.bf16.gmra.mxu0 %v708
      %v874 = vpop.f32.mrf.mxu0
      %v875 = vadd.f32 %v826, %v874
      %v876 = vpop.f32.mrf.mxu0
      %v877 = vpop.f32.mrf.mxu0
      %v878 = vpop.f32.mrf.mxu0
      %879 = vdwg.mxu0
      %vm880 = vcmask 130048
      %v882 = vsel %vm880, %v745, 0
      %v885 = vsel %vm880, %v810, 0
      %887 = vmatprep.subr.mxu0 0.0
      %888 = vmatpush1.xpose.msra.mxu0 0.0
      %889 = vmatprep.subr.mxu0 0.0
      %890 = vmatpush1.xpose.msra.mxu0 0.0
      %891 = vmatprep.subr.mxu0 0.0
      %892 = vmatpush1.xpose.msra.mxu0 0.0
      %893 = vmatprep.subr.mxu0 0.0
      %894 = vmatpush1.xpose.msra.mxu0 0.0
      %895 = vmatprep.subr.mxu0 0.0
      %896 = vmatpush1.xpose.msra.mxu0 0.0
      %897 = vmatprep.subr.mxu0 0.0
      %898 = vmatpush1.xpose.msra.mxu0 0.0
      %899 = vmatprep.subr.mxu0 0.0
      %900 = vmatpush1.xpose.msra.mxu0 0.0
      %901 = vmatprep.subr.mxu0 0.0
      %902 = vmatpush1.xpose.msra.mxu0 0.0
      %903 = vmatprep.subr.mxu0 0.0
      %904 = vmatpush1.xpose.msra.mxu0 0.0
      %905 = vmatprep.subr.mxu0 0.0
      %906 = vmatpush1.xpose.msra.mxu0 0.0
      %907 = vmatprep.subr.mxu0 0.0
      %908 = vmatpush1.xpose.msra.mxu0 0.0
      %909 = vmatprep.subr.mxu0 0.0
      %910 = vmatpush1.xpose.msra.mxu0 0.0
      %911 = vmatprep.subr.mxu0 0.0
      %912 = vmatpush1.xpose.msra.mxu0 0.0
      %913 = vmatprep.subr.mxu0 0.0
      %914 = vmatpush1.xpose.msra.mxu0 0.0
      %915 = vmatprep.subr.mxu0 0.0
      %916 = vmatpush1.xpose.msra.mxu0 0.0
      %917 = vmatprep.subr.mxu0 0.0
      %918 = vmatpush1.xpose.msra.mxu0 %v885
      %919 = vmatprep.subr.mxu0 0.0
      %920 = vmatpush2.xpose.msra.mxu0 0.0
      %921 = vmatprep.subr.mxu0 0.0
      %922 = vmatpush2.xpose.msra.mxu0 0.0
      %923 = vmatprep.subr.mxu0 0.0
      %924 = vmatpush2.xpose.msra.mxu0 0.0
      %925 = vmatprep.subr.mxu0 0.0
      %926 = vmatpush2.xpose.msra.mxu0 0.0
      %927 = vmatprep.subr.mxu0 0.0
      %928 = vmatpush2.xpose.msra.mxu0 0.0
      %929 = vmatprep.subr.mxu0 0.0
      %930 = vmatpush2.xpose.msra.mxu0 0.0
      %931 = vmatprep.subr.mxu0 0.0
      %932 = vmatpush2.xpose.msra.mxu0 0.0
      %933 = vmatprep.subr.mxu0 0.0
      %934 = vmatpush2.xpose.msra.mxu0 0.0
      %935 = vmatprep.subr.mxu0 0.0
      %936 = vmatpush2.xpose.msra.mxu0 0.0
      %937 = vmatprep.subr.mxu0 0.0
      %938 = vmatpush2.xpose.msra.mxu0 0.0
      %939 = vmatprep.subr.mxu0 0.0
      %940 = vmatpush2.xpose.msra.mxu0 0.0
      %941 = vmatprep.subr.mxu0 0.0
      %942 = vmatpush2.xpose.msra.mxu0 0.0
      %943 = vmatprep.subr.mxu0 0.0
      %944 = vmatpush2.xpose.msra.mxu0 0.0
      %945 = vmatprep.subr.mxu0 0.0
      %946 = vmatpush2.xpose.msra.mxu0 0.0
      %947 = vmatprep.subr.mxu0 0.0
      %948 = vmatpush2.xpose.msra.mxu0 0.0
      %949 = vmatprep.subr.mxu0 0.0
      %950 = vmatpush2.xpose.msra.mxu0 0.0
      %951 = vmatprep.mubr.f32.mxu0 0.0
      %952 = vmatmul.mubr.f32.gmra.mxu0 %v882
      %v953 = vpop.f32.mrf.mxu0
      %v954 = vadd.f32 0.0, %v953
      %v955 = vpop.f32.mrf.mxu0
      %956 = vdwg.mxu0
      %v957 = vmul.f32 %v954, 0.25
      %v958 = vlaneseq
      %v959 = vshrl.u32 %v958, 7
      %v960 = vlaneseq
      %v961 = vand.u32 %v960, 127
      %vm962 = vcmp.gt.s32.totalorder %v961, %v959
      %v963 = vsel %vm962, -1e+30, %v957
      %vm964 = vcmask 64512
      %v965 = vsel %vm964, %v963, -inf
      %966 = vmax.xlane.f32.xlu0 %v965
      %v967 = vpop.xlane.xlu0 %966
      %v968 = vsub.f32 %v963, %v967
      %v969 = vmul.f32 %v968, 1.442695
      %v970 = vpow.pop %v969
      %v971 = vsel %vm964, %v970, 0.0
      %972 = vadd.xlane.f32.xlu0 %v971
      %v973 = vpop.xlane.xlu0 %972
      %v974 = vrcp.pop %v973
      %v975 = vmul.f32 %v970, %v974
      %v977 = vsel %vm964, %v975, 0
      %979 = vmatprep.subr.mxu0 0.0
      %980 = vmatpush1.msra.mxu0 0.0
      %981 = vmatprep.subr.mxu0 0.0
      %982 = vmatpush1.msra.mxu0 0.0
      %983 = vmatprep.subr.mxu0 0.0
      %984 = vmatpush1.msra.mxu0 0.0
      %985 = vmatprep.subr.mxu0 0.0
      %986 = vmatpush1.msra.mxu0 0.0
      %987 = vmatprep.subr.mxu0 0.0
      %988 = vmatpush1.msra.mxu0 0.0
      %989 = vmatprep.subr.mxu0 0.0
      %990 = vmatpush1.msra.mxu0 0.0
      %991 = vmatprep.subr.mxu0 0.0
      %992 = vmatpush1.msra.mxu0 0.0
      %993 = vmatprep.subr.mxu0 0.0
      %994 = vmatpush1.msra.mxu0 0.0
      %995 = vmatprep.subr.mxu0 0.0
      %996 = vmatpush1.msra.mxu0 0.0
      %997 = vmatprep.subr.mxu0 0.0
      %998 = vmatpush1.msra.mxu0 0.0
      %999 = vmatprep.subr.mxu0 0.0
      %1000 = vmatpush1.msra.mxu0 0.0
      %1001 = vmatprep.subr.mxu0 0.0
      %1002 = vmatpush1.msra.mxu0 0.0
      %1003 = vmatprep.subr.mxu0 0.0
      %1004 = vmatpush1.msra.mxu0 0.0
      %1005 = vmatprep.subr.mxu0 0.0
      %1006 = vmatpush1.msra.mxu0 0.0
      %1007 = vmatprep.subr.mxu0 0.0
      %1008 = vmatpush1.msra.mxu0 0.0
      %1009 = vmatprep.subr.mxu0 0.0
      %1010 = vmatpush1.msra.mxu0 %v875
      %1011 = vmatprep.subr.mxu0 0.0
      %1012 = vmatpush2.msra.mxu0 0.0
      %1013 = vmatprep.subr.mxu0 0.0
      %1014 = vmatpush2.msra.mxu0 0.0
      %1015 = vmatprep.subr.mxu0 0.0
      %1016 = vmatpush2.msra.mxu0 0.0
      %1017 = vmatprep.subr.mxu0 0.0
      %1018 = vmatpush2.msra.mxu0 0.0
      %1019 = vmatprep.subr.mxu0 0.0
      %1020 = vmatpush2.msra.mxu0 0.0
      %1021 = vmatprep.subr.mxu0 0.0
      %1022 = vmatpush2.msra.mxu0 0.0
      %1023 = vmatprep.subr.mxu0 0.0
      %1024 = vmatpush2.msra.mxu0 0.0
      %1025 = vmatprep.subr.mxu0 0.0
      %1026 = vmatpush2.msra.mxu0 0.0
      %1027 = vmatprep.subr.mxu0 0.0
      %1028 = vmatpush2.msra.mxu0 0.0
      %1029 = vmatprep.subr.mxu0 0.0
      %1030 = vmatpush2.msra.mxu0 0.0
      %1031 = vmatprep.subr.mxu0 0.0
      %1032 = vmatpush2.msra.mxu0 0.0
      %1033 = vmatprep.subr.mxu0 0.0
      %1034 = vmatpush2.msra.mxu0 0.0
      %1035 = vmatprep.subr.mxu0 0.0
      %1036 = vmatpush2.msra.mxu0 0.0
      %1037 = vmatprep.subr.mxu0 0.0
      %1038 = vmatpush2.msra.mxu0 0.0
      %1039 = vmatprep.subr.mxu0 0.0
      %1040 = vmatpush2.msra.mxu0 0.0
      %1041 = vmatprep.subr.mxu0 0.0
      %1042 = vmatpush2.msra.mxu0 0.0
      %1043 = vmatprep.mubr.f32.mxu0 0.0
      %1044 = vmatmul.mubr.f32.gmra.mxu0 %v977
      %v1045 = vpop.f32.mrf.mxu0
      %v1046 = vadd.f32 0.0, %v1045
      %v1047 = vpop.f32.mrf.mxu0
      %1048 = vdwg.mxu0
      %v1049 = vld [vmem:[%s613] sm:$0xf]
      %v1050 = vld [vmem:[%s613 + $0x4] sm:$0xf]
      %v1051 = vpack.c.bf16 %v1046, %v1046
      %s1052 = scalar_lea.vmem %s604, 16
      %v1053 = vld [vmem:[%s1052] sm:$0xf]
      %v1054 = vld [vmem:[%s1052 + $0x4] sm:$0xf]
      %v1055 = vld [vmem:[%s1052 + $0x8] sm:$0xf]
      %v1056 = vld [vmem:[%s1052 + $0xc] sm:$0xf]
      %s1057 = scalar_lea.vmem %s608, 1
      %v1058 = vld [vmem:[%s1057] sm:$0x1]
      %v1060 = vlaneseq
      %v1061 = vshrl.u32 %v1060, 7
      %v1062 = vsub.s32 0, %v1061
      %v1063 = vrot.slane %v1058, %v1062
      %v1069 = vunpack.c.l.b16 %v1053
      %v1070 = vunpack.c.l.b16 %v1054
      %v1071 = vunpack.c.l.b16 %v1055
      %v1072 = vunpack.c.l.b16 %v1056
      %v1073 = vpack.c.b16 %v1070, %v1069
      %v1074 = vpack.c.b16 %v1072, %v1071
      %1077 = vmatprep.subr.bf16.mxu0 0
      %1078 = vmatpush1.bf16.msra.mxu0 0
      %1079 = vmatprep.subr.bf16.mxu0 0
      %1080 = vmatpush1.bf16.msra.mxu0 0
      %1081 = vmatprep.subr.bf16.mxu0 0
      %1082 = vmatpush1.bf16.msra.mxu0 0
      %1083 = vmatprep.subr.bf16.mxu0 0
      %1084 = vmatpush1.bf16.msra.mxu0 0
      %1085 = vmatprep.subr.bf16.mxu0 0
      %1086 = vmatpush1.bf16.msra.mxu0 0
      %1087 = vmatprep.subr.bf16.mxu0 0
      %1088 = vmatpush1.bf16.msra.mxu0 0
      %1089 = vmatprep.subr.bf16.mxu0 0
      %1090 = vmatpush1.bf16.msra.mxu0 %v1074
      %1091 = vmatprep.subr.bf16.mxu0 0
      %1092 = vmatpush1.bf16.msra.mxu0 %v1073
      %1093 = vmatprep.subr.bf16.mxu0 0
      %1094 = vmatpush2.bf16.msra.mxu0 0
      %1095 = vmatprep.subr.bf16.mxu0 0
      %1096 = vmatpush2.bf16.msra.mxu0 0
      %1097 = vmatprep.subr.bf16.mxu0 0
      %1098 = vmatpush2.bf16.msra.mxu0 0
      %1099 = vmatprep.subr.bf16.mxu0 0
      %1100 = vmatpush2.bf16.msra.mxu0 0
      %1101 = vmatprep.subr.bf16.mxu0 0
      %1102 = vmatpush2.bf16.msra.mxu0 0
      %1103 = vmatprep.subr.bf16.mxu0 0
      %1104 = vmatpush2.bf16.msra.mxu0 0
      %1105 = vmatprep.subr.bf16.mxu0 0
      %1106 = vmatpush2.bf16.msra.mxu0 0
      %1107 = vmatprep.subr.bf16.mxu0 0
      %1108 = vmatpush2.bf16.msra.mxu0 0
      %1109 = vmatprep.mubr.bf16.mxu0 0
      %1110 = vmatmul.mubr.bf16.gmra.mxu0 %v708
      %v1111 = vpop.f32.mrf.mxu0
      %v1112 = vadd.f32 %v1063, %v1111
      %v1113 = vpop.f32.mrf.mxu0
      %v1114 = vpop.f32.mrf.mxu0
      %v1115 = vpop.f32.mrf.mxu0
      %1116 = vdwg.mxu0
      %s1117 = scalar_lea.vmem %s604, 48
      %v1118 = vld [vmem:[%s1117] sm:$0xf]
      %v1119 = vld [vmem:[%s1117 + $0x4] sm:$0xf]
      %v1120 = vld [vmem:[%s1117 + $0x8] sm:$0xf]
      %v1121 = vld [vmem:[%s1117 + $0xc] sm:$0xf]
      %s1122 = scalar_lea.vmem %s608, 3
      %v1123 = vld [vmem:[%s1122] sm:$0x1]
      %v1125 = vlaneseq
      %v1126 = vshrl.u32 %v1125, 7
      %v1127 = vsub.s32 0, %v1126
      %v1128 = vrot.slane %v1123, %v1127
      %v1134 = vunpack.c.l.b16 %v1118
      %v1135 = vunpack.c.l.b16 %v1119
      %v1136 = vunpack.c.l.b16 %v1120
      %v1137 = vunpack.c.l.b16 %v1121
      %v1138 = vpack.c.b16 %v1135, %v1134
      %v1139 = vpack.c.b16 %v1137, %v1136
      %1142 = vmatprep.subr.bf16.mxu0 0
      %1143 = vmatpush1.bf16.msra.mxu0 0
      %1144 = vmatprep.subr.bf16.mxu0 0
      %1145 = vmatpush1.bf16.msra.mxu0 0
      %1146 = vmatprep.subr.bf16.mxu0 0
      %1147 = vmatpush1.bf16.msra.mxu0 0
      %1148 = vmatprep.subr.bf16.mxu0 0
      %1149 = vmatpush1.bf16.msra.mxu0 0
      %1150 = vmatprep.subr.bf16.mxu0 0
      %1151 = vmatpush1.bf16.msra.mxu0 0
      %1152 = vmatprep.subr.bf16.mxu0 0
      %1153 = vmatpush1.bf16.msra.mxu0 0
      %1154 = vmatprep.subr.bf16.mxu0 0
      %1155 = vmatpush1.bf16.msra.mxu0 %v1139
      %1156 = vmatprep.subr.bf16.mxu0 0
      %1157 = vmatpush1.bf16.msra.mxu0 %v1138
      %1158 = vmatprep.subr.bf16.mxu0 0
      %1159 = vmatpush2.bf16.msra.mxu0 0
      %1160 = vmatprep.subr.bf16.mxu0 0
      %1161 = vmatpush2.bf16.msra.mxu0 0
      %1162 = vmatprep.subr.bf16.mxu0 0
      %1163 = vmatpush2.bf16.msra.mxu0 0
      %1164 = vmatprep.subr.bf16.mxu0 0
      %1165 = vmatpush2.bf16.msra.mxu0 0
      %1166 = vmatprep.subr.bf16.mxu0 0
      %1167 = vmatpush2.bf16.msra.mxu0 0
      %1168 = vmatprep.subr.bf16.mxu0 0
      %1169 = vmatpush2.bf16.msra.mxu0 0
      %1170 = vmatprep.subr.bf16.mxu0 0
      %1171 = vmatpush2.bf16.msra.mxu0 0
      %1172 = vmatprep.subr.bf16.mxu0 0
      %1173 = vmatpush2.bf16.msra.mxu0 0
      %1174 = vmatprep.mubr.bf16.mxu0 0
      %1175 = vmatmul.mubr.bf16.gmra.mxu0 %v708
      %v1176 = vpop.f32.mrf.mxu0
      %v1177 = vadd.f32 %v1128, %v1176
      %v1178 = vpop.f32.mrf.mxu0
      %v1179 = vpop.f32.mrf.mxu0
      %v1180 = vpop.f32.mrf.mxu0
      %1181 = vdwg.mxu0
      %s1182 = scalar_lea.vmem %s604, 80
      %v1183 = vld [vmem:[%s1182] sm:$0xf]
      %v1184 = vld [vmem:[%s1182 + $0x4] sm:$0xf]
      %v1185 = vld [vmem:[%s1182 + $0x8] sm:$0xf]
      %v1186 = vld [vmem:[%s1182 + $0xc] sm:$0xf]
      %s1187 = scalar_lea.vmem %s608, 5
      %v1188 = vld [vmem:[%s1187] sm:$0x1]
      %v1190 = vlaneseq
      %v1191 = vshrl.u32 %v1190, 7
      %v1192 = vsub.s32 0, %v1191
      %v1193 = vrot.slane %v1188, %v1192
      %v1199 = vunpack.c.l.b16 %v1183
      %v1200 = vunpack.c.l.b16 %v1184
      %v1201 = vunpack.c.l.b16 %v1185
      %v1202 = vunpack.c.l.b16 %v1186
      %v1203 = vpack.c.b16 %v1200, %v1199
      %v1204 = vpack.c.b16 %v1202, %v1201
      %1207 = vmatprep.subr.bf16.mxu0 0
      %1208 = vmatpush1.bf16.msra.mxu0 0
      %1209 = vmatprep.subr.bf16.mxu0 0
      %1210 = vmatpush1.bf16.msra.mxu0 0
      %1211 = vmatprep.subr.bf16.mxu0 0
      %1212 = vmatpush1.bf16.msra.mxu0 0
      %1213 = vmatprep.subr.bf16.mxu0 0
      %1214 = vmatpush1.bf16.msra.mxu0 0
      %1215 = vmatprep.subr.bf16.mxu0 0
      %1216 = vmatpush1.bf16.msra.mxu0 0
      %1217 = vmatprep.subr.bf16.mxu0 0
      %1218 = vmatpush1.bf16.msra.mxu0 0
      %1219 = vmatprep.subr.bf16.mxu0 0
      %1220 = vmatpush1.bf16.msra.mxu0 %v1204
      %1221 = vmatprep.subr.bf16.mxu0 0
      %1222 = vmatpush1.bf16.msra.mxu0 %v1203
      %1223 = vmatprep.subr.bf16.mxu0 0
      %1224 = vmatpush2.bf16.msra.mxu0 0
      %1225 = vmatprep.subr.bf16.mxu0 0
      %1226 = vmatpush2.bf16.msra.mxu0 0
      %1227 = vmatprep.subr.bf16.mxu0 0
      %1228 = vmatpush2.bf16.msra.mxu0 0
      %1229 = vmatprep.subr.bf16.mxu0 0
      %1230 = vmatpush2.bf16.msra.mxu0 0
      %1231 = vmatprep.subr.bf16.mxu0 0
      %1232 = vmatpush2.bf16.msra.mxu0 0
      %1233 = vmatprep.subr.bf16.mxu0 0
      %1234 = vmatpush2.bf16.msra.mxu0 0
      %1235 = vmatprep.subr.bf16.mxu0 0
      %1236 = vmatpush2.bf16.msra.mxu0 0
      %1237 = vmatprep.subr.bf16.mxu0 0
      %1238 = vmatpush2.bf16.msra.mxu0 0
      %1239 = vmatprep.mubr.bf16.mxu0 0
      %1240 = vmatmul.mubr.bf16.gmra.mxu0 %v708
      %v1241 = vpop.f32.mrf.mxu0
      %v1242 = vadd.f32 %v1193, %v1241
      %v1243 = vpop.f32.mrf.mxu0
      %v1244 = vpop.f32.mrf.mxu0
      %v1245 = vpop.f32.mrf.mxu0
      %1246 = vdwg.mxu0
      %v1248 = vsel %vm880, %v1112, 0
      %v1251 = vsel %vm880, %v1177, 0
      %1253 = vmatprep.subr.mxu0 0.0
      %1254 = vmatpush1.xpose.msra.mxu0 0.0
      %1255 = vmatprep.subr.mxu0 0.0
      %1256 = vmatpush1.xpose.msra.mxu0 0.0
      %1257 = vmatprep.subr.mxu0 0.0
      %1258 = vmatpush1.xpose.msra.mxu0 0.0
      %1259 = vmatprep.subr.mxu0 0.0
      %1260 = vmatpush1.xpose.msra.mxu0 0.0
      %1261 = vmatprep.subr.mxu0 0.0
      %1262 = vmatpush1.xpose.msra.mxu0 0.0
      %1263 = vmatprep.subr.mxu0 0.0
      %1264 = vmatpush1.xpose.msra.mxu0 0.0
      %1265 = vmatprep.subr.mxu0 0.0
      %1266 = vmatpush1.xpose.msra.mxu0 0.0
      %1267 = vmatprep.subr.mxu0 0.0
      %1268 = vmatpush1.xpose.msra.mxu0 0.0
      %1269 = vmatprep.subr.mxu0 0.0
      %1270 = vmatpush1.xpose.msra.mxu0 0.0
      %1271 = vmatprep.subr.mxu0 0.0
      %1272 = vmatpush1.xpose.msra.mxu0 0.0
      %1273 = vmatprep.subr.mxu0 0.0
      %1274 = vmatpush1.xpose.msra.mxu0 0.0
      %1275 = vmatprep.subr.mxu0 0.0
      %1276 = vmatpush1.xpose.msra.mxu0 0.0
      %1277 = vmatprep.subr.mxu0 0.0
      %1278 = vmatpush1.xpose.msra.mxu0 0.0
      %1279 = vmatprep.subr.mxu0 0.0
      %1280 = vmatpush1.xpose.msra.mxu0 0.0
      %1281 = vmatprep.subr.mxu0 0.0
      %1282 = vmatpush1.xpose.msra.mxu0 0.0
      %1283 = vmatprep.subr.mxu0 0.0
      %1284 = vmatpush1.xpose.msra.mxu0 %v1251
      %1285 = vmatprep.subr.mxu0 0.0
      %1286 = vmatpush2.xpose.msra.mxu0 0.0
      %1287 = vmatprep.subr.mxu0 0.0
      %1288 = vmatpush2.xpose.msra.mxu0 0.0
      %1289 = vmatprep.subr.mxu0 0.0
      %1290 = vmatpush2.xpose.msra.mxu0 0.0
      %1291 = vmatprep.subr.mxu0 0.0
      %1292 = vmatpush2.xpose.msra.mxu0 0.0
      %1293 = vmatprep.subr.mxu0 0.0
      %1294 = vmatpush2.xpose.msra.mxu0 0.0
      %1295 = vmatprep.subr.mxu0 0.0
      %1296 = vmatpush2.xpose.msra.mxu0 0.0
      %1297 = vmatprep.subr.mxu0 0.0
      %1298 = vmatpush2.xpose.msra.mxu0 0.0
      %1299 = vmatprep.subr.mxu0 0.0
      %1300 = vmatpush2.xpose.msra.mxu0 0.0
      %1301 = vmatprep.subr.mxu0 0.0
      %1302 = vmatpush2.xpose.msra.mxu0 0.0
      %1303 = vmatprep.subr.mxu0 0.0
      %1304 = vmatpush2.xpose.msra.mxu0 0.0
      %1305 = vmatprep.subr.mxu0 0.0
      %1306 = vmatpush2.xpose.msra.mxu0 0.0
      %1307 = vmatprep.subr.mxu0 0.0
      %1308 = vmatpush2.xpose.msra.mxu0 0.0
      %1309 = vmatprep.subr.mxu0 0.0
      %1310 = vmatpush2.xpose.msra.mxu0 0.0
      %1311 = vmatprep.subr.mxu0 0.0
      %1312 = vmatpush2.xpose.msra.mxu0 0.0
      %1313 = vmatprep.subr.mxu0 0.0
      %1314 = vmatpush2.xpose.msra.mxu0 0.0
      %1315 = vmatprep.subr.mxu0 0.0
      %1316 = vmatpush2.xpose.msra.mxu0 0.0
      %1317 = vmatprep.mubr.f32.mxu0 0.0
      %1318 = vmatmul.mubr.f32.gmra.mxu0 %v1248
      %v1319 = vpop.f32.mrf.mxu0
      %v1320 = vadd.f32 0.0, %v1319
      %v1321 = vpop.f32.mrf.mxu0
      %1322 = vdwg.mxu0
      %v1323 = vmul.f32 %v1320, 0.25
      %v1324 = vsel %vm962, -1e+30, %v1323
      %v1325 = vsel %vm964, %v1324, -inf
      %1326 = vmax.xlane.f32.xlu0 %v1325
      %v1327 = vpop.xlane.xlu0 %1326
      %v1328 = vsub.f32 %v1324, %v1327
      %v1329 = vmul.f32 %v1328, 1.442695
      %v1330 = vpow.pop %v1329
      %v1331 = vsel %vm964, %v1330, 0.0
      %1332 = vadd.xlane.f32.xlu0 %v1331
      %v1333 = vpop.xlane.xlu0 %1332
      %v1334 = vrcp.pop %v1333
      %v1335 = vmul.f32 %v1330, %v1334
      %v1337 = vsel %vm964, %v1335, 0
      %1339 = vmatprep.subr.mxu0 0.0
      %1340 = vmatpush1.msra.mxu0 0.0
      %1341 = vmatprep.subr.mxu0 0.0
      %1342 = vmatpush1.msra.mxu0 0.0
      %1343 = vmatprep.subr.mxu0 0.0
      %1344 = vmatpush1.msra.mxu0 0.0
      %1345 = vmatprep.subr.mxu0 0.0
      %1346 = vmatpush1.msra.mxu0 0.0
      %1347 = vmatprep.subr.mxu0 0.0
      %1348 = vmatpush1.msra.mxu0 0.0
      %1349 = vmatprep.subr.mxu0 0.0
      %1350 = vmatpush1.msra.mxu0 0.0
      %1351 = vmatprep.subr.mxu0 0.0
      %1352 = vmatpush1.msra.mxu0 0.0
      %1353 = vmatprep.subr.mxu0 0.0
      %1354 = vmatpush1.msra.mxu0 0.0
      %1355 = vmatprep.subr.mxu0 0.0
      %1356 = vmatpush1.msra.mxu0 0.0
      %1357 = vmatprep.subr.mxu0 0.0
      %1358 = vmatpush1.msra.mxu0 0.0
      %1359 = vmatprep.subr.mxu0 0.0
      %1360 = vmatpush1.msra.mxu0 0.0
      %1361 = vmatprep.subr.mxu0 0.0
      %1362 = vmatpush1.msra.mxu0 0.0
      %1363 = vmatprep.subr.mxu0 0.0
      %1364 = vmatpush1.msra.mxu0 0.0
      %1365 = vmatprep.subr.mxu0 0.0
      %1366 = vmatpush1.msra.mxu0 0.0
      %1367 = vmatprep.subr.mxu0 0.0
      %1368 = vmatpush1.msra.mxu0 0.0
      %1369 = vmatprep.subr.mxu0 0.0
      %1370 = vmatpush1.msra.mxu0 %v1242
      %1371 = vmatprep.subr.mxu0 0.0
      %1372 = vmatpush2.msra.mxu0 0.0
      %1373 = vmatprep.subr.mxu0 0.0
      %1374 = vmatpush2.msra.mxu0 0.0
      %1375 = vmatprep.subr.mxu0 0.0
      %1376 = vmatpush2.msra.mxu0 0.0
      %1377 = vmatprep.subr.mxu0 0.0
      %1378 = vmatpush2.msra.mxu0 0.0
      %1379 = vmatprep.subr.mxu0 0.0
      %1380 = vmatpush2.msra.mxu0 0.0
      %1381 = vmatprep.subr.mxu0 0.0
      %1382 = vmatpush2.msra.mxu0 0.0
      %1383 = vmatprep.subr.mxu0 0.0
      %1384 = vmatpush2.msra.mxu0 0.0
      %1385 = vmatprep.subr.mxu0 0.0
      %1386 = vmatpush2.msra.mxu0 0.0
      %1387 = vmatprep.subr.mxu0 0.0
      %1388 = vmatpush2.msra.mxu0 0.0
      %1389 = vmatprep.subr.mxu0 0.0
      %1390 = vmatpush2.msra.mxu0 0.0
      %1391 = vmatprep.subr.mxu0 0.0
      %1392 = vmatpush2.msra.mxu0 0.0
      %1393 = vmatprep.subr.mxu0 0.0
      %1394 = vmatpush2.msra.mxu0 0.0
      %1395 = vmatprep.subr.mxu0 0.0
      %1396 = vmatpush2.msra.mxu0 0.0
      %1397 = vmatprep.subr.mxu0 0.0
      %1398 = vmatpush2.msra.mxu0 0.0
      %1399 = vmatprep.subr.mxu0 0.0
      %1400 = vmatpush2.msra.mxu0 0.0
      %1401 = vmatprep.subr.mxu0 0.0
      %1402 = vmatpush2.msra.mxu0 0.0
      %1403 = vmatprep.mubr.f32.mxu0 0.0
      %1404 = vmatmul.mubr.f32.gmra.mxu0 %v1337
      %v1405 = vpop.f32.mrf.mxu0
      %v1406 = vadd.f32 0.0, %v1405
      %v1407 = vpop.f32.mrf.mxu0
      %1408 = vdwg.mxu0
      %s1409 = scalar_lea.vmem %s613, 8
      %v1410 = vld [vmem:[%s1409] sm:$0xf]
      %v1411 = vld [vmem:[%s1409 + $0x4] sm:$0xf]
      %v1412 = vpack.c.bf16 %v1406, %v1406
      %v1415 = vunpack.c.l.b16 %v1410
      %v1416 = vunpack.c.l.b16 %v1411
      %v1417 = vpack.c.b16 %v1416, %v1415
      %v1420 = vsel %vm880, %v1412, 0
      %1422 = vmatprep.subr.bf16.mxu0 0
      %1423 = vmatpush1.bf16.msra.mxu0 0
      %1424 = vmatprep.subr.bf16.mxu0 0
      %1425 = vmatpush1.bf16.msra.mxu0 0
      %1426 = vmatprep.subr.bf16.mxu0 0
      %1427 = vmatpush1.bf16.msra.mxu0 0
      %1428 = vmatprep.subr.bf16.mxu0 0
      %1429 = vmatpush1.bf16.msra.mxu0 0
      %1430 = vmatprep.subr.bf16.mxu0 0
      %1431 = vmatpush1.bf16.msra.mxu0 0
      %1432 = vmatprep.subr.bf16.mxu0 0
      %1433 = vmatpush1.bf16.msra.mxu0 0
      %1434 = vmatprep.subr.bf16.mxu0 0
      %1435 = vmatpush1.bf16.msra.mxu0 0
      %1436 = vmatprep.subr.bf16.mxu0 0
      %1437 = vmatpush1.bf16.msra.mxu0 %v1417
      %1438 = vmatprep.subr.bf16.mxu0 0
      %1439 = vmatpush2.bf16.msra.mxu0 0
      %1440 = vmatprep.subr.bf16.mxu0 0
      %1441 = vmatpush2.bf16.msra.mxu0 0
      %1442 = vmatprep.subr.bf16.mxu0 0
      %1443 = vmatpush2.bf16.msra.mxu0 0
      %1444 = vmatprep.subr.bf16.mxu0 0
      %1445 = vmatpush2.bf16.msra.mxu0 0
      %1446 = vmatprep.subr.bf16.mxu0 0
      %1447 = vmatpush2.bf16.msra.mxu0 0
      %1448 = vmatprep.subr.bf16.mxu0 0
      %1449 = vmatpush2.bf16.msra.mxu0 0
      %1450 = vmatprep.subr.bf16.mxu0 0
      %1451 = vmatpush2.bf16.msra.mxu0 0
      %1452 = vmatprep.subr.bf16.mxu0 0
      %1453 = vmatpush2.bf16.msra.mxu0 0
      %1454 = vmatprep.mubr.bf16.mxu0 0
      %1455 = vmatmul.mubr.bf16.gmra.mxu0 %v1420
      %v1456 = vpop.f32.mrf.mxu0
      %v1457 = vadd.f32 0.0, %v1456
      %v1458 = vpop.f32.mrf.mxu0
      %v1459 = vpop.f32.mrf.mxu0
      %v1460 = vpop.f32.mrf.mxu0
      %1461 = vdwg.mxu0
      %v1464 = vunpack.c.l.b16 %v1049
      %v1465 = vunpack.c.l.b16 %v1050
      %v1466 = vpack.c.b16 %v1465, %v1464
      %v1469 = vsel %vm880, %v1051, 0
      %1471 = vmatprep.subr.bf16.mxu0 0
      %1472 = vmatpush1.bf16.msra.mxu0 0
      %1473 = vmatprep.subr.bf16.mxu0 0
      %1474 = vmatpush1.bf16.msra.mxu0 0
      %1475 = vmatprep.subr.bf16.mxu0 0
      %1476 = vmatpush1.bf16.msra.mxu0 0
      %1477 = vmatprep.subr.bf16.mxu0 0
      %1478 = vmatpush1.bf16.msra.mxu0 0
      %1479 = vmatprep.subr.bf16.mxu0 0
      %1480 = vmatpush1.bf16.msra.mxu0 0
      %1481 = vmatprep.subr.bf16.mxu0 0
      %1482 = vmatpush1.bf16.msra.mxu0 0
      %1483 = vmatprep.subr.bf16.mxu0 0
      %1484 = vmatpush1.bf16.msra.mxu0 0
      %1485 = vmatprep.subr.bf16.mxu0 0
      %1486 = vmatpush1.bf16.msra.mxu0 %v1466
      %1487 = vmatprep.subr.bf16.mxu0 0
      %1488 = vmatpush2.bf16.msra.mxu0 0
      %1489 = vmatprep.subr.bf16.mxu0 0
      %1490 = vmatpush2.bf16.msra.mxu0 0
      %1491 = vmatprep.subr.bf16.mxu0 0
      %1492 = vmatpush2.bf16.msra.mxu0 0
      %1493 = vmatprep.subr.bf16.mxu0 0
      %1494 = vmatpush2.bf16.msra.mxu0 0
      %1495 = vmatprep.subr.bf16.mxu0 0
      %1496 = vmatpush2.bf16.msra.mxu0 0
      %1497 = vmatprep.subr.bf16.mxu0 0
      %1498 = vmatpush2.bf16.msra.mxu0 0
      %1499 = vmatprep.subr.bf16.mxu0 0
      %1500 = vmatpush2.bf16.msra.mxu0 0
      %1501 = vmatprep.subr.bf16.mxu0 0
      %1502 = vmatpush2.bf16.msra.mxu0 0
      %1503 = vmatprep.mubr.bf16.mxu0 0
      %1504 = vmatmul.mubr.bf16.gmra.mxu0 %v1469
      %v1505 = vpop.f32.mrf.mxu0
      %v1506 = vadd.f32 %v1457, %v1505
      %v1507 = vpop.f32.mrf.mxu0
      %v1508 = vpop.f32.mrf.mxu0
      %v1509 = vpop.f32.mrf.mxu0
      %1510 = vdwg.mxu0
      %v1511 = vadd.f32 %v651, %v1506
      %v1512 = vld [vmem:[%s616] sm:$0x1]
      %v1514 = vlaneseq
      %v1515 = vshrl.u32 %v1514, 7
      %v1516 = vsub.s32 0, %v1515
      %v1517 = vrot.slane %v1512, %v1516
      %v1519 = vadd.f32 %v1511, %v1517
      %v1520 = vld [vmem:[%s619] sm:$0x1]
      %v1521 = vld [vmem:[%s622] sm:$0x1]
      %v1522 = vsel %vm654, %v1519, 0.0
      %1523 = vadd.xlane.f32.xlu0 %v1522
      %v1524 = vpop.xlane.xlu0 %1523
      %v1525 = vmul.f32 %v1524, %v658
      %v1526 = vsub.f32 %v1519, %v1525
      %v1527 = vmul.f32 %v1526, %v1526
      %v1528 = vsel %vm654, %v1527, 0.0
      %1529 = vadd.xlane.f32.xlu0 %v1528
      %v1530 = vpop.xlane.xlu0 %1529
      %v1531 = vmul.f32 %v1530, %v658
      %v1532 = vadd.f32 %v1531, 1e-05
      %v1533 = vrsqrt.pop %v1532
      %v1534 = vmul.f32 %v1526, %v1533
      %v1536 = vlaneseq
      %v1537 = vshrl.u32 %v1536, 7
      %v1538 = vsub.s32 0, %v1537
      %v1539 = vrot.slane %v1520, %v1538
      %v1541 = vmul.f32 %v1534, %v1539
      %v1543 = vlaneseq
      %v1544 = vshrl.u32 %v1543, 7
      %v1545 = vsub.s32 0, %v1544
      %v1546 = vrot.slane %v1521, %v1545
      %v1548 = vadd.f32 %v1541, %v1546
      %v1549 = vld [vmem:[%s627] sm:$0xf]
      %v1550 = vld [vmem:[%s627 + $0x4] sm:$0xf]
      %v1551 = vld [vmem:[%s627 + $0x8] sm:$0xf]
      %v1552 = vld [vmem:[%s627 + $0xc] sm:$0xf]
      %v1553 = vpack.c.bf16 %v1548, %v1548
      %v1554 = vld [vmem:[%s630] sm:$0x1]
      %v1556 = vlaneseq
      %v1557 = vshrl.u32 %v1556, 7
      %v1558 = vsub.s32 0, %v1557
      %v1559 = vrot.slane %v1554, %v1558
      %v1565 = vunpack.c.l.b16 %v1549
      %v1566 = vunpack.c.l.b16 %v1550
      %v1567 = vunpack.c.l.b16 %v1551
      %v1568 = vunpack.c.l.b16 %v1552
      %v1569 = vpack.c.b16 %v1566, %v1565
      %v1570 = vpack.c.b16 %v1568, %v1567
      %v1574 = vsel %vm654, %v1553, 0
      %1576 = vmatprep.subr.bf16.mxu0 0
      %1577 = vmatpush1.bf16.msra.mxu0 0
      %1578 = vmatprep.subr.bf16.mxu0 0
      %1579 = vmatpush1.bf16.msra.mxu0 0
      %1580 = vmatprep.subr.bf16.mxu0 0
      %1581 = vmatpush1.bf16.msra.mxu0 0
      %1582 = vmatprep.subr.bf16.mxu0 0
      %1583 = vmatpush1.bf16.msra.mxu0 0
      %1584 = vmatprep.subr.bf16.mxu0 0
      %1585 = vmatpush1.bf16.msra.mxu0 0
      %1586 = vmatprep.subr.bf16.mxu0 0
      %1587 = vmatpush1.bf16.msra.mxu0 0
      %1588 = vmatprep.subr.bf16.mxu0 0
      %1589 = vmatpush1.bf16.msra.mxu0 %v1570
      %1590 = vmatprep.subr.bf16.mxu0 0
      %1591 = vmatpush1.bf16.msra.mxu0 %v1569
      %1592 = vmatprep.subr.bf16.mxu0 0
      %1593 = vmatpush2.bf16.msra.mxu0 0
      %1594 = vmatprep.subr.bf16.mxu0 0
      %1595 = vmatpush2.bf16.msra.mxu0 0
      %1596 = vmatprep.subr.bf16.mxu0 0
      %1597 = vmatpush2.bf16.msra.mxu0 0
      %1598 = vmatprep.subr.bf16.mxu0 0
      %1599 = vmatpush2.bf16.msra.mxu0 0
      %1600 = vmatprep.subr.bf16.mxu0 0
      %1601 = vmatpush2.bf16.msra.mxu0 0
      %1602 = vmatprep.subr.bf16.mxu0 0
      %1603 = vmatpush2.bf16.msra.mxu0 0
      %1604 = vmatprep.subr.bf16.mxu0 0
      %1605 = vmatpush2.bf16.msra.mxu0 0
      %1606 = vmatprep.subr.bf16.mxu0 0
      %1607 = vmatpush2.bf16.msra.mxu0 0
      %1608 = vmatprep.mubr.bf16.mxu0 0
      %1609 = vmatmul.mubr.bf16.gmra.mxu0 %v1574
      %v1610 = vpop.f32.mrf.mxu0
      %v1611 = vadd.f32 %v1559, %v1610
      %v1612 = vpop.f32.mrf.mxu0
      %v1613 = vpop.f32.mrf.mxu0
      %v1614 = vpop.f32.mrf.mxu0
      %1615 = vdwg.mxu0
      %v1616 = vmul.f32 %v1611, 1.702
      %v1617 = vxor.u32 %v1616, 2147483648
      %v1618 = vmul.f32 %v1617, 1.442695
      %v1619 = vpow.pop %v1618
      %v1620 = vadd.f32 %v1619, 1.0
      %v1621 = vrcp.pop %v1620
      %v1622 = vmul.f32 1.0, %v1621
      %v1623 = vmul.f32 %v1611, %v1622
      %v1624 = vld [vmem:[%s635] sm:$0xf]
      %v1625 = vld [vmem:[%s635 + $0x4] sm:$0xf]
      %v1626 = vld [vmem:[%s635 + $0x8] sm:$0xf]
      %v1627 = vld [vmem:[%s635 + $0xc] sm:$0xf]
      %v1628 = vld [vmem:[%s635 + $0x10] sm:$0xf]
      %v1629 = vld [vmem:[%s635 + $0x14] sm:$0xf]
      %v1630 = vld [vmem:[%s635 + $0x18] sm:$0xf]
      %v1631 = vld [vmem:[%s635 + $0x1c] sm:$0xf]
      %v1632 = vld [vmem:[%s635 + $0x20] sm:$0xf]
      %v1633 = vld [vmem:[%s635 + $0x24] sm:$0xf]
      %v1634 = vld [vmem:[%s635 + $0x28] sm:$0xf]
      %v1635 = vld [vmem:[%s635 + $0x2c] sm:$0xf]
      %v1636 = vld [vmem:[%s635 + $0x30] sm:$0xf]
      %v1637 = vld [vmem:[%s635 + $0x34] sm:$0xf]
      %v1638 = vld [vmem:[%s635 + $0x38] sm:$0xf]
      %v1639 = vld [vmem:[%s635 + $0x3c] sm:$0xf]
      %v1640 = vpack.c.bf16 %v1623, %v1623
      %v1657 = vunpack.c.l.b16 %v1624
      %v1658 = vunpack.c.l.b16 %v1625
      %v1659 = vunpack.c.l.b16 %v1626
      %v1660 = vunpack.c.l.b16 %v1627
      %v1661 = vunpack.c.l.b16 %v1628
      %v1662 = vunpack.c.l.b16 %v1629
      %v1663 = vunpack.c.l.b16 %v1630
      %v1664 = vunpack.c.l.b16 %v1631
      %v1665 = vunpack.c.l.b16 %v1632
      %v1666 = vunpack.c.l.b16 %v1633
      %v1667 = vunpack.c.l.b16 %v1634
      %v1668 = vunpack.c.l.b16 %v1635
      %v1669 = vunpack.c.l.b16 %v1636
      %v1670 = vunpack.c.l.b16 %v1637
      %v1671 = vunpack.c.l.b16 %v1638
      %v1672 = vunpack.c.l.b16 %v1639
      %v1673 = vpack.c.b16 %v1658, %v1657
      %v1674 = vpack.c.b16 %v1660, %v1659
      %v1675 = vpack.c.b16 %v1662, %v1661
      %v1676 = vpack.c.b16 %v1664, %v1663
      %v1677 = vpack.c.b16 %v1666, %v1665
      %v1678 = vpack.c.b16 %v1668, %v1667
      %v1679 = vpack.c.b16 %v1670, %v1669
      %v1680 = vpack.c.b16 %v1672, %v1671
      %1689 = vmatprep.subr.bf16.mxu0 0
      %1690 = vmatpush1.bf16.msra.mxu0 %v1680
      %1691 = vmatprep.subr.bf16.mxu0 0
      %1692 = vmatpush1.bf16.msra.mxu0 %v1679
      %1693 = vmatprep.subr.bf16.mxu0 0
      %1694 = vmatpush1.bf16.msra.mxu0 %v1678
      %1695 = vmatprep.subr.bf16.mxu0 0
      %1696 = vmatpush1.bf16.msra.mxu0 %v1677
      %1697 = vmatprep.subr.bf16.mxu0 0
      %1698 = vmatpush1.bf16.msra.mxu0 %v1676
      %1699 = vmatprep.subr.bf16.mxu0 0
      %1700 = vmatpush1.bf16.msra.mxu0 %v1675
      %1701 = vmatprep.subr.bf16.mxu0 0
      %1702 = vmatpush1.bf16.msra.mxu0 %v1674
      %1703 = vmatprep.subr.bf16.mxu0 0
      %1704 = vmatpush1.bf16.msra.mxu0 %v1673
      %1705 = vmatprep.subr.bf16.mxu0 0
      %1706 = vmatpush2.bf16.msra.mxu0 0
      %1707 = vmatprep.subr.bf16.mxu0 0
      %1708 = vmatpush2.bf16.msra.mxu0 0
      %1709 = vmatprep.subr.bf16.mxu0 0
      %1710 = vmatpush2.bf16.msra.mxu0 0
      %1711 = vmatprep.subr.bf16.mxu0 0
      %1712 = vmatpush2.bf16.msra.mxu0 0
      %1713 = vmatprep.subr.bf16.mxu0 0
      %1714 = vmatpush2.bf16.msra.mxu0 0
      %1715 = vmatprep.subr.bf16.mxu0 0
      %1716 = vmatpush2.bf16.msra.mxu0 0
      %1717 = vmatprep.subr.bf16.mxu0 0
      %1718 = vmatpush2.bf16.msra.mxu0 0
      %1719 = vmatprep.subr.bf16.mxu0 0
      %1720 = vmatpush2.bf16.msra.mxu0 0
      %1721 = vmatprep.mubr.bf16.mxu0 0
      %1722 = vmatmul.mubr.bf16.gmra.mxu0 %v1640
      %v1723 = vpop.f32.mrf.mxu0
      %v1724 = vadd.f32 0.0, %v1723
      %v1725 = vpop.f32.mrf.mxu0
      %v1726 = vpop.f32.mrf.mxu0
      %v1727 = vpop.f32.mrf.mxu0
      %1728 = vdwg.mxu0
      %v1729 = vadd.f32 %v1519, %v1724
      %v1730 = vld [vmem:[%s638] sm:$0x1]
      %v1732 = vlaneseq
      %v1733 = vshrl.u32 %v1732, 7
      %v1734 = vsub.s32 0, %v1733
      %v1735 = vrot.slane %v1730, %v1734
      %v1737 = vadd.f32 %v1729, %v1735
      %1738 = vst.msk [vmem:[%s642] sm:$0xff] %vm654, %v1737
      %p1739 = scmp.lt.s32.totalorder %s28, 1
      %s1740 = scalar_select %p1739, %s28, 1
      %s1741 = smul.addr %s1740, 8
      %s1742 = scalar_lea.vmem %s13, %s1741
      // Predicated region
      $region77: #{clip_forward.8} parent=71 // pred_check
        %p1743 = pneg %p392
      $region78: #{clip_forward.8} parent=71 // pred_check_branch
        %1745 = sbr.rel (%p1743) target = $region80
      $region79: #{clip_forward.8} parent=71 // pred_region
        _
      $region80: #{clip_forward.8} parent=71 // pred_fallthru
        _
    $region72: #{clip_forward.8} parent=5 // pred_fallthru
      _
    %p1746 = scmp.le.s32.totalorder 2, %s19
    // Predicated region
    $region81: #{clip_forward.8} parent=5 // pred_check
      %p1747 = pneg %p1746
    $region82: #{clip_forward.8} parent=5 // pred_check_branch
      %1749 = sbr.rel (%p1747) target = $region84
    $region83: #{clip_forward.8} parent=5 // pred_region
      %s1750 = ssub.s32 %s19, 2
      // Predicated region
      $region85: #{clip_forward.8} parent=83 // pred_check
        %p1751 = pneg %p398
      $region86: #{clip_forward.8} parent=83 // pred_check_branch
        %1753 = sbr.rel (%p1751) target = $region88
      $region87: #{clip_forward.8} parent=83 // pred_region
        %p1754 = scmp.lt.s32.totalorder %s30, 1
        %s1755 = scalar_select %p1754, %s30, 1
        %s1756 = smul.addr %s1755, 8
        %s1757 = scalar_lea.vmem %s13, %s1756
      $region88: #{clip_forward.8} parent=83 // pred_fallthru
        _
    $region84: #{clip_forward.8} parent=5 // pred_fallthru
      _
  $region6: #{clip_forward.8} parent=0 // loop_footer
    %s23 = sadd.s32 1, %s19
  $region7: #{clip_forward.8} parent=0 // loop_footer_branch
    %18 = sbr.rel target = $region3
  $region8: #{clip_forward.8} parent=0 // loop_exit
    _

</llo_original>
